<compile_context>
chip_gen: v5e
topology: v5e:2x2
jax: 0.10.0
libtpu: 0.0.40
codegen_flags: <defaults>
</compile_context>

<pallas_src>
import math
import functools

import jax
import jax.numpy as jnp
from jax import lax
from jax.experimental import pallas as pl
from jax.experimental.pallas import tpu as pltpu

LN_EPS = 1e-5
NEG_INF = -1e30


def _layernorm(x, gamma, beta):
    # f32 statistics (keep VPU/EUP math in f32; only MXU operands are bf16).
    mu = jnp.mean(x, axis=-1, keepdims=True)
    var = jnp.mean((x - mu) ** 2, axis=-1, keepdims=True)
    return (x - mu) * lax.rsqrt(var + LN_EPS) * gamma + beta


def encoder_kernel(x_ref, q_ref, k_ref, v_ref,
                   wo_ref, bo_ref, ln2_g_ref, ln2_b_ref,
                   w1_ref, b1_ref, w2_ref, b2_ref,
                   o_ref, *, tq, tk):
    # x_ref : (1, tq, D)        f32  -- residual-stream query tile
    # q_ref : (1, H, tq, hd)    bf16 -- query tile, already scaled by 1/sqrt(hd)
    # k_ref : (1, H, S,  hd)    bf16 -- full-sequence keys of this batch element
    # v_ref : (1, H, S,  hd)    bf16 -- full-sequence values of this batch element
    qi = pl.program_id(1)
    _, H, _, hd = q_ref.shape
    D = x_ref.shape[2]

    x_q = x_ref[0].astype(jnp.float32)                                   # (tq, D)
    q_h = q_ref[0]                                                       # (H, tq, hd) bf16

    # Static lower-triangular mask: only needed on the diagonal KV tile (tq == tk, aligned).
    row = lax.broadcasted_iota(jnp.int32, (tq, tk), 0)
    col = lax.broadcasted_iota(jnp.int32, (tq, tk), 1)
    diag_mask = col <= row                                               # (tq, tk)

    def kv_step(kv, carry, *, masked):
        m_i, l_i, acc = carry
        k_start = pl.multiple_of(kv * tk, tk)
        k_h = k_ref[0, :, pl.ds(k_start, tk), :]                         # (H, tk, hd) bf16
        v_h = v_ref[0, :, pl.ds(k_start, tk), :]                         # (H, tk, hd) bf16

        # Batched-head scores; contraction over the last axes (no explicit transpose).
        s = jnp.einsum('hqd,hkd->hqk', q_h, k_h,
                       preferred_element_type=jnp.float32)               # (H, tq, tk) f32
        if masked:                                                       # diagonal tile only
            s = jnp.where(diag_mask[None, :, :], s, NEG_INF)

        # Online softmax update (f32), stats carried lane-dense as (H, tq).
        m_new = jnp.maximum(m_i, jnp.max(s, axis=-1))                    # (H, tq)
        alpha = jnp.exp(m_i - m_new)                                     # (H, tq)
        p = jnp.exp(s - m_new[:, :, None])                               # (H, tq, tk)
        l_new = alpha * l_i + jnp.sum(p, axis=-1)                        # (H, tq)
        acc_new = alpha[:, :, None] * acc + jnp.einsum(
            'hqk,hkd->hqd', p.astype(jnp.bfloat16), v_h,
            preferred_element_type=jnp.float32)                          # (H, tq, hd)
        return m_new, l_new, acc_new

    m0 = jnp.full((H, tq), NEG_INF, jnp.float32)
    l0 = jnp.zeros((H, tq), jnp.float32)
    a0 = jnp.zeros((H, tq, hd), jnp.float32)
    # Causal block skipping: unmasked steps for tiles strictly below the diagonal ...
    carry = lax.fori_loop(0, qi, functools.partial(kv_step, masked=False), (m0, l0, a0))
    # ... then the diagonal tile once, with the (static) triangular mask.
    _, l_i, acc = kv_step(qi, carry, masked=True)

    ctx = acc * pl.reciprocal(l_i, approx=True)[:, :, None]              # (H, tq, hd) f32
    attn = jnp.swapaxes(ctx, 0, 1).reshape(tq, D)                        # (tq, D)
    attn = jnp.dot(attn.astype(jnp.bfloat16), wo_ref[...],
                   preferred_element_type=jnp.float32) + bo_ref[...]

    # dropout_1 is identity (p = 0.0)
    x1 = x_q + attn                                                      # residual 1 (f32)

    # ----- LN2 -> FFN (Linear, QuickGELU, Linear) -> residual ------------------------
    h2 = _layernorm(x1, ln2_g_ref[...], ln2_b_ref[...])
    f = jnp.dot(h2.astype(jnp.bfloat16), w1_ref[...],
                preferred_element_type=jnp.float32) + b1_ref[...]        # (tq, F)
    f = f * jax.nn.sigmoid(1.702 * f)                                    # QuickGELU (f32)
    f = jnp.dot(f.astype(jnp.bfloat16), w2_ref[...],
                preferred_element_type=jnp.float32) + b2_ref[...]        # (tq, D)

    # dropout_2 is identity (p = 0.0)
    o_ref[0] = (x1 + f).astype(o_ref.dtype)


def _pick_seq_tile(S, max_tile=256):
    """Largest tile <= max_tile that divides S, preferring multiples of 128
    (full MXU M dim / lane width), then multiples of 16 (bf16 sublane packing);
    else S itself (single tile)."""
    if S <= max_tile:
        return S
    for step in (128, 16):
        t = (max_tile // step) * step
        while t >= step:
            if S % t == 0:
                return t
            t -= step
    return S


def transformer_encoder(x, params, *, num_heads, seq_tile=256):
    """x: (B, S, D) float32 (batch_first). params: dict (see init_params).

    seq_tile: 256 fills the 256-wide MXU on v6e/v7x; use 128 on v5e (4x128x128 MXU)
    or when VMEM is tight on v7x.
    """
    B, S, D = x.shape
    F = params["w1"].shape[1]
    assert D % num_heads == 0
    hd = D // num_heads
    tq = _pick_seq_tile(S, seq_tile)
    tk = tq
    n_q = S // tq
    bf16 = jnp.bfloat16

    # ---- LN1 + QKV projection once per token, outside the kernel (plain XLA matmul),
    #      with the 1/sqrt(hd) scale folded into the Q weight/bias before use. ----------
    scale = jnp.concatenate([jnp.full((D,), 1.0 / math.sqrt(hd), jnp.float32),
                             jnp.ones((2 * D,), jnp.float32)])
    h1 = _layernorm(x, params["ln1_g"], params["ln1_b"])
    qkv = h1 @ (params["wqkv"] * scale) + params["bqkv"] * scale         # (B, S, 3D) f32
    q, k, v = jnp.split(qkv, 3, axis=-1)
    to_heads = lambda t: (t.reshape(B, S, num_heads, hd)
                           .transpose(0, 2, 1, 3).astype(bf16))          # (B, H, S, hd)
    q_h, k_h, v_h = to_heads(q), to_heads(k), to_heads(v)

    wo = params["wo"].astype(bf16)
    w1 = params["w1"].astype(bf16)
    w2 = params["w2"].astype(bf16)

    # Generation-aware VMEM budget: ~80% of physical (≈100 MiB v5e/v6e, ≈51 MiB v7x).
    try:
        vmem_cap = pltpu.get_tpu_info().vmem_capacity_bytes
    except Exception:
        vmem_cap = 64 << 20
    vmem_limit = int(vmem_cap * 0.8)

    kernel = functools.partial(encoder_kernel, tq=tq, tk=tk)

    def _run(single_buffer_weights):
        def w_spec(shape):
            index_map = lambda b, qi: (0,) * len(shape)
            if single_buffer_weights:
                # Grid-invariant operands: double-buffering buys nothing; halve footprint.
                return pl.BlockSpec(shape, index_map, pipeline_mode=pl.Buffered(1))
            return pl.BlockSpec(shape, index_map)

        in_specs = [
            pl.BlockSpec((1, tq, D), lambda b, qi: (b, qi, 0)),                  # x tile
            pl.BlockSpec((1, num_heads, tq, hd), lambda b, qi: (b, 0, qi, 0)),   # q tile
            pl.BlockSpec((1, num_heads, S, hd), lambda b, qi: (b, 0, 0, 0)),     # k (full seq)
            pl.BlockSpec((1, num_heads, S, hd), lambda b, qi: (b, 0, 0, 0)),     # v (full seq)
            w_spec((D, D)), w_spec((1, D)),                                      # out proj
            w_spec((1, D)), w_spec((1, D)),                                      # ln2 gamma/beta
            w_spec((D, F)), w_spec((1, F)),                                      # ffn.0
            w_spec((F, D)), w_spec((1, D)),                                      # ffn.2
        ]
        return pl.pallas_call(
            kernel,
            out_shape=jax.ShapeDtypeStruct((B, S, D), x.dtype),
            grid_spec=pltpu.PrefetchScalarGridSpec(
                num_scalar_prefetch=0,
                grid=(B, n_q),
                in_specs=in_specs,
                out_specs=pl.BlockSpec((1, tq, D), lambda b, qi: (b, qi, 0)),
            ),
            compiler_params=pltpu.CompilerParams(
                dimension_semantics=("parallel", "parallel"),
                vmem_limit_bytes=vmem_limit),
        )(x, q_h, k_h, v_h,
          wo, params["bo"], params["ln2_g"], params["ln2_b"],
          w1, params["b1"], w2, params["b2"])

    try:
        return _run(True)
    except Exception:
        # pipeline_mode=pl.Buffered(1) rejected by this jax build; use default buffering.
        return _run(False)


def init_params(key, embed_dim, ffn_dim):
    ks = jax.random.split(key, 8)
    s = 0.02
    return {
        "ln1_g": jnp.ones((1, embed_dim), jnp.float32),
        "ln1_b": jnp.zeros((1, embed_dim), jnp.float32),
        "wqkv": s * jax.random.normal(ks[0], (embed_dim, 3 * embed_dim), jnp.float32),
        "bqkv": s * jax.random.normal(ks[1], (1, 3 * embed_dim), jnp.float32),
        "wo":   s * jax.random.normal(ks[2], (embed_dim, embed_dim), jnp.float32),
        "bo":   s * jax.random.normal(ks[3], (1, embed_dim), jnp.float32),
        "ln2_g": jnp.ones((1, embed_dim), jnp.float32),
        "ln2_b": jnp.zeros((1, embed_dim), jnp.float32),
        "w1":   s * jax.random.normal(ks[4], (embed_dim, ffn_dim), jnp.float32),
        "b1":   s * jax.random.normal(ks[5], (1, ffn_dim), jnp.float32),
        "w2":   s * jax.random.normal(ks[6], (ffn_dim, embed_dim), jnp.float32),
        "b2":   s * jax.random.normal(ks[7], (1, embed_dim), jnp.float32),
    }


def reference(x, p, *, num_heads):
    """Pure-JAX f32 reference of the same forward pass (for correctness check)."""
    B, S, D = x.shape
    hd = D // num_heads

    def ln(v, g, b):
        mu = jnp.mean(v, -1, keepdims=True)
        var = jnp.mean((v - mu) ** 2, -1, keepdims=True)
        return (v - mu) / jnp.sqrt(var + LN_EPS) * g + b

    h = ln(x, p["ln1_g"], p["ln1_b"])
    qkv = h @ p["wqkv"] + p["bqkv"]
    q, k, v = jnp.split(qkv, 3, axis=-1)
    q = q.reshape(B, S, num_heads, hd).transpose(0, 2, 1, 3)
    k = k.reshape(B, S, num_heads, hd).transpose(0, 2, 1, 3)
    v = v.reshape(B, S, num_heads, hd).transpose(0, 2, 1, 3)
    scores = jnp.einsum("bhqd,bhkd->bhqk", q, k) / math.sqrt(hd)
    mask = jnp.tril(jnp.ones((S, S), bool))
    scores = jnp.where(mask, scores, NEG_INF)
    attn = jax.nn.softmax(scores, axis=-1)
    o = jnp.einsum("bhqk,bhkd->bhqd", attn, v).transpose(0, 2, 1, 3).reshape(B, S, D)
    o = o @ p["wo"] + p["bo"]
    x = x + o
    h2 = ln(x, p["ln2_g"], p["ln2_b"])
    f = h2 @ p["w1"] + p["b1"]
    f = f * jax.nn.sigmoid(1.702 * f)
    f = f @ p["w2"] + p["b2"]
    return x + f


if __name__ == "__main__":
    B, S, D, F, H = 2, 64, 32, 64, 4   # batch, seq, embed_dim, ffn_dim, num_heads
    key = jax.random.PRNGKey(0)
    kx, kp = jax.random.split(key)
    x = jax.random.normal(kx, (B, S, D), jnp.float32)
    params = init_params(kp, D, F)

    # seq_tile=16 forces multiple causal KV tiles (4 query tiles) even at this small size,
    # exercising the below-diagonal unmasked loop and the diagonal-masked step.
    out = transformer_encoder(x, params, num_heads=H, seq_tile=16)
    out = jax.block_until_ready(out)

    ref = reference(x, params, num_heads=H)
    assert out.shape == (B, S, D)
    # bf16 MXU operands + approx reciprocal => slightly looser tolerance vs f32 reference.
    assert jnp.allclose(out, ref, atol=2e-2, rtol=2e-2), "mismatch vs reference"
    print("KERNEL_OK")
</pallas_src>

<mosaic_0001>
module attributes {stable_mosaic.version = 11 : i64} {
  func.func @encoder_kernel(%arg0: i32, %arg1: i32, %arg2: memref<1x16x32xf32, #tpu.memory_space<vmem>>, %arg3: memref<1x4x16x8xbf16, #tpu.memory_space<vmem>>, %arg4: memref<1x4x64x8xbf16, #tpu.memory_space<vmem>>, %arg5: memref<1x4x64x8xbf16, #tpu.memory_space<vmem>>, %arg6: memref<32x32xbf16, #tpu.memory_space<vmem>>, %arg7: memref<1x32xf32, #tpu.memory_space<vmem>>, %arg8: memref<1x32xf32, #tpu.memory_space<vmem>>, %arg9: memref<1x32xf32, #tpu.memory_space<vmem>>, %arg10: memref<32x64xbf16, #tpu.memory_space<vmem>>, %arg11: memref<1x64xf32, #tpu.memory_space<vmem>>, %arg12: memref<64x32xbf16, #tpu.memory_space<vmem>>, %arg13: memref<1x32xf32, #tpu.memory_space<vmem>>, %arg14: memref<1x16x32xf32, #tpu.memory_space<vmem>>) attributes {dimension_semantics = [#tpu.dimension_semantics<parallel>, #tpu.dimension_semantics<parallel>], iteration_bounds = array<i64: 2, 4>, scalar_prefetch = 0 : i64, scratch_operands = 0 : i64, tpu.core_type = #tpu.core_type<tc>, window_params = [{transform_indices = @transform_0, window_bounds = array<i64: 1, 16, 32>}, {transform_indices = @transform_1, window_bounds = array<i64: 1, 4, 16, 8>}, {transform_indices = @transform_2, window_bounds = array<i64: 1, 4, 64, 8>}, {transform_indices = @transform_3, window_bounds = array<i64: 1, 4, 64, 8>}, {pipeline_mode = #tpu.pipeline_mode<synchronous>, transform_indices = @transform_4, window_bounds = array<i64: 32, 32>}, {pipeline_mode = #tpu.pipeline_mode<synchronous>, transform_indices = @transform_5, window_bounds = array<i64: 1, 32>}, {pipeline_mode = #tpu.pipeline_mode<synchronous>, transform_indices = @transform_6, window_bounds = array<i64: 1, 32>}, {pipeline_mode = #tpu.pipeline_mode<synchronous>, transform_indices = @transform_7, window_bounds = array<i64: 1, 32>}, {pipeline_mode = #tpu.pipeline_mode<synchronous>, transform_indices = @transform_8, window_bounds = array<i64: 32, 64>}, {pipeline_mode = #tpu.pipeline_mode<synchronous>, transform_indices = @transform_9, window_bounds = array<i64: 1, 64>}, {pipeline_mode = #tpu.pipeline_mode<synchronous>, transform_indices = @transform_10, window_bounds = array<i64: 64, 32>}, {pipeline_mode = #tpu.pipeline_mode<synchronous>, transform_indices = @transform_11, window_bounds = array<i64: 1, 32>}, {transform_indices = @transform_12, window_bounds = array<i64: 1, 16, 32>}]} {
    %c0 = arith.constant 0 : index
    %c0_0 = arith.constant 0 : index
    %c0_1 = arith.constant 0 : index
    %0 = vector.load %arg2[%c0, %c0_0, %c0_1] : memref<1x16x32xf32, #tpu.memory_space<vmem>>, vector<1x16x32xf32>
    %1 = vector.shape_cast %0 : vector<1x16x32xf32> to vector<16x32xf32>
    %c0_2 = arith.constant 0 : index
    %c0_3 = arith.constant 0 : index
    %c0_4 = arith.constant 0 : index
    %c0_5 = arith.constant 0 : index
    %2 = vector.load %arg3[%c0_2, %c0_3, %c0_4, %c0_5] : memref<1x4x16x8xbf16, #tpu.memory_space<vmem>>, vector<1x4x16x8xbf16>
    %3 = vector.shape_cast %2 : vector<1x4x16x8xbf16> to vector<4x16x8xbf16>
    %4 = tpu.iota {dimensions = array<i32: 0>} : vector<16x16xi32>
    %5 = tpu.iota {dimensions = array<i32: 1>} : vector<16x16xi32>
    %6 = arith.cmpi sle, %5, %4 : vector<16x16xi32>
    %cst = arith.constant -1.000000e+30 : f32
    %7 = vector.broadcast %cst : f32 to vector<4x16xf32>
    %cst_6 = arith.constant 0.000000e+00 : f32
    %8 = vector.broadcast %cst_6 : f32 to vector<4x16xf32>
    %cst_7 = arith.constant 0.000000e+00 : f32
    %9 = vector.broadcast %cst_7 : f32 to vector<4x16x8xf32>
    %c0_i32 = arith.constant 0 : i32
    %10 = arith.subi %arg1, %c0_i32 : i32
    %11 = arith.addi %c0_i32, %10 : i32
    %c1_i32 = arith.constant 1 : i32
    %12:3 = scf.for %arg15 = %c0_i32 to %11 step %c1_i32 iter_args(%arg16 = %7, %arg17 = %8, %arg18 = %9) -> (vector<4x16xf32>, vector<4x16xf32>, vector<4x16x8xf32>)  : i32 {
      %c16_i32_48 = arith.constant 16 : i32
      %105 = arith.muli %arg15, %c16_i32_48 : i32
      %106 = tpu.assume_multiple %105, 16 : i32
      %c0_49 = arith.constant 0 : index
      %c0_50 = arith.constant 0 : index
      %107 = arith.index_cast %106 : i32 to index
      %c0_51 = arith.constant 0 : index
      %108 = vector.load %arg4[%c0_49, %c0_50, %107, %c0_51] : memref<1x4x64x8xbf16, #tpu.memory_space<vmem>>, vector<1x4x16x8xbf16>
      %109 = vector.shape_cast %108 : vector<1x4x16x8xbf16> to vector<4x16x8xbf16>
      %c0_52 = arith.constant 0 : index
      %c0_53 = arith.constant 0 : index
      %110 = arith.index_cast %106 : i32 to index
      %c0_54 = arith.constant 0 : index
      %111 = vector.load %arg5[%c0_52, %c0_53, %110, %c0_54] : memref<1x4x64x8xbf16, #tpu.memory_space<vmem>>, vector<1x4x16x8xbf16>
      %112 = vector.shape_cast %111 : vector<1x4x16x8xbf16> to vector<4x16x8xbf16>
      "tpu.trace_start"() <{level = 10 : i32, message = "hqd,hkd->hqk"}> : () -> ()
      %cst_55 = arith.constant dense<0.000000e+00> : vector<4x16x16xf32>
      %113 = tpu.matmul %3, %109, %cst_55 {dimension_numbers = #tpu.dot_dimension_numbers<[2], [2], [1], [1], [0, 0, 0, 1, 1, 1], [0], [0]>} : vector<4x16x8xbf16>, vector<4x16x8xbf16>, vector<4x16x16xf32> -> vector<4x16x16xf32>
      "tpu.trace_stop"() : () -> ()
      %cst_56 = arith.constant dense<0xFF800000> : vector<4x16xf32>
      %114 = vector.multi_reduction <maximumf>, %113, %cst_56 [2] : vector<4x16x16xf32> to vector<4x16xf32>
      %115 = arith.maximumf %arg16, %114 : vector<4x16xf32>
      %116 = arith.subf %arg16, %115 : vector<4x16xf32>
      %117 = math.exp %116 : vector<4x16xf32>
      %118 = vector.shape_cast %115 : vector<4x16xf32> to vector<4x16x1xf32>
      %119 = vector.broadcast %118 : vector<4x16x1xf32> to vector<4x16x16xf32>
      %120 = arith.subf %113, %119 : vector<4x16x16xf32>
      %121 = math.exp %120 : vector<4x16x16xf32>
      %122 = arith.mulf %117, %arg17 : vector<4x16xf32>
      %cst_57 = arith.constant dense<0.000000e+00> : vector<4x16xf32>
      %123 = vector.multi_reduction <add>, %121, %cst_57 [2] : vector<4x16x16xf32> to vector<4x16xf32>
      %124 = arith.addf %122, %123 : vector<4x16xf32>
      %125 = vector.shape_cast %117 : vector<4x16xf32> to vector<4x16x1xf32>
      %126 = vector.broadcast %125 : vector<4x16x1xf32> to vector<4x16x8xf32>
      %127 = arith.mulf %126, %arg18 : vector<4x16x8xf32>
      %128 = arith.truncf %121 : vector<4x16x16xf32> to vector<4x16x16xbf16>
      "tpu.trace_start"() <{level = 10 : i32, message = "hqk,hkd->hqd"}> : () -> ()
      %cst_58 = arith.constant dense<0.000000e+00> : vector<4x16x8xf32>
      %129 = tpu.matmul %128, %112, %cst_58 {dimension_numbers = #tpu.dot_dimension_numbers<[2], [1], [1], [2], [0, 0, 0, 1, 1, 2], [0], [0]>} : vector<4x16x16xbf16>, vector<4x16x8xbf16>, vector<4x16x8xf32> -> vector<4x16x8xf32>
      "tpu.trace_stop"() : () -> ()
      %130 = arith.addf %127, %129 : vector<4x16x8xf32>
      scf.yield %115, %124, %130 : vector<4x16xf32>, vector<4x16xf32>, vector<4x16x8xf32>
    }
    %c16_i32 = arith.constant 16 : i32
    %13 = arith.muli %arg1, %c16_i32 : i32
    %14 = tpu.assume_multiple %13, 16 : i32
    %c0_8 = arith.constant 0 : index
    %c0_9 = arith.constant 0 : index
    %15 = arith.index_cast %14 : i32 to index
    %c0_10 = arith.constant 0 : index
    %16 = vector.load %arg4[%c0_8, %c0_9, %15, %c0_10] : memref<1x4x64x8xbf16, #tpu.memory_space<vmem>>, vector<1x4x16x8xbf16>
    %17 = vector.shape_cast %16 : vector<1x4x16x8xbf16> to vector<4x16x8xbf16>
    %c0_11 = arith.constant 0 : index
    %c0_12 = arith.constant 0 : index
    %18 = arith.index_cast %14 : i32 to index
    %c0_13 = arith.constant 0 : index
    %19 = vector.load %arg5[%c0_11, %c0_12, %18, %c0_13] : memref<1x4x64x8xbf16, #tpu.memory_space<vmem>>, vector<1x4x16x8xbf16>
    %20 = vector.shape_cast %19 : vector<1x4x16x8xbf16> to vector<4x16x8xbf16>
    "tpu.trace_start"() <{level = 10 : i32, message = "hqd,hkd->hqk"}> : () -> ()
    %cst_14 = arith.constant dense<0.000000e+00> : vector<4x16x16xf32>
    %21 = tpu.matmul %3, %17, %cst_14 {dimension_numbers = #tpu.dot_dimension_numbers<[2], [2], [1], [1], [0, 0, 0, 1, 1, 1], [0], [0]>} : vector<4x16x8xbf16>, vector<4x16x8xbf16>, vector<4x16x16xf32> -> vector<4x16x16xf32>
    "tpu.trace_stop"() : () -> ()
    %22 = vector.shape_cast %6 : vector<16x16xi1> to vector<1x16x16xi1>
    %cst_15 = arith.constant -1.000000e+30 : f32
    %23 = vector.shape_cast %22 : vector<1x16x16xi1> to vector<1x16x16xi1>
    %24 = vector.broadcast %23 : vector<1x16x16xi1> to vector<4x16x16xi1>
    %25 = vector.broadcast %cst_15 : f32 to vector<4x16x16xf32>
    %26 = arith.select %24, %21, %25 : vector<4x16x16xi1>, vector<4x16x16xf32>
    %cst_16 = arith.constant dense<0xFF800000> : vector<4x16xf32>
    %27 = vector.multi_reduction <maximumf>, %26, %cst_16 [2] : vector<4x16x16xf32> to vector<4x16xf32>
    %28 = arith.maximumf %12#0, %27 : vector<4x16xf32>
    %29 = arith.subf %12#0, %28 : vector<4x16xf32>
    %30 = math.exp %29 : vector<4x16xf32>
    %31 = vector.shape_cast %28 : vector<4x16xf32> to vector<4x16x1xf32>
    %32 = vector.broadcast %31 : vector<4x16x1xf32> to vector<4x16x16xf32>
    %33 = arith.subf %26, %32 : vector<4x16x16xf32>
    %34 = math.exp %33 : vector<4x16x16xf32>
    %35 = arith.mulf %30, %12#1 : vector<4x16xf32>
    %cst_17 = arith.constant dense<0.000000e+00> : vector<4x16xf32>
    %36 = vector.multi_reduction <add>, %34, %cst_17 [2] : vector<4x16x16xf32> to vector<4x16xf32>
    %37 = arith.addf %35, %36 : vector<4x16xf32>
    %38 = vector.shape_cast %30 : vector<4x16xf32> to vector<4x16x1xf32>
    %39 = vector.broadcast %38 : vector<4x16x1xf32> to vector<4x16x8xf32>
    %40 = arith.mulf %39, %12#2 : vector<4x16x8xf32>
    %41 = arith.truncf %34 : vector<4x16x16xf32> to vector<4x16x16xbf16>
    "tpu.trace_start"() <{level = 10 : i32, message = "hqk,hkd->hqd"}> : () -> ()
    %cst_18 = arith.constant dense<0.000000e+00> : vector<4x16x8xf32>
    %42 = tpu.matmul %41, %20, %cst_18 {dimension_numbers = #tpu.dot_dimension_numbers<[2], [1], [1], [2], [0, 0, 0, 1, 1, 2], [0], [0]>} : vector<4x16x16xbf16>, vector<4x16x8xbf16>, vector<4x16x8xf32> -> vector<4x16x8xf32>
    "tpu.trace_stop"() : () -> ()
    %43 = arith.addf %40, %42 : vector<4x16x8xf32>
    %44 = tpu.reciprocal %37 {approx = true} : vector<4x16xf32> -> vector<4x16xf32>
    %45 = vector.shape_cast %44 : vector<4x16xf32> to vector<4x16x1xf32>
    %46 = vector.broadcast %45 : vector<4x16x1xf32> to vector<4x16x8xf32>
    %47 = arith.mulf %43, %46 : vector<4x16x8xf32>
    %48 = tpu.transpose %47, [1, 0, 2] : vector<4x16x8xf32> -> vector<16x4x8xf32>
    %49 = vector.shape_cast %48 : vector<16x4x8xf32> to vector<16x32xf32>
    %50 = arith.truncf %49 : vector<16x32xf32> to vector<16x32xbf16>
    %c0_19 = arith.constant 0 : index
    %c0_20 = arith.constant 0 : index
    %51 = vector.load %arg6[%c0_19, %c0_20] : memref<32x32xbf16, #tpu.memory_space<vmem>>, vector<32x32xbf16>
    %cst_21 = arith.constant dense<0.000000e+00> : vector<16x32xf32>
    %52 = tpu.matmul %50, %51, %cst_21 {dimension_numbers = #tpu.dot_dimension_numbers<[1], [0], [0], [1], [0, 0, 1, 1], [], []>} : vector<16x32xbf16>, vector<32x32xbf16>, vector<16x32xf32> -> vector<16x32xf32>
    %c0_22 = arith.constant 0 : index
    %c0_23 = arith.constant 0 : index
    %53 = vector.load %arg7[%c0_22, %c0_23] : memref<1x32xf32, #tpu.memory_space<vmem>>, vector<1x32xf32>
    %54 = vector.broadcast %53 : vector<1x32xf32> to vector<16x32xf32>
    %55 = arith.addf %52, %54 : vector<16x32xf32>
    %56 = arith.addf %1, %55 : vector<16x32xf32>
    %c0_24 = arith.constant 0 : index
    %c0_25 = arith.constant 0 : index
    %57 = vector.load %arg8[%c0_24, %c0_25] : memref<1x32xf32, #tpu.memory_space<vmem>>, vector<1x32xf32>
    %c0_26 = arith.constant 0 : index
    %c0_27 = arith.constant 0 : index
    %58 = vector.load %arg9[%c0_26, %c0_27] : memref<1x32xf32, #tpu.memory_space<vmem>>, vector<1x32xf32>
    %cst_28 = arith.constant dense<0.000000e+00> : vector<16xf32>
    %59 = vector.multi_reduction <add>, %56, %cst_28 [1] : vector<16x32xf32> to vector<16xf32>
    %60 = vector.shape_cast %59 : vector<16xf32> to vector<16x1xf32>
    %cst_29 = arith.constant 3.200000e+01 : f32
    %61 = vector.broadcast %cst_29 : f32 to vector<16x1xf32>
    %62 = arith.divf %60, %61 : vector<16x1xf32>
    %63 = vector.broadcast %62 : vector<16x1xf32> to vector<16x32xf32>
    %64 = arith.subf %56, %63 : vector<16x32xf32>
    %65 = arith.mulf %64, %64 : vector<16x32xf32>
    %cst_30 = arith.constant dense<0.000000e+00> : vector<16xf32>
    %66 = vector.multi_reduction <add>, %65, %cst_30 [1] : vector<16x32xf32> to vector<16xf32>
    %67 = vector.shape_cast %66 : vector<16xf32> to vector<16x1xf32>
    %cst_31 = arith.constant 3.200000e+01 : f32
    %68 = vector.broadcast %cst_31 : f32 to vector<16x1xf32>
    %69 = arith.divf %67, %68 : vector<16x1xf32>
    %70 = vector.broadcast %62 : vector<16x1xf32> to vector<16x32xf32>
    %71 = arith.subf %56, %70 : vector<16x32xf32>
    %cst_32 = arith.constant 9.99999974E-6 : f32
    %72 = vector.broadcast %cst_32 : f32 to vector<16x1xf32>
    %73 = arith.addf %69, %72 : vector<16x1xf32>
    %74 = math.rsqrt %73 : vector<16x1xf32>
    %75 = vector.broadcast %74 : vector<16x1xf32> to vector<16x32xf32>
    %76 = arith.mulf %71, %75 : vector<16x32xf32>
    %77 = vector.broadcast %57 : vector<1x32xf32> to vector<16x32xf32>
    %78 = arith.mulf %76, %77 : vector<16x32xf32>
    %79 = vector.broadcast %58 : vector<1x32xf32> to vector<16x32xf32>
    %80 = arith.addf %78, %79 : vector<16x32xf32>
    %81 = arith.truncf %80 : vector<16x32xf32> to vector<16x32xbf16>
    %c0_33 = arith.constant 0 : index
    %c0_34 = arith.constant 0 : index
    %82 = vector.load %arg10[%c0_33, %c0_34] : memref<32x64xbf16, #tpu.memory_space<vmem>>, vector<32x64xbf16>
    %cst_35 = arith.constant dense<0.000000e+00> : vector<16x64xf32>
    %83 = tpu.matmul %81, %82, %cst_35 {dimension_numbers = #tpu.dot_dimension_numbers<[1], [0], [0], [1], [0, 0, 1, 1], [], []>} : vector<16x32xbf16>, vector<32x64xbf16>, vector<16x64xf32> -> vector<16x64xf32>
    %c0_36 = arith.constant 0 : index
    %c0_37 = arith.constant 0 : index
    %84 = vector.load %arg11[%c0_36, %c0_37] : memref<1x64xf32, #tpu.memory_space<vmem>>, vector<1x64xf32>
    %85 = vector.broadcast %84 : vector<1x64xf32> to vector<16x64xf32>
    %86 = arith.addf %83, %85 : vector<16x64xf32>
    %cst_38 = arith.constant 1.702000e+00 : f32
    %87 = vector.broadcast %cst_38 : f32 to vector<16x64xf32>
    %88 = arith.mulf %87, %86 : vector<16x64xf32>
    %89 = arith.negf %88 : vector<16x64xf32>
    %90 = math.exp %89 : vector<16x64xf32>
    %cst_39 = arith.constant 1.000000e+00 : f32
    %91 = vector.broadcast %cst_39 : f32 to vector<16x64xf32>
    %92 = arith.addf %91, %90 : vector<16x64xf32>
    %93 = arith.divf %91, %92 : vector<16x64xf32>
    %94 = arith.mulf %86, %93 : vector<16x64xf32>
    %95 = arith.truncf %94 : vector<16x64xf32> to vector<16x64xbf16>
    %c0_40 = arith.constant 0 : index
    %c0_41 = arith.constant 0 : index
    %96 = vector.load %arg12[%c0_40, %c0_41] : memref<64x32xbf16, #tpu.memory_space<vmem>>, vector<64x32xbf16>
    %cst_42 = arith.constant dense<0.000000e+00> : vector<16x32xf32>
    %97 = tpu.matmul %95, %96, %cst_42 {dimension_numbers = #tpu.dot_dimension_numbers<[1], [0], [0], [1], [0, 0, 1, 1], [], []>} : vector<16x64xbf16>, vector<64x32xbf16>, vector<16x32xf32> -> vector<16x32xf32>
    %c0_43 = arith.constant 0 : index
    %c0_44 = arith.constant 0 : index
    %98 = vector.load %arg13[%c0_43, %c0_44] : memref<1x32xf32, #tpu.memory_space<vmem>>, vector<1x32xf32>
    %99 = vector.broadcast %98 : vector<1x32xf32> to vector<16x32xf32>
    %100 = arith.addf %97, %99 : vector<16x32xf32>
    %101 = arith.addf %56, %100 : vector<16x32xf32>
    %c0_45 = arith.constant 0 : index
    %c0_46 = arith.constant 0 : index
    %c0_47 = arith.constant 0 : index
    %102 = vector.load %arg14[%c0_45, %c0_46, %c0_47] : memref<1x16x32xf32, #tpu.memory_space<vmem>>, vector<1x16x32xf32>
    %103 = vector.shape_cast %102 : vector<1x16x32xf32> to vector<16x32xf32>
    %104 = vector.shape_cast %101 : vector<16x32xf32> to vector<1x16x32xf32>
    tpu.vector_store %arg14[%c0_45, %c0_46, %c0_47], %104 {strides = array<i32>} : memref<1x16x32xf32, #tpu.memory_space<vmem>>, vector<1x16x32xf32>,
    return
  }
  func.func @transform_0(%arg0: i32, %arg1: i32) -> (i32, i32, i32) {
    %c0_i32 = arith.constant 0 : i32
    %c0_i32_0 = arith.constant 0 : i32
    return %arg0, %arg1, %c0_i32 : i32, i32, i32
  }
  func.func @transform_1(%arg0: i32, %arg1: i32) -> (i32, i32, i32, i32) {
    %c0_i32 = arith.constant 0 : i32
    %c0_i32_0 = arith.constant 0 : i32
    %c0_i32_1 = arith.constant 0 : i32
    return %arg0, %c0_i32, %arg1, %c0_i32_0 : i32, i32, i32, i32
  }
  func.func @transform_2(%arg0: i32, %arg1: i32) -> (i32, i32, i32, i32) {
    %c0_i32 = arith.constant 0 : i32
    %c0_i32_0 = arith.constant 0 : i32
    %c0_i32_1 = arith.constant 0 : i32
    %c0_i32_2 = arith.constant 0 : i32
    return %arg0, %c0_i32, %c0_i32_0, %c0_i32_1 : i32, i32, i32, i32
  }
  func.func @transform_3(%arg0: i32, %arg1: i32) -> (i32, i32, i32, i32) {
    %c0_i32 = arith.constant 0 : i32
    %c0_i32_0 = arith.constant 0 : i32
    %c0_i32_1 = arith.constant 0 : i32
    %c0_i32_2 = arith.constant 0 : i32
    return %arg0, %c0_i32, %c0_i32_0, %c0_i32_1 : i32, i32, i32, i32
  }
  func.func @transform_4(%arg0: i32, %arg1: i32) -> (i32, i32) {
    %c0_i32 = arith.constant 0 : i32
    %c0_i32_0 = arith.constant 0 : i32
    %c0_i32_1 = arith.constant 0 : i32
    return %c0_i32, %c0_i32_0 : i32, i32
  }
  func.func @transform_5(%arg0: i32, %arg1: i32) -> (i32, i32) {
    %c0_i32 = arith.constant 0 : i32
    %c0_i32_0 = arith.constant 0 : i32
    %c0_i32_1 = arith.constant 0 : i32
    return %c0_i32, %c0_i32_0 : i32, i32
  }
  func.func @transform_6(%arg0: i32, %arg1: i32) -> (i32, i32) {
    %c0_i32 = arith.constant 0 : i32
    %c0_i32_0 = arith.constant 0 : i32
    %c0_i32_1 = arith.constant 0 : i32
    return %c0_i32, %c0_i32_0 : i32, i32
  }
  func.func @transform_7(%arg0: i32, %arg1: i32) -> (i32, i32) {
    %c0_i32 = arith.constant 0 : i32
    %c0_i32_0 = arith.constant 0 : i32
    %c0_i32_1 = arith.constant 0 : i32
    return %c0_i32, %c0_i32_0 : i32, i32
  }
  func.func @transform_8(%arg0: i32, %arg1: i32) -> (i32, i32) {
    %c0_i32 = arith.constant 0 : i32
    %c0_i32_0 = arith.constant 0 : i32
    %c0_i32_1 = arith.constant 0 : i32
    return %c0_i32, %c0_i32_0 : i32, i32
  }
  func.func @transform_9(%arg0: i32, %arg1: i32) -> (i32, i32) {
    %c0_i32 = arith.constant 0 : i32
    %c0_i32_0 = arith.constant 0 : i32
    %c0_i32_1 = arith.constant 0 : i32
    return %c0_i32, %c0_i32_0 : i32, i32
  }
  func.func @transform_10(%arg0: i32, %arg1: i32) -> (i32, i32) {
    %c0_i32 = arith.constant 0 : i32
    %c0_i32_0 = arith.constant 0 : i32
    %c0_i32_1 = arith.constant 0 : i32
    return %c0_i32, %c0_i32_0 : i32, i32
  }
  func.func @transform_11(%arg0: i32, %arg1: i32) -> (i32, i32) {
    %c0_i32 = arith.constant 0 : i32
    %c0_i32_0 = arith.constant 0 : i32
    %c0_i32_1 = arith.constant 0 : i32
    return %c0_i32, %c0_i32_0 : i32, i32
  }
  func.func @transform_12(%arg0: i32, %arg1: i32) -> (i32, i32, i32) {
    %c0_i32 = arith.constant 0 : i32
    %c0_i32_0 = arith.constant 0 : i32
    return %arg0, %arg1, %c0_i32 : i32, i32, i32
  }
}

module attributes {stable_mosaic.version = 11 : i64} {
  func.func @encoder_kernel(%arg0: i32, %arg1: i32, %arg2: memref<1x16x32xf32, #tpu.memory_space<vmem>>, %arg3: memref<1x4x16x8xbf16, #tpu.memory_space<vmem>>, %arg4: memref<1x4x64x8xbf16, #tpu.memory_space<vmem>>, %arg5: memref<1x4x64x8xbf16, #tpu.memory_space<vmem>>, %arg6: memref<32x32xbf16, #tpu.memory_space<vmem>>, %arg7: memref<1x32xf32, #tpu.memory_space<vmem>>, %arg8: memref<1x32xf32, #tpu.memory_space<vmem>>, %arg9: memref<1x32xf32, #tpu.memory_space<vmem>>, %arg10: memref<32x64xbf16, #tpu.memory_space<vmem>>, %arg11: memref<1x64xf32, #tpu.memory_space<vmem>>, %arg12: memref<64x32xbf16, #tpu.memory_space<vmem>>, %arg13: memref<1x32xf32, #tpu.memory_space<vmem>>, %arg14: memref<1x16x32xf32, #tpu.memory_space<vmem>>) attributes {dimension_semantics = [#tpu.dimension_semantics<parallel>, #tpu.dimension_semantics<parallel>], iteration_bounds = array<i64: 2, 4>, scalar_prefetch = 0 : i64, scratch_operands = 0 : i64, tpu.core_type = #tpu.core_type<tc>, window_params = [{transform_indices = @transform_0, window_bounds = array<i64: 1, 16, 32>}, {transform_indices = @transform_1, window_bounds = array<i64: 1, 4, 16, 8>}, {transform_indices = @transform_2, window_bounds = array<i64: 1, 4, 64, 8>}, {transform_indices = @transform_3, window_bounds = array<i64: 1, 4, 64, 8>}, {pipeline_mode = #tpu.pipeline_mode<synchronous>, transform_indices = @transform_4, window_bounds = array<i64: 32, 32>}, {pipeline_mode = #tpu.pipeline_mode<synchronous>, transform_indices = @transform_5, window_bounds = array<i64: 1, 32>}, {pipeline_mode = #tpu.pipeline_mode<synchronous>, transform_indices = @transform_6, window_bounds = array<i64: 1, 32>}, {pipeline_mode = #tpu.pipeline_mode<synchronous>, transform_indices = @transform_7, window_bounds = array<i64: 1, 32>}, {pipeline_mode = #tpu.pipeline_mode<synchronous>, transform_indices = @transform_8, window_bounds = array<i64: 32, 64>}, {pipeline_mode = #tpu.pipeline_mode<synchronous>, transform_indices = @transform_9, window_bounds = array<i64: 1, 64>}, {pipeline_mode = #tpu.pipeline_mode<synchronous>, transform_indices = @transform_10, window_bounds = array<i64: 64, 32>}, {pipeline_mode = #tpu.pipeline_mode<synchronous>, transform_indices = @transform_11, window_bounds = array<i64: 1, 32>}, {transform_indices = @transform_12, window_bounds = array<i64: 1, 16, 32>}]} {
    %c0 = arith.constant 0 : index
    %c0_0 = arith.constant 0 : index
    %c0_1 = arith.constant 0 : index
    %0 = vector.load %arg2[%c0, %c0_0, %c0_1] : memref<1x16x32xf32, #tpu.memory_space<vmem>>, vector<1x16x32xf32>
    %1 = vector.shape_cast %0 : vector<1x16x32xf32> to vector<16x32xf32>
    %c0_2 = arith.constant 0 : index
    %c0_3 = arith.constant 0 : index
    %c0_4 = arith.constant 0 : index
    %c0_5 = arith.constant 0 : index
    %2 = vector.load %arg3[%c0_2, %c0_3, %c0_4, %c0_5] : memref<1x4x16x8xbf16, #tpu.memory_space<vmem>>, vector<1x4x16x8xbf16>
    %3 = vector.shape_cast %2 : vector<1x4x16x8xbf16> to vector<4x16x8xbf16>
    %4 = tpu.iota {dimensions = array<i32: 0>} : vector<16x16xi32>
    %5 = tpu.iota {dimensions = array<i32: 1>} : vector<16x16xi32>
    %6 = arith.cmpi sle, %5, %4 : vector<16x16xi32>
    %cst = arith.constant -1.000000e+30 : f32
    %7 = vector.broadcast %cst : f32 to vector<4x16xf32>
    %cst_6 = arith.constant 0.000000e+00 : f32
    %8 = vector.broadcast %cst_6 : f32 to vector<4x16xf32>
    %cst_7 = arith.constant 0.000000e+00 : f32
    %9 = vector.broadcast %cst_7 : f32 to vector<4x16x8xf32>
    %c0_i32 = arith.constant 0 : i32
    %10 = arith.subi %arg1, %c0_i32 : i32
    %11 = arith.addi %c0_i32, %10 : i32
    %c1_i32 = arith.constant 1 : i32
    %12:3 = scf.for %arg15 = %c0_i32 to %11 step %c1_i32 iter_args(%arg16 = %7, %arg17 = %8, %arg18 = %9) -> (vector<4x16xf32>, vector<4x16xf32>, vector<4x16x8xf32>)  : i32 {
      %c16_i32_48 = arith.constant 16 : i32
      %105 = arith.muli %arg15, %c16_i32_48 : i32
      %106 = tpu.assume_multiple %105, 16 : i32
      %c0_49 = arith.constant 0 : index
      %c0_50 = arith.constant 0 : index
      %107 = arith.index_cast %106 : i32 to index
      %c0_51 = arith.constant 0 : index
      %108 = vector.load %arg4[%c0_49, %c0_50, %107, %c0_51] : memref<1x4x64x8xbf16, #tpu.memory_space<vmem>>, vector<1x4x16x8xbf16>
      %109 = vector.shape_cast %108 : vector<1x4x16x8xbf16> to vector<4x16x8xbf16>
      %c0_52 = arith.constant 0 : index
      %c0_53 = arith.constant 0 : index
      %110 = arith.index_cast %106 : i32 to index
      %c0_54 = arith.constant 0 : index
      %111 = vector.load %arg5[%c0_52, %c0_53, %110, %c0_54] : memref<1x4x64x8xbf16, #tpu.memory_space<vmem>>, vector<1x4x16x8xbf16>
      %112 = vector.shape_cast %111 : vector<1x4x16x8xbf16> to vector<4x16x8xbf16>
      "tpu.trace_start"() <{level = 10 : i32, message = "hqd,hkd->hqk"}> : () -> ()
      %cst_55 = arith.constant dense<0.000000e+00> : vector<4x16x16xf32>
      %113 = tpu.matmul %3, %109, %cst_55 {dimension_numbers = #tpu.dot_dimension_numbers<[2], [2], [1], [1], [0, 0, 0, 1, 1, 1], [0], [0]>} : vector<4x16x8xbf16>, vector<4x16x8xbf16>, vector<4x16x16xf32> -> vector<4x16x16xf32>
      "tpu.trace_stop"() : () -> ()
      %cst_56 = arith.constant dense<0xFF800000> : vector<4x16xf32>
      %114 = vector.multi_reduction <maximumf>, %113, %cst_56 [2] : vector<4x16x16xf32> to vector<4x16xf32>
      %115 = arith.maximumf %arg16, %114 : vector<4x16xf32>
      %116 = arith.subf %arg16, %115 : vector<4x16xf32>
      %117 = math.exp %116 : vector<4x16xf32>
      %118 = vector.shape_cast %115 : vector<4x16xf32> to vector<4x16x1xf32>
      %119 = vector.broadcast %118 : vector<4x16x1xf32> to vector<4x16x16xf32>
      %120 = arith.subf %113, %119 : vector<4x16x16xf32>
      %121 = math.exp %120 : vector<4x16x16xf32>
      %122 = arith.mulf %117, %arg17 : vector<4x16xf32>
      %cst_57 = arith.constant dense<0.000000e+00> : vector<4x16xf32>
      %123 = vector.multi_reduction <add>, %121, %cst_57 [2] : vector<4x16x16xf32> to vector<4x16xf32>
      %124 = arith.addf %122, %123 : vector<4x16xf32>
      %125 = vector.shape_cast %117 : vector<4x16xf32> to vector<4x16x1xf32>
      %126 = vector.broadcast %125 : vector<4x16x1xf32> to vector<4x16x8xf32>
      %127 = arith.mulf %126, %arg18 : vector<4x16x8xf32>
      %128 = arith.truncf %121 : vector<4x16x16xf32> to vector<4x16x16xbf16>
      "tpu.trace_start"() <{level = 10 : i32, message = "hqk,hkd->hqd"}> : () -> ()
      %cst_58 = arith.constant dense<0.000000e+00> : vector<4x16x8xf32>
      %129 = tpu.matmul %128, %112, %cst_58 {dimension_numbers = #tpu.dot_dimension_numbers<[2], [1], [1], [2], [0, 0, 0, 1, 1, 2], [0], [0]>} : vector<4x16x16xbf16>, vector<4x16x8xbf16>, vector<4x16x8xf32> -> vector<4x16x8xf32>
      "tpu.trace_stop"() : () -> ()
      %130 = arith.addf %127, %129 : vector<4x16x8xf32>
      scf.yield %115, %124, %130 : vector<4x16xf32>, vector<4x16xf32>, vector<4x16x8xf32>
    }
    %c16_i32 = arith.constant 16 : i32
    %13 = arith.muli %arg1, %c16_i32 : i32
    %14 = tpu.assume_multiple %13, 16 : i32
    %c0_8 = arith.constant 0 : index
    %c0_9 = arith.constant 0 : index
    %15 = arith.index_cast %14 : i32 to index
    %c0_10 = arith.constant 0 : index
    %16 = vector.load %arg4[%c0_8, %c0_9, %15, %c0_10] : memref<1x4x64x8xbf16, #tpu.memory_space<vmem>>, vector<1x4x16x8xbf16>
    %17 = vector.shape_cast %16 : vector<1x4x16x8xbf16> to vector<4x16x8xbf16>
    %c0_11 = arith.constant 0 : index
    %c0_12 = arith.constant 0 : index
    %18 = arith.index_cast %14 : i32 to index
    %c0_13 = arith.constant 0 : index
    %19 = vector.load %arg5[%c0_11, %c0_12, %18, %c0_13] : memref<1x4x64x8xbf16, #tpu.memory_space<vmem>>, vector<1x4x16x8xbf16>
    %20 = vector.shape_cast %19 : vector<1x4x16x8xbf16> to vector<4x16x8xbf16>
    "tpu.trace_start"() <{level = 10 : i32, message = "hqd,hkd->hqk"}> : () -> ()
    %cst_14 = arith.constant dense<0.000000e+00> : vector<4x16x16xf32>
    %21 = tpu.matmul %3, %17, %cst_14 {dimension_numbers = #tpu.dot_dimension_numbers<[2], [2], [1], [1], [0, 0, 0, 1, 1, 1], [0], [0]>} : vector<4x16x8xbf16>, vector<4x16x8xbf16>, vector<4x16x16xf32> -> vector<4x16x16xf32>
    "tpu.trace_stop"() : () -> ()
    %22 = vector.shape_cast %6 : vector<16x16xi1> to vector<1x16x16xi1>
    %cst_15 = arith.constant -1.000000e+30 : f32
    %23 = vector.shape_cast %22 : vector<1x16x16xi1> to vector<1x16x16xi1>
    %24 = vector.broadcast %23 : vector<1x16x16xi1> to vector<4x16x16xi1>
    %25 = vector.broadcast %cst_15 : f32 to vector<4x16x16xf32>
    %26 = arith.select %24, %21, %25 : vector<4x16x16xi1>, vector<4x16x16xf32>
    %cst_16 = arith.constant dense<0xFF800000> : vector<4x16xf32>
    %27 = vector.multi_reduction <maximumf>, %26, %cst_16 [2] : vector<4x16x16xf32> to vector<4x16xf32>
    %28 = arith.maximumf %12#0, %27 : vector<4x16xf32>
    %29 = arith.subf %12#0, %28 : vector<4x16xf32>
    %30 = math.exp %29 : vector<4x16xf32>
    %31 = vector.shape_cast %28 : vector<4x16xf32> to vector<4x16x1xf32>
    %32 = vector.broadcast %31 : vector<4x16x1xf32> to vector<4x16x16xf32>
    %33 = arith.subf %26, %32 : vector<4x16x16xf32>
    %34 = math.exp %33 : vector<4x16x16xf32>
    %35 = arith.mulf %30, %12#1 : vector<4x16xf32>
    %cst_17 = arith.constant dense<0.000000e+00> : vector<4x16xf32>
    %36 = vector.multi_reduction <add>, %34, %cst_17 [2] : vector<4x16x16xf32> to vector<4x16xf32>
    %37 = arith.addf %35, %36 : vector<4x16xf32>
    %38 = vector.shape_cast %30 : vector<4x16xf32> to vector<4x16x1xf32>
    %39 = vector.broadcast %38 : vector<4x16x1xf32> to vector<4x16x8xf32>
    %40 = arith.mulf %39, %12#2 : vector<4x16x8xf32>
    %41 = arith.truncf %34 : vector<4x16x16xf32> to vector<4x16x16xbf16>
    "tpu.trace_start"() <{level = 10 : i32, message = "hqk,hkd->hqd"}> : () -> ()
    %cst_18 = arith.constant dense<0.000000e+00> : vector<4x16x8xf32>
    %42 = tpu.matmul %41, %20, %cst_18 {dimension_numbers = #tpu.dot_dimension_numbers<[2], [1], [1], [2], [0, 0, 0, 1, 1, 2], [0], [0]>} : vector<4x16x16xbf16>, vector<4x16x8xbf16>, vector<4x16x8xf32> -> vector<4x16x8xf32>
    "tpu.trace_stop"() : () -> ()
    %43 = arith.addf %40, %42 : vector<4x16x8xf32>
    %44 = tpu.reciprocal %37 {approx = true} : vector<4x16xf32> -> vector<4x16xf32>
    %45 = vector.shape_cast %44 : vector<4x16xf32> to vector<4x16x1xf32>
    %46 = vector.broadcast %45 : vector<4x16x1xf32> to vector<4x16x8xf32>
    %47 = arith.mulf %43, %46 : vector<4x16x8xf32>
    %48 = tpu.transpose %47, [1, 0, 2] : vector<4x16x8xf32> -> vector<16x4x8xf32>
    %49 = vector.shape_cast %48 : vector<16x4x8xf32> to vector<16x32xf32>
    %50 = arith.truncf %49 : vector<16x32xf32> to vector<16x32xbf16>
    %c0_19 = arith.constant 0 : index
    %c0_20 = arith.constant 0 : index
    %51 = vector.load %arg6[%c0_19, %c0_20] : memref<32x32xbf16, #tpu.memory_space<vmem>>, vector<32x32xbf16>
    %cst_21 = arith.constant dense<0.000000e+00> : vector<16x32xf32>
    %52 = tpu.matmul %50, %51, %cst_21 {dimension_numbers = #tpu.dot_dimension_numbers<[1], [0], [0], [1], [0, 0, 1, 1], [], []>} : vector<16x32xbf16>, vector<32x32xbf16>, vector<16x32xf32> -> vector<16x32xf32>
    %c0_22 = arith.constant 0 : index
    %c0_23 = arith.constant 0 : index
    %53 = vector.load %arg7[%c0_22, %c0_23] : memref<1x32xf32, #tpu.memory_space<vmem>>, vector<1x32xf32>
    %54 = vector.broadcast %53 : vector<1x32xf32> to vector<16x32xf32>
    %55 = arith.addf %52, %54 : vector<16x32xf32>
    %56 = arith.addf %1, %55 : vector<16x32xf32>
    %c0_24 = arith.constant 0 : index
    %c0_25 = arith.constant 0 : index
    %57 = vector.load %arg8[%c0_24, %c0_25] : memref<1x32xf32, #tpu.memory_space<vmem>>, vector<1x32xf32>
    %c0_26 = arith.constant 0 : index
    %c0_27 = arith.constant 0 : index
    %58 = vector.load %arg9[%c0_26, %c0_27] : memref<1x32xf32, #tpu.memory_space<vmem>>, vector<1x32xf32>
    %cst_28 = arith.constant dense<0.000000e+00> : vector<16xf32>
    %59 = vector.multi_reduction <add>, %56, %cst_28 [1] : vector<16x32xf32> to vector<16xf32>
    %60 = vector.shape_cast %59 : vector<16xf32> to vector<16x1xf32>
    %cst_29 = arith.constant 3.200000e+01 : f32
    %61 = vector.broadcast %cst_29 : f32 to vector<16x1xf32>
    %62 = arith.divf %60, %61 : vector<16x1xf32>
    %63 = vector.broadcast %62 : vector<16x1xf32> to vector<16x32xf32>
    %64 = arith.subf %56, %63 : vector<16x32xf32>
    %65 = arith.mulf %64, %64 : vector<16x32xf32>
    %cst_30 = arith.constant dense<0.000000e+00> : vector<16xf32>
    %66 = vector.multi_reduction <add>, %65, %cst_30 [1] : vector<16x32xf32> to vector<16xf32>
    %67 = vector.shape_cast %66 : vector<16xf32> to vector<16x1xf32>
    %cst_31 = arith.constant 3.200000e+01 : f32
    %68 = vector.broadcast %cst_31 : f32 to vector<16x1xf32>
    %69 = arith.divf %67, %68 : vector<16x1xf32>
    %70 = vector.broadcast %62 : vector<16x1xf32> to vector<16x32xf32>
    %71 = arith.subf %56, %70 : vector<16x32xf32>
    %cst_32 = arith.constant 9.99999974E-6 : f32
    %72 = vector.broadcast %cst_32 : f32 to vector<16x1xf32>
    %73 = arith.addf %69, %72 : vector<16x1xf32>
    %74 = math.rsqrt %73 : vector<16x1xf32>
    %75 = vector.broadcast %74 : vector<16x1xf32> to vector<16x32xf32>
    %76 = arith.mulf %71, %75 : vector<16x32xf32>
    %77 = vector.broadcast %57 : vector<1x32xf32> to vector<16x32xf32>
    %78 = arith.mulf %76, %77 : vector<16x32xf32>
    %79 = vector.broadcast %58 : vector<1x32xf32> to vector<16x32xf32>
    %80 = arith.addf %78, %79 : vector<16x32xf32>
    %81 = arith.truncf %80 : vector<16x32xf32> to vector<16x32xbf16>
    %c0_33 = arith.constant 0 : index
    %c0_34 = arith.constant 0 : index
    %82 = vector.load %arg10[%c0_33, %c0_34] : memref<32x64xbf16, #tpu.memory_space<vmem>>, vector<32x64xbf16>
    %cst_35 = arith.constant dense<0.000000e+00> : vector<16x64xf32>
    %83 = tpu.matmul %81, %82, %cst_35 {dimension_numbers = #tpu.dot_dimension_numbers<[1], [0], [0], [1], [0, 0, 1, 1], [], []>} : vector<16x32xbf16>, vector<32x64xbf16>, vector<16x64xf32> -> vector<16x64xf32>
    %c0_36 = arith.constant 0 : index
    %c0_37 = arith.constant 0 : index
    %84 = vector.load %arg11[%c0_36, %c0_37] : memref<1x64xf32, #tpu.memory_space<vmem>>, vector<1x64xf32>
    %85 = vector.broadcast %84 : vector<1x64xf32> to vector<16x64xf32>
    %86 = arith.addf %83, %85 : vector<16x64xf32>
    %cst_38 = arith.constant 1.702000e+00 : f32
    %87 = vector.broadcast %cst_38 : f32 to vector<16x64xf32>
    %88 = arith.mulf %87, %86 : vector<16x64xf32>
    %89 = arith.negf %88 : vector<16x64xf32>
    %90 = math.exp %89 : vector<16x64xf32>
    %cst_39 = arith.constant 1.000000e+00 : f32
    %91 = vector.broadcast %cst_39 : f32 to vector<16x64xf32>
    %92 = arith.addf %91, %90 : vector<16x64xf32>
    %93 = arith.divf %91, %92 : vector<16x64xf32>
    %94 = arith.mulf %86, %93 : vector<16x64xf32>
    %95 = arith.truncf %94 : vector<16x64xf32> to vector<16x64xbf16>
    %c0_40 = arith.constant 0 : index
    %c0_41 = arith.constant 0 : index
    %96 = vector.load %arg12[%c0_40, %c0_41] : memref<64x32xbf16, #tpu.memory_space<vmem>>, vector<64x32xbf16>
    %cst_42 = arith.constant dense<0.000000e+00> : vector<16x32xf32>
    %97 = tpu.matmul %95, %96, %cst_42 {dimension_numbers = #tpu.dot_dimension_numbers<[1], [0], [0], [1], [0, 0, 1, 1], [], []>} : vector<16x64xbf16>, vector<64x32xbf16>, vector<16x32xf32> -> vector<16x32xf32>
    %c0_43 = arith.constant 0 : index
    %c0_44 = arith.constant 0 : index
    %98 = vector.load %arg13[%c0_43, %c0_44] : memref<1x32xf32, #tpu.memory_space<vmem>>, vector<1x32xf32>
    %99 = vector.broadcast %98 : vector<1x32xf32> to vector<16x32xf32>
    %100 = arith.addf %97, %99 : vector<16x32xf32>
    %101 = arith.addf %56, %100 : vector<16x32xf32>
    %c0_45 = arith.constant 0 : index
    %c0_46 = arith.constant 0 : index
    %c0_47 = arith.constant 0 : index
    %102 = vector.load %arg14[%c0_45, %c0_46, %c0_47] : memref<1x16x32xf32, #tpu.memory_space<vmem>>, vector<1x16x32xf32>
    %103 = vector.shape_cast %102 : vector<1x16x32xf32> to vector<16x32xf32>
    %104 = vector.shape_cast %101 : vector<16x32xf32> to vector<1x16x32xf32>
    tpu.vector_store %arg14[%c0_45, %c0_46, %c0_47], %104 {strides = array<i32>} : memref<1x16x32xf32, #tpu.memory_space<vmem>>, vector<1x16x32xf32>,
    return
  }
  func.func @transform_0(%arg0: i32, %arg1: i32) -> (i32, i32, i32) {
    %c0_i32 = arith.constant 0 : i32
    %c0_i32_0 = arith.constant 0 : i32
    return %arg0, %arg1, %c0_i32 : i32, i32, i32
  }
  func.func @transform_1(%arg0: i32, %arg1: i32) -> (i32, i32, i32, i32) {
    %c0_i32 = arith.constant 0 : i32
    %c0_i32_0 = arith.constant 0 : i32
    %c0_i32_1 = arith.constant 0 : i32
    return %arg0, %c0_i32, %arg1, %c0_i32_0 : i32, i32, i32, i32
  }
  func.func @transform_2(%arg0: i32, %arg1: i32) -> (i32, i32, i32, i32) {
    %c0_i32 = arith.constant 0 : i32
    %c0_i32_0 = arith.constant 0 : i32
    %c0_i32_1 = arith.constant 0 : i32
    %c0_i32_2 = arith.constant 0 : i32
    return %arg0, %c0_i32, %c0_i32_0, %c0_i32_1 : i32, i32, i32, i32
  }
  func.func @transform_3(%arg0: i32, %arg1: i32) -> (i32, i32, i32, i32) {
    %c0_i32 = arith.constant 0 : i32
    %c0_i32_0 = arith.constant 0 : i32
    %c0_i32_1 = arith.constant 0 : i32
    %c0_i32_2 = arith.constant 0 : i32
    return %arg0, %c0_i32, %c0_i32_0, %c0_i32_1 : i32, i32, i32, i32
  }
  func.func @transform_4(%arg0: i32, %arg1: i32) -> (i32, i32) {
    %c0_i32 = arith.constant 0 : i32
    %c0_i32_0 = arith.constant 0 : i32
    %c0_i32_1 = arith.constant 0 : i32
    return %c0_i32, %c0_i32_0 : i32, i32
  }
  func.func @transform_5(%arg0: i32, %arg1: i32) -> (i32, i32) {
    %c0_i32 = arith.constant 0 : i32
    %c0_i32_0 = arith.constant 0 : i32
    %c0_i32_1 = arith.constant 0 : i32
    return %c0_i32, %c0_i32_0 : i32, i32
  }
  func.func @transform_6(%arg0: i32, %arg1: i32) -> (i32, i32) {
    %c0_i32 = arith.constant 0 : i32
    %c0_i32_0 = arith.constant 0 : i32
    %c0_i32_1 = arith.constant 0 : i32
    return %c0_i32, %c0_i32_0 : i32, i32
  }
  func.func @transform_7(%arg0: i32, %arg1: i32) -> (i32, i32) {
    %c0_i32 = arith.constant 0 : i32
    %c0_i32_0 = arith.constant 0 : i32
    %c0_i32_1 = arith.constant 0 : i32
    return %c0_i32, %c0_i32_0 : i32, i32
  }
  func.func @transform_8(%arg0: i32, %arg1: i32) -> (i32, i32) {
    %c0_i32 = arith.constant 0 : i32
    %c0_i32_0 = arith.constant 0 : i32
    %c0_i32_1 = arith.constant 0 : i32
    return %c0_i32, %c0_i32_0 : i32, i32
  }
  func.func @transform_9(%arg0: i32, %arg1: i32) -> (i32, i32) {
    %c0_i32 = arith.constant 0 : i32
    %c0_i32_0 = arith.constant 0 : i32
    %c0_i32_1 = arith.constant 0 : i32
    return %c0_i32, %c0_i32_0 : i32, i32
  }
  func.func @transform_10(%arg0: i32, %arg1: i32) -> (i32, i32) {
    %c0_i32 = arith.constant 0 : i32
    %c0_i32_0 = arith.constant 0 : i32
    %c0_i32_1 = arith.constant 0 : i32
    return %c0_i32, %c0_i32_0 : i32, i32
  }
  func.func @transform_11(%arg0: i32, %arg1: i32) -> (i32, i32) {
    %c0_i32 = arith.constant 0 : i32
    %c0_i32_0 = arith.constant 0 : i32
    %c0_i32_1 = arith.constant 0 : i32
    return %c0_i32, %c0_i32_0 : i32, i32
  }
  func.func @transform_12(%arg0: i32, %arg1: i32) -> (i32, i32, i32) {
    %c0_i32 = arith.constant 0 : i32
    %c0_i32_0 = arith.constant 0 : i32
    return %arg0, %arg1, %c0_i32 : i32, i32, i32
  }
}

</mosaic_0001>

<llo_original>
// kernel: tpu_custom_call.1
$region0: #{tpu_custom_call.1}
  #allocation0 [shape = 'u32[]', space=smem, size = 0x4, offset = 0x4, fixed_abs, tag = 'smem constant byte address 0x4 - core index']
  #allocation1 [shape = 'u32[72,128]{1,0:T(1,128)}', space=vmem, size = 0x9000, scoped, tag = 'internal scratch']
  %s0 = inlined_call_operand.vmem [shape: f32[2,64,32], index: 0, kind: input, shape index: {}]
  %s1 = inlined_call_operand.vmem [shape: bf16[2,4,64,8], index: 1, kind: input, shape index: {}]
  %s2 = inlined_call_operand.vmem [shape: bf16[2,4,64,8], index: 2, kind: input, shape index: {}]
  %s3 = inlined_call_operand.vmem [shape: bf16[2,4,64,8], index: 3, kind: input, shape index: {}]
  %s4 = inlined_call_operand.vmem [shape: bf16[32,32], index: 4, kind: input, shape index: {}]
  %s5 = inlined_call_operand.vmem [shape: f32[1,32], index: 5, kind: input, shape index: {}]
  %s6 = inlined_call_operand.vmem [shape: f32[1,32], index: 6, kind: input, shape index: {}]
  %s7 = inlined_call_operand.vmem [shape: f32[1,32], index: 7, kind: input, shape index: {}]
  %s8 = inlined_call_operand.vmem [shape: bf16[32,64], index: 8, kind: input, shape index: {}]
  %s9 = inlined_call_operand.vmem [shape: f32[1,64], index: 9, kind: input, shape index: {}]
  %s10 = inlined_call_operand.vmem [shape: bf16[64,32], index: 10, kind: input, shape index: {}]
  %s11 = inlined_call_operand.vmem [shape: f32[1,32], index: 11, kind: input, shape index: {}]
  %s12 = inlined_call_operand.vmem [shape: f32[2,64,32], index: 12, kind: output, shape index: {}]
  %s13 = sld [smem:[#allocation0]]
  $region129: #{tpu_custom_call.1} parent=0
    _
  %s15 = ssub.s32 1, %s13
  %s16 = scalar_select 0, %s15, %s13
  $region1: #{tpu_custom_call.1} parent=0
    #allocation2 [shape = 'u8[32768]{0}', space=vmem, size = 0x8000, scoped, tag = 'input window, operand 1']
    loop: start=0, step=1, limit=10
    $region2: #{tpu_custom_call.1} parent=1 // loop_pre_header
      _
    $region3: #{tpu_custom_call.1} parent=1 // loop_header
      %s18 = sphi 0, %s22
      %p19 = scmp.ge.s32.totalorder %s18, 10
      %s25 = sphi 0, %s37
      %s26 = sphi 0, %s33
      %s27 = sphi 0, %s25
      %s28 = sphi 0, %s26
      %s29 = sphi 0, %s27
      %s30 = sphi 0, %s28
      %s42 = sphi 0, %s44
      %s45 = sphi 0, %s42
      %s46 = sphi 0, %s45
      %s62 = sphi 0, %s46
      %s70 = sphi 0, %s72
      %s73 = sphi 0, %s70
      %s74 = sphi 0, %s73
      %s90 = sphi 0, %s74
      %s96 = sphi 0, %s98
      %s99 = sphi 0, %s96
      %s100 = sphi 0, %s99
      %s116 = sphi 0, %s100
      %s122 = sphi 0, %s124
      %s125 = sphi 0, %s122
      %s126 = sphi 0, %s125
      %s142 = sphi 0, %s126
      %s146 = sphi 0, %s146
      %s148 = sphi 0, %s146
      %s149 = sphi 0, %s148
      %s163 = sphi 0, %s149
      %s167 = sphi 0, %s167
      %s169 = sphi 0, %s167
      %s170 = sphi 0, %s169
      %s184 = sphi 0, %s170
      %s188 = sphi 0, %s188
      %s190 = sphi 0, %s188
      %s191 = sphi 0, %s190
      %s205 = sphi 0, %s191
      %s209 = sphi 0, %s209
      %s211 = sphi 0, %s209
      %s212 = sphi 0, %s211
      %s226 = sphi 0, %s212
      %s230 = sphi 0, %s230
      %s232 = sphi 0, %s230
      %s233 = sphi 0, %s232
      %s247 = sphi 0, %s233
      %s251 = sphi 0, %s251
      %s253 = sphi 0, %s251
      %s254 = sphi 0, %s253
      %s268 = sphi 0, %s254
      %s272 = sphi 0, %s272
      %s274 = sphi 0, %s272
      %s275 = sphi 0, %s274
      %s289 = sphi 0, %s275
      %s293 = sphi 0, %s293
      %s295 = sphi 0, %s293
      %s296 = sphi 0, %s295
      %s310 = sphi 0, %s296
      %s318 = sphi 0, %s320
      %s321 = sphi 0, %s318
      %s322 = sphi 0, %s321
      %s338 = sphi 0, %s322
    $region4: #{tpu_custom_call.1} parent=1 // loop_header_branch
      %21 = sbr.rel (%p19) target = $region8
    $region5: #{tpu_custom_call.1} parent=1 // loop_body
      %s23 = ssub.s32 %s18, 1
      %s24 = ssub.s32 %s18, 2
      %s31 = sadd.s32 1, %s26
      %p32 = scmp.ge.s32.totalorder %s31, 4
      %s33 = scalar_select %p32, 0, %s31
      %s34 = sadd.s32 1, %s25
      %s35 = scalar_select %p32, %s34, %s25
      %p36 = scmp.ge.s32.totalorder %s35, 2
      %s37 = scalar_select %p36, 0, %s35
      %s38 = ssub.s32 %s25, %s37
      %s39 = ssub.s32 %s26, %s33
      %s40 = sor.u32 %s38, %s39
      %p41 = scmp.eq.s32.totalorder %s40, 0
      %s43 = sadd.s32 %s42, 1
      %s44 = scalar_select %p41, %s42, %s43
      %p47 = pneg %p41
      %p48 = scmp.eq.s32.totalorder %s18, 7
      %p49 = por %p47, %p48
      %p50 = scmp.ne.s32.totalorder %s42, %s45
      %p51 = scmp.eq.s32.totalorder %s18, 0
      %p52 = por %p50, %p51
      %p53 = scmp.ne.s32.totalorder %s42, %s45
      %p54 = scmp.eq.s32.totalorder %s23, 7
      %p55 = por %p53, %p54
      %p56 = scmp.ne.s32.totalorder %s45, %s46
      %p57 = scmp.eq.s32.totalorder %s23, 0
      %p58 = por %p56, %p57
      %p59 = scmp.ne.s32.totalorder %s45, %s46
      %p60 = scmp.eq.s32.totalorder %s24, 7
      %p61 = por %p59, %p60
      %p63 = scmp.ne.s32.totalorder %s46, %s62
      %p64 = scmp.eq.s32.totalorder %s24, 0
      %p65 = por %p63, %p64
      %s66 = ssub.s32 %s25, %s37
      %s67 = ssub.s32 %s26, %s33
      %s68 = sor.u32 %s66, %s67
      %p69 = scmp.eq.s32.totalorder %s68, 0
      %s71 = sadd.s32 %s70, 1
      %s72 = scalar_select %p69, %s70, %s71
      %p75 = pneg %p69
      %p76 = scmp.eq.s32.totalorder %s18, 7
      %p77 = por %p75, %p76
      %p78 = scmp.ne.s32.totalorder %s70, %s73
      %p79 = scmp.eq.s32.totalorder %s18, 0
      %p80 = por %p78, %p79
      %p81 = scmp.ne.s32.totalorder %s70, %s73
      %p82 = scmp.eq.s32.totalorder %s23, 7
      %p83 = por %p81, %p82
      %p84 = scmp.ne.s32.totalorder %s73, %s74
      %p85 = scmp.eq.s32.totalorder %s23, 0
      %p86 = por %p84, %p85
      %p87 = scmp.ne.s32.totalorder %s73, %s74
      %p88 = scmp.eq.s32.totalorder %s24, 7
      %p89 = por %p87, %p88
      %p91 = scmp.ne.s32.totalorder %s74, %s90
      %p92 = scmp.eq.s32.totalorder %s24, 0
      %p93 = por %p91, %p92
      %s94 = ssub.s32 %s25, %s37
      %p95 = scmp.eq.s32.totalorder %s94, 0
      %s97 = sadd.s32 %s96, 1
      %s98 = scalar_select %p95, %s96, %s97
      %p101 = pneg %p95
      %p102 = scmp.eq.s32.totalorder %s18, 7
      %p103 = por %p101, %p102
      %p104 = scmp.ne.s32.totalorder %s96, %s99
      %p105 = scmp.eq.s32.totalorder %s18, 0
      %p106 = por %p104, %p105
      %p107 = scmp.ne.s32.totalorder %s96, %s99
      %p108 = scmp.eq.s32.totalorder %s23, 7
      %p109 = por %p107, %p108
      %p110 = scmp.ne.s32.totalorder %s99, %s100
      %p111 = scmp.eq.s32.totalorder %s23, 0
      %p112 = por %p110, %p111
      %p113 = scmp.ne.s32.totalorder %s99, %s100
      %p114 = scmp.eq.s32.totalorder %s24, 7
      %p115 = por %p113, %p114
      %p117 = scmp.ne.s32.totalorder %s100, %s116
      %p118 = scmp.eq.s32.totalorder %s24, 0
      %p119 = por %p117, %p118
      %s120 = ssub.s32 %s25, %s37
      %p121 = scmp.eq.s32.totalorder %s120, 0
      %s123 = sadd.s32 %s122, 1
      %s124 = scalar_select %p121, %s122, %s123
      %p127 = pneg %p121
      %p128 = scmp.eq.s32.totalorder %s18, 7
      %p129 = por %p127, %p128
      %p130 = scmp.ne.s32.totalorder %s122, %s125
      %p131 = scmp.eq.s32.totalorder %s18, 0
      %p132 = por %p130, %p131
      %p133 = scmp.ne.s32.totalorder %s122, %s125
      %p134 = scmp.eq.s32.totalorder %s23, 7
      %p135 = por %p133, %p134
      %p136 = scmp.ne.s32.totalorder %s125, %s126
      %p137 = scmp.eq.s32.totalorder %s23, 0
      %p138 = por %p136, %p137
      %p139 = scmp.ne.s32.totalorder %s125, %s126
      %p140 = scmp.eq.s32.totalorder %s24, 7
      %p141 = por %p139, %p140
      %p143 = scmp.ne.s32.totalorder %s126, %s142
      %p144 = scmp.eq.s32.totalorder %s24, 0
      %p145 = por %p143, %p144
      %s147 = sadd.s32 %s146, 1
      %p150 = scmp.eq.s32.totalorder %s18, 7
      %p151 = scmp.ne.s32.totalorder %s146, %s148
      %p152 = scmp.eq.s32.totalorder %s18, 0
      %p153 = por %p151, %p152
      %p154 = scmp.ne.s32.totalorder %s146, %s148
      %p155 = scmp.eq.s32.totalorder %s23, 7
      %p156 = por %p154, %p155
      %p157 = scmp.ne.s32.totalorder %s148, %s149
      %p158 = scmp.eq.s32.totalorder %s23, 0
      %p159 = por %p157, %p158
      %p160 = scmp.ne.s32.totalorder %s148, %s149
      %p161 = scmp.eq.s32.totalorder %s24, 7
      %p162 = por %p160, %p161
      %p164 = scmp.ne.s32.totalorder %s149, %s163
      %p165 = scmp.eq.s32.totalorder %s24, 0
      %p166 = por %p164, %p165
      %s168 = sadd.s32 %s167, 1
      %p171 = scmp.eq.s32.totalorder %s18, 7
      %p172 = scmp.ne.s32.totalorder %s167, %s169
      %p173 = scmp.eq.s32.totalorder %s18, 0
      %p174 = por %p172, %p173
      %p175 = scmp.ne.s32.totalorder %s167, %s169
      %p176 = scmp.eq.s32.totalorder %s23, 7
      %p177 = por %p175, %p176
      %p178 = scmp.ne.s32.totalorder %s169, %s170
      %p179 = scmp.eq.s32.totalorder %s23, 0
      %p180 = por %p178, %p179
      %p181 = scmp.ne.s32.totalorder %s169, %s170
      %p182 = scmp.eq.s32.totalorder %s24, 7
      %p183 = por %p181, %p182
      %p185 = scmp.ne.s32.totalorder %s170, %s184
      %p186 = scmp.eq.s32.totalorder %s24, 0
      %p187 = por %p185, %p186
      %s189 = sadd.s32 %s188, 1
      %p192 = scmp.eq.s32.totalorder %s18, 7
      %p193 = scmp.ne.s32.totalorder %s188, %s190
      %p194 = scmp.eq.s32.totalorder %s18, 0
      %p195 = por %p193, %p194
      %p196 = scmp.ne.s32.totalorder %s188, %s190
      %p197 = scmp.eq.s32.totalorder %s23, 7
      %p198 = por %p196, %p197
      %p199 = scmp.ne.s32.totalorder %s190, %s191
      %p200 = scmp.eq.s32.totalorder %s23, 0
      %p201 = por %p199, %p200
      %p202 = scmp.ne.s32.totalorder %s190, %s191
      %p203 = scmp.eq.s32.totalorder %s24, 7
      %p204 = por %p202, %p203
      %p206 = scmp.ne.s32.totalorder %s191, %s205
      %p207 = scmp.eq.s32.totalorder %s24, 0
      %p208 = por %p206, %p207
      %s210 = sadd.s32 %s209, 1
      %p213 = scmp.eq.s32.totalorder %s18, 7
      %p214 = scmp.ne.s32.totalorder %s209, %s211
      %p215 = scmp.eq.s32.totalorder %s18, 0
      %p216 = por %p214, %p215
      %p217 = scmp.ne.s32.totalorder %s209, %s211
      %p218 = scmp.eq.s32.totalorder %s23, 7
      %p219 = por %p217, %p218
      %p220 = scmp.ne.s32.totalorder %s211, %s212
      %p221 = scmp.eq.s32.totalorder %s23, 0
      %p222 = por %p220, %p221
      %p223 = scmp.ne.s32.totalorder %s211, %s212
      %p224 = scmp.eq.s32.totalorder %s24, 7
      %p225 = por %p223, %p224
      %p227 = scmp.ne.s32.totalorder %s212, %s226
      %p228 = scmp.eq.s32.totalorder %s24, 0
      %p229 = por %p227, %p228
      %s231 = sadd.s32 %s230, 1
      %p234 = scmp.eq.s32.totalorder %s18, 7
      %p235 = scmp.ne.s32.totalorder %s230, %s232
      %p236 = scmp.eq.s32.totalorder %s18, 0
      %p237 = por %p235, %p236
      %p238 = scmp.ne.s32.totalorder %s230, %s232
      %p239 = scmp.eq.s32.totalorder %s23, 7
      %p240 = por %p238, %p239
      %p241 = scmp.ne.s32.totalorder %s232, %s233
      %p242 = scmp.eq.s32.totalorder %s23, 0
      %p243 = por %p241, %p242
      %p244 = scmp.ne.s32.totalorder %s232, %s233
      %p245 = scmp.eq.s32.totalorder %s24, 7
      %p246 = por %p244, %p245
      %p248 = scmp.ne.s32.totalorder %s233, %s247
      %p249 = scmp.eq.s32.totalorder %s24, 0
      %p250 = por %p248, %p249
      %s252 = sadd.s32 %s251, 1
      %p255 = scmp.eq.s32.totalorder %s18, 7
      %p256 = scmp.ne.s32.totalorder %s251, %s253
      %p257 = scmp.eq.s32.totalorder %s18, 0
      %p258 = por %p256, %p257
      %p259 = scmp.ne.s32.totalorder %s251, %s253
      %p260 = scmp.eq.s32.totalorder %s23, 7
      %p261 = por %p259, %p260
      %p262 = scmp.ne.s32.totalorder %s253, %s254
      %p263 = scmp.eq.s32.totalorder %s23, 0
      %p264 = por %p262, %p263
      %p265 = scmp.ne.s32.totalorder %s253, %s254
      %p266 = scmp.eq.s32.totalorder %s24, 7
      %p267 = por %p265, %p266
      %p269 = scmp.ne.s32.totalorder %s254, %s268
      %p270 = scmp.eq.s32.totalorder %s24, 0
      %p271 = por %p269, %p270
      %s273 = sadd.s32 %s272, 1
      %p276 = scmp.eq.s32.totalorder %s18, 7
      %p277 = scmp.ne.s32.totalorder %s272, %s274
      %p278 = scmp.eq.s32.totalorder %s18, 0
      %p279 = por %p277, %p278
      %p280 = scmp.ne.s32.totalorder %s272, %s274
      %p281 = scmp.eq.s32.totalorder %s23, 7
      %p282 = por %p280, %p281
      %p283 = scmp.ne.s32.totalorder %s274, %s275
      %p284 = scmp.eq.s32.totalorder %s23, 0
      %p285 = por %p283, %p284
      %p286 = scmp.ne.s32.totalorder %s274, %s275
      %p287 = scmp.eq.s32.totalorder %s24, 7
      %p288 = por %p286, %p287
      %p290 = scmp.ne.s32.totalorder %s275, %s289
      %p291 = scmp.eq.s32.totalorder %s24, 0
      %p292 = por %p290, %p291
      %s294 = sadd.s32 %s293, 1
      %p297 = scmp.eq.s32.totalorder %s18, 7
      %p298 = scmp.ne.s32.totalorder %s293, %s295
      %p299 = scmp.eq.s32.totalorder %s18, 0
      %p300 = por %p298, %p299
      %p301 = scmp.ne.s32.totalorder %s293, %s295
      %p302 = scmp.eq.s32.totalorder %s23, 7
      %p303 = por %p301, %p302
      %p304 = scmp.ne.s32.totalorder %s295, %s296
      %p305 = scmp.eq.s32.totalorder %s23, 0
      %p306 = por %p304, %p305
      %p307 = scmp.ne.s32.totalorder %s295, %s296
      %p308 = scmp.eq.s32.totalorder %s24, 7
      %p309 = por %p307, %p308
      %p311 = scmp.ne.s32.totalorder %s296, %s310
      %p312 = scmp.eq.s32.totalorder %s24, 0
      %p313 = por %p311, %p312
      %s314 = ssub.s32 %s25, %s37
      %s315 = ssub.s32 %s26, %s33
      %s316 = sor.u32 %s314, %s315
      %p317 = scmp.eq.s32.totalorder %s316, 0
      %s319 = sadd.s32 %s318, 1
      %s320 = scalar_select %p317, %s318, %s319
      %p323 = pneg %p317
      %p324 = scmp.eq.s32.totalorder %s18, 7
      %p325 = por %p323, %p324
      %p326 = scmp.ne.s32.totalorder %s318, %s321
      %p327 = scmp.eq.s32.totalorder %s18, 0
      %p328 = por %p326, %p327
      %p329 = scmp.ne.s32.totalorder %s318, %s321
      %p330 = scmp.eq.s32.totalorder %s23, 7
      %p331 = por %p329, %p330
      %p332 = scmp.ne.s32.totalorder %s321, %s322
      %p333 = scmp.eq.s32.totalorder %s23, 0
      %p334 = por %p332, %p333
      %p335 = scmp.ne.s32.totalorder %s321, %s322
      %p336 = scmp.eq.s32.totalorder %s24, 7
      %p337 = por %p335, %p336
      %p339 = scmp.ne.s32.totalorder %s322, %s338
      %p340 = scmp.eq.s32.totalorder %s24, 0
      %p341 = por %p339, %p340
      %p342 = scmp.le.s32.totalorder 1, %s18
      %p343 = scmp.lt.s32.totalorder %s18, 9
      %p344 = pnand %p342, %p343
      %p345 = pneg %p344
      // Predicated region
      $region9: #{tpu_custom_call.1} parent=5 // pred_check
        _
      $region10: #{tpu_custom_call.1} parent=5 // pred_check_branch
        %347 = sbr.rel (%p344) target = $region12
      $region11: #{tpu_custom_call.1} parent=5 // pred_region
        %s348 = ssub.s32 %s18, 1
        // Predicated region
        $region13: #{tpu_custom_call.1} parent=11 // pred_check
          %p349 = pneg %p159
        $region14: #{tpu_custom_call.1} parent=11 // pred_check_branch
          %351 = sbr.rel (%p349) target = $region16
        $region15: #{tpu_custom_call.1} parent=11 // pred_region
          _
        $region16: #{tpu_custom_call.1} parent=11 // pred_fallthru
          _
        // Predicated region
        $region17: #{tpu_custom_call.1} parent=11 // pred_check
          %p352 = pneg %p180
        $region18: #{tpu_custom_call.1} parent=11 // pred_check_branch
          %354 = sbr.rel (%p352) target = $region20
        $region19: #{tpu_custom_call.1} parent=11 // pred_region
          _
        $region20: #{tpu_custom_call.1} parent=11 // pred_fallthru
          _
        // Predicated region
        $region21: #{tpu_custom_call.1} parent=11 // pred_check
          %p355 = pneg %p201
        $region22: #{tpu_custom_call.1} parent=11 // pred_check_branch
          %357 = sbr.rel (%p355) target = $region24
        $region23: #{tpu_custom_call.1} parent=11 // pred_region
          _
        $region24: #{tpu_custom_call.1} parent=11 // pred_fallthru
          _
        // Predicated region
        $region25: #{tpu_custom_call.1} parent=11 // pred_check
          %p358 = pneg %p222
        $region26: #{tpu_custom_call.1} parent=11 // pred_check_branch
          %360 = sbr.rel (%p358) target = $region28
        $region27: #{tpu_custom_call.1} parent=11 // pred_region
          _
        $region28: #{tpu_custom_call.1} parent=11 // pred_fallthru
          _
        // Predicated region
        $region29: #{tpu_custom_call.1} parent=11 // pred_check
          %p361 = pneg %p243
        $region30: #{tpu_custom_call.1} parent=11 // pred_check_branch
          %363 = sbr.rel (%p361) target = $region32
        $region31: #{tpu_custom_call.1} parent=11 // pred_region
          _
        $region32: #{tpu_custom_call.1} parent=11 // pred_fallthru
          _
        // Predicated region
        $region33: #{tpu_custom_call.1} parent=11 // pred_check
          %p364 = pneg %p264
        $region34: #{tpu_custom_call.1} parent=11 // pred_check_branch
          %366 = sbr.rel (%p364) target = $region36
        $region35: #{tpu_custom_call.1} parent=11 // pred_region
          _
        $region36: #{tpu_custom_call.1} parent=11 // pred_fallthru
          _
        // Predicated region
        $region37: #{tpu_custom_call.1} parent=11 // pred_check
          %p367 = pneg %p285
        $region38: #{tpu_custom_call.1} parent=11 // pred_check_branch
          %369 = sbr.rel (%p367) target = $region40
        $region39: #{tpu_custom_call.1} parent=11 // pred_region
          _
        $region40: #{tpu_custom_call.1} parent=11 // pred_fallthru
          _
        // Predicated region
        $region41: #{tpu_custom_call.1} parent=11 // pred_check
          %p370 = pneg %p306
        $region42: #{tpu_custom_call.1} parent=11 // pred_check_branch
          %372 = sbr.rel (%p370) target = $region44
        $region43: #{tpu_custom_call.1} parent=11 // pred_region
          _
        $region44: #{tpu_custom_call.1} parent=11 // pred_fallthru
          _
      $region12: #{tpu_custom_call.1} parent=5 // pred_fallthru
        _
      %p373 = scmp.lt.s32.totalorder %s18, 8
      // Predicated region
      $region45: #{tpu_custom_call.1} parent=5 // pred_check
        %p374 = pneg %p373
      $region46: #{tpu_custom_call.1} parent=5 // pred_check_branch
        %376 = sbr.rel (%p374) target = $region48
      $region47: #{tpu_custom_call.1} parent=5 // pred_region
        // Predicated region
        $region49: #{tpu_custom_call.1} parent=47 // pred_check
          %p377 = pneg %p52
        $region50: #{tpu_custom_call.1} parent=47 // pred_check_branch
          %379 = sbr.rel (%p377) target = $region52
        $region51: #{tpu_custom_call.1} parent=47 // pred_region
          %s380 = smul.u32 2, %s26
          %p381 = scmp.lt.s32.totalorder %s25, 1
          %s382 = scalar_select %p381, %s25, 1
          %p383 = scmp.lt.s32.totalorder %s380, 7
          %s384 = scalar_select %p383, %s380, 7
          %s385 = smul.addr %s382, 8
          %s386 = sadd.s32 %s384, %s385
          %s387 = smul.addr %s386, 8
          %s388 = scalar_lea.vmem %s0, %s387
          %s389 = smul.u32 2, %s26
        $region52: #{tpu_custom_call.1} parent=47 // pred_fallthru
          _
        // Predicated region
        $region53: #{tpu_custom_call.1} parent=47 // pred_check
          %p390 = pneg %p80
        $region54: #{tpu_custom_call.1} parent=47 // pred_check_branch
          %392 = sbr.rel (%p390) target = $region56
        $region55: #{tpu_custom_call.1} parent=47 // pred_region
          %s393 = sand.u32 %s70, 1
          %s394 = sand.u32 %s70, 1
          %s395 = smul.addr %s394, 32
          %s396 = scalar_lea.vmem [#allocation2], %s395
          %s397 = smul.u32 2, %s26
          %s398 = smul.addr %s25, 32
          %s399 = sadd.s32 %s397, %s398
          %s400 = smul.addr %s399, 4
          %s401 = scalar_lea.vmem %s1, %s400
          // Predicated region
          $region57: #{tpu_custom_call.1} parent=55 // pred_check
            _
          $region58: #{tpu_custom_call.1} parent=55 // pred_check_branch
            %403 = sbr.rel (0) target = $region60
          $region59: #{tpu_custom_call.1} parent=55 // pred_region
            // Predicated region
            $region61: #{tpu_custom_call.1} parent=59 // pred_check
              _
            $region62: #{tpu_custom_call.1} parent=59 // pred_check_branch
              %405 = sbr.rel target = $region64
            $region63: #{tpu_custom_call.1} parent=59 // pred_region
              // Predicated region
              $region76: #{tpu_custom_call.1} parent=63 // pred_check
                _
              $region77: #{tpu_custom_call.1} parent=63 // pred_check_branch
                %435 = sbr.rel (0) target = $region79
              $region78: #{tpu_custom_call.1} parent=63 // pred_region
                loop: start=0, step=1, limit=1
                $region80: #{tpu_custom_call.1} parent=78 // loop_pre_header
                  _
                $region81: #{tpu_custom_call.1} parent=78 // loop_header
                  %s437 = sphi 0, %s441
                  %p438 = scmp.ge.s32.totalorder %s437, 1
                  %s442 = sphi %s401, %s401
                  %s443 = sphi %s396, %s396
                $region82: #{tpu_custom_call.1} parent=78 // loop_header_branch
                  %440 = sbr.rel (%p438) target = $region86
                $region83: #{tpu_custom_call.1} parent=78 // loop_body
                  _
                $region84: #{tpu_custom_call.1} parent=78 // loop_footer
                  %s441 = sadd.s32 1, %s437
                $region85: #{tpu_custom_call.1} parent=78 // loop_footer_branch
                  %436 = sbr.rel target = $region81
                $region86: #{tpu_custom_call.1} parent=78 // loop_exit
                  _
                %s445 = ssub.s32 16, 1
                loop: start=0, step=1, limit=1
                $region87: #{tpu_custom_call.1} parent=78 // loop_pre_header
                  _
                $region88: #{tpu_custom_call.1} parent=78 // loop_header
                  %s447 = sphi 0, %s451
                  %p448 = scmp.ge.s32.totalorder %s447, 1
                  %s452 = sphi %s401, %s401
                  %s453 = sphi %s396, %s396
                $region89: #{tpu_custom_call.1} parent=78 // loop_header_branch
                  %450 = sbr.rel (%p448) target = $region93
                $region90: #{tpu_custom_call.1} parent=78 // loop_body
                  %v454 = vld [vmem:[%s452] sm:%s445]
                  %455 = vst [vmem:[%s453] sm:%s445] %v454
                  %v456 = vld [vmem:[%s452 + $0x4] sm:%s445]
                  %457 = vst [vmem:[%s453 + $0x4] sm:%s445] %v456
                  %v458 = vld [vmem:[%s452 + $0x20] sm:%s445]
                  %459 = vst [vmem:[%s453 + $0x8] sm:%s445] %v458
                  %v460 = vld [vmem:[%s452 + $0x24] sm:%s445]
                  %461 = vst [vmem:[%s453 + $0xc] sm:%s445] %v460
                  %v462 = vld [vmem:[%s452 + $0x40] sm:%s445]
                  %463 = vst [vmem:[%s453 + $0x10] sm:%s445] %v462
                  %v464 = vld [vmem:[%s452 + $0x44] sm:%s445]
                  %465 = vst [vmem:[%s453 + $0x14] sm:%s445] %v464
                  %v466 = vld [vmem:[%s452 + $0x60] sm:%s445]
                  %467 = vst [vmem:[%s453 + $0x18] sm:%s445] %v466
                  %v468 = vld [vmem:[%s452 + $0x64] sm:%s445]
                  %469 = vst [vmem:[%s453 + $0x1c] sm:%s445] %v468
                $region91: #{tpu_custom_call.1} parent=78 // loop_footer
                  %s451 = sadd.s32 1, %s447
                $region92: #{tpu_custom_call.1} parent=78 // loop_footer_branch
                  %446 = sbr.rel target = $region88
                $region93: #{tpu_custom_call.1} parent=78 // loop_exit
                  _
              $region79: #{tpu_custom_call.1} parent=63 // pred_fallthru
                _
            $region64: #{tpu_custom_call.1} parent=59 // pred_fallthru
              _
            // Predicated region
            $region65: #{tpu_custom_call.1} parent=59 // pred_check
              _
            $region66: #{tpu_custom_call.1} parent=59 // pred_check_branch
              %407 = sbr.rel (0) target = $region68
            $region67: #{tpu_custom_call.1} parent=59 // pred_region
              %s409 = ssub.s32 16, 1
              loop: start=0, step=1, limit=1
              $region69: #{tpu_custom_call.1} parent=67 // loop_pre_header
                _
              $region70: #{tpu_custom_call.1} parent=67 // loop_header
                %s411 = sphi 0, %s415
                %p412 = scmp.ge.s32.totalorder %s411, 1
                %s416 = sphi %s401, %s401
                %s417 = sphi %s396, %s396
              $region71: #{tpu_custom_call.1} parent=67 // loop_header_branch
                %414 = sbr.rel (%p412) target = $region75
              $region72: #{tpu_custom_call.1} parent=67 // loop_body
                %v418 = vld [vmem:[%s416] sm:%s409]
                %419 = vst [vmem:[%s417] sm:%s409] %v418
                %v420 = vld [vmem:[%s416 + $0x4] sm:%s409]
                %421 = vst [vmem:[%s417 + $0x4] sm:%s409] %v420
                %v422 = vld [vmem:[%s416 + $0x20] sm:%s409]
                %423 = vst [vmem:[%s417 + $0x8] sm:%s409] %v422
                %v424 = vld [vmem:[%s416 + $0x24] sm:%s409]
                %425 = vst [vmem:[%s417 + $0xc] sm:%s409] %v424
                %v426 = vld [vmem:[%s416 + $0x40] sm:%s409]
                %427 = vst [vmem:[%s417 + $0x10] sm:%s409] %v426
                %v428 = vld [vmem:[%s416 + $0x44] sm:%s409]
                %429 = vst [vmem:[%s417 + $0x14] sm:%s409] %v428
                %v430 = vld [vmem:[%s416 + $0x60] sm:%s409]
                %431 = vst [vmem:[%s417 + $0x18] sm:%s409] %v430
                %v432 = vld [vmem:[%s416 + $0x64] sm:%s409]
                %433 = vst [vmem:[%s417 + $0x1c] sm:%s409] %v432
              $region73: #{tpu_custom_call.1} parent=67 // loop_footer
                %s415 = sadd.s32 1, %s411
              $region74: #{tpu_custom_call.1} parent=67 // loop_footer_branch
                %410 = sbr.rel target = $region70
              $region75: #{tpu_custom_call.1} parent=67 // loop_exit
                _
            $region68: #{tpu_custom_call.1} parent=59 // pred_fallthru
              _
          $region60: #{tpu_custom_call.1} parent=55 // pred_fallthru
            _
          %470 = vnop
        $region56: #{tpu_custom_call.1} parent=47 // pred_fallthru
          _
        // Predicated region
        $region94: #{tpu_custom_call.1} parent=47 // pred_check
          %p471 = pneg %p106
        $region95: #{tpu_custom_call.1} parent=47 // pred_check_branch
          %473 = sbr.rel (%p471) target = $region97
        $region96: #{tpu_custom_call.1} parent=47 // pred_region
          %p474 = scmp.lt.s32.totalorder %s25, 1
          %s475 = scalar_select %p474, %s25, 1
          %s476 = smul.addr %s475, 32
          %s477 = smul.addr %s476, 4
          %s478 = scalar_lea.vmem %s2, %s477
        $region97: #{tpu_custom_call.1} parent=47 // pred_fallthru
          _
        // Predicated region
        $region98: #{tpu_custom_call.1} parent=47 // pred_check
          %p479 = pneg %p132
        $region99: #{tpu_custom_call.1} parent=47 // pred_check_branch
          %481 = sbr.rel (%p479) target = $region101
        $region100: #{tpu_custom_call.1} parent=47 // pred_region
          %p482 = scmp.lt.s32.totalorder %s25, 1
          %s483 = scalar_select %p482, %s25, 1
          %s484 = smul.addr %s483, 32
          %s485 = smul.addr %s484, 4
          %s486 = scalar_lea.vmem %s3, %s485
        $region101: #{tpu_custom_call.1} parent=47 // pred_fallthru
          _
      $region48: #{tpu_custom_call.1} parent=5 // pred_fallthru
        _
      %p487 = scmp.le.s32.totalorder 1, %s18
      %p488 = scmp.lt.s32.totalorder %s18, 9
      %p489 = pnand %p487, %p488
      %p490 = pneg %p489
      // Predicated region
      $region102: #{tpu_custom_call.1} parent=5 // pred_check
        _
      $region103: #{tpu_custom_call.1} parent=5 // pred_check_branch
        %492 = sbr.rel (%p489) target = $region105
      $region104: #{tpu_custom_call.1} parent=5 // pred_region
        %s493 = ssub.s32 %s18, 1
        %s494 = sand.u32 %s73, 1
        %s495 = sand.u32 %s73, 1
        %s496 = smul.addr %s495, 32
        %s497 = scalar_lea.vmem [#allocation2], %s496
        // Predicated region
        $region106: #{tpu_custom_call.1} parent=104 // pred_check
          %p498 = pneg %p86
        $region107: #{tpu_custom_call.1} parent=104 // pred_check_branch
          %500 = sbr.rel (%p498) target = $region109
        $region108: #{tpu_custom_call.1} parent=104 // pred_region
          _
        $region109: #{tpu_custom_call.1} parent=104 // pred_fallthru
          _
        %s501 = smul.u32 2, %s28
        %p502 = scmp.lt.s32.totalorder %s27, 1
        %s503 = scalar_select %p502, %s27, 1
        %p504 = scmp.lt.s32.totalorder %s501, 7
        %s505 = scalar_select %p504, %s501, 7
        %s506 = smul.addr %s503, 8
        %s507 = sadd.s32 %s505, %s506
        %s508 = smul.addr %s507, 8
        %s509 = scalar_lea.vmem %s0, %s508
        %p510 = pneg %p58
        %p511 = pneg %p55
        %s512 = sand.u32 %s73, 1
        %s513 = sand.u32 %s73, 1
        %s514 = smul.addr %s513, 32
        %s515 = scalar_lea.vmem [#allocation2], %s514
        %p516 = pneg %p86
        %p517 = pneg %p83
        %p518 = scmp.lt.s32.totalorder %s27, 1
        %s519 = scalar_select %p518, %s27, 1
        %s520 = smul.addr %s519, 32
        %s521 = smul.addr %s520, 4
        %s522 = scalar_lea.vmem %s2, %s521
        %p523 = pneg %p112
        %p524 = pneg %p109
        %p525 = scmp.lt.s32.totalorder %s27, 1
        %s526 = scalar_select %p525, %s27, 1
        %s527 = smul.addr %s526, 32
        %s528 = smul.addr %s527, 4
        %s529 = scalar_lea.vmem %s3, %s528
        %p530 = pneg %p138
        %p531 = pneg %p135
        %p532 = pneg %p159
        %p533 = pneg %p156
        %p534 = pneg %p180
        %p535 = pneg %p177
        %p536 = pneg %p201
        %p537 = pneg %p198
        %p538 = pneg %p222
        %p539 = pneg %p219
        %p540 = pneg %p243
        %p541 = pneg %p240
        %p542 = pneg %p264
        %p543 = pneg %p261
        %p544 = pneg %p285
        %p545 = pneg %p282
        %p546 = pneg %p306
        %p547 = pneg %p303
        %p548 = pneg %p334
        %p549 = pneg %p331
        %s550 = smul.u32 2, %s28
        %p551 = scmp.lt.s32.totalorder %s27, 1
        %s552 = scalar_select %p551, %s27, 1
        %p553 = scmp.lt.s32.totalorder %s550, 7
        %s554 = scalar_select %p553, %s550, 7
        %s555 = smul.addr %s552, 8
        %s556 = sadd.s32 %s554, %s555
        %s557 = smul.addr %s556, 8
        %s558 = scalar_lea.vmem %s12, %s557
        %s559 = smul.u32 2, %s28
        %p560 = scmp.lt.s32.totalorder %s27, 1
        %s561 = scalar_select %p560, %s27, 1
        %p562 = scmp.lt.s32.totalorder %s559, 7
        %s563 = scalar_select %p562, %s559, 7
        %s564 = smul.addr %s561, 8
        %s565 = sadd.s32 %s563, %s564
        %s566 = smul.addr %s565, 8
        %s567 = scalar_lea.vmem %s0, %s566
        %s568 = smul.u32 2, %s28
        %s569 = smul.u32 2, %s28
        %p570 = scmp.lt.s32.totalorder %s27, 1
        %s571 = scalar_select %p570, %s27, 1
        %s572 = smul.addr %s571, 32
        %s573 = smul.addr %s572, 4
        %s574 = scalar_lea.vmem %s2, %s573
        %p575 = scmp.lt.s32.totalorder %s27, 1
        %s576 = scalar_select %p575, %s27, 1
        %s577 = smul.addr %s576, 32
        %s578 = smul.addr %s577, 4
        %s579 = scalar_lea.vmem %s3, %s578
        %s580 = smul.u32 2, %s28
        %p581 = scmp.lt.s32.totalorder %s27, 1
        %s582 = scalar_select %p581, %s27, 1
        %p583 = scmp.lt.s32.totalorder %s580, 7
        %s584 = scalar_select %p583, %s580, 7
        %s585 = smul.addr %s582, 8
        %s586 = sadd.s32 %s584, %s585
        %s587 = smul.addr %s586, 8
        %s588 = scalar_lea.vmem %s12, %s587
        %s589 = smul.u32 2, %s28
        %v591 = vld [vmem:[%s567] sm:$0xff]
        %v592 = vld [vmem:[%s567 + $0x8] sm:$0xff]
        %v593 = vld [vmem:[%s497] sm:$0xf]
        %v594 = vld [vmem:[%s497 + $0x4] sm:$0xf]
        %v595 = vld [vmem:[%s497 + $0x8] sm:$0xf]
        %v596 = vld [vmem:[%s497 + $0xc] sm:$0xf]
        %v597 = vld [vmem:[%s497 + $0x10] sm:$0xf]
        %v598 = vld [vmem:[%s497 + $0x14] sm:$0xf]
        %v599 = vld [vmem:[%s497 + $0x18] sm:$0xf]
        %v600 = vld [vmem:[%s497 + $0x1c] sm:$0xf]
        %v601 = vlaneseq
        %v602 = vshrl.u32 %v601, 7
        %v603 = vadd.s32 %v602, 8
        %v604 = vlaneseq
        %v605 = vand.u32 %v604, 127
        %vm606 = vcmp.le.s32.totalorder %v605, %v602
        %vm607 = vcmp.le.s32.totalorder %v605, %v603
        // While loop
        $region110: #{tpu_custom_call.1} parent=104 // loop_pre_header
          _
        $region111: #{tpu_custom_call.1} parent=104 // loop_header
          %s609 = sphi 0, %s611
          %p610 = scmp.ge.s32.totalorder %s609, %s28
          %v614 = vphi -1e+30, %v807
          %v615 = vphi -1e+30, %v808
          %v616 = vphi -1e+30, %v809
          %v617 = vphi -1e+30, %v810
          %v618 = vphi -1e+30, %v811
          %v619 = vphi -1e+30, %v812
          %v620 = vphi -1e+30, %v813
          %v621 = vphi -1e+30, %v814
          %v622 = vphi 0.0, %v895
          %v623 = vphi 0.0, %v896
          %v624 = vphi 0.0, %v897
          %v625 = vphi 0.0, %v898
          %v626 = vphi 0.0, %v899
          %v627 = vphi 0.0, %v900
          %v628 = vphi 0.0, %v901
          %v629 = vphi 0.0, %v902
          %v630 = vphi 0.0, %v1031
          %v631 = vphi 0.0, %v1032
          %v632 = vphi 0.0, %v1033
          %v633 = vphi 0.0, %v1034
          %v634 = vphi 0.0, %v1035
          %v635 = vphi 0.0, %v1036
          %v636 = vphi 0.0, %v1037
          %v637 = vphi 0.0, %v1038
        $region112: #{tpu_custom_call.1} parent=104 // loop_header_branch
          %613 = sbr.rel (%p610) target = $region116
        $region113: #{tpu_custom_call.1} parent=104 // loop_body
          %s638 = smul.u32 %s609, 16
          %s639 = sshra.s32 %s638, 3
          %s640 = sand.u32 %s638, 7
          %s641 = smul.addr %s639, 4
          %s642 = scalar_lea.vmem %s574, %s641
          %v643 = vld [vmem:[%s642] sm:$0xf]
          %v644 = vld [vmem:[%s642 + $0x4] sm:$0xf]
          %v645 = vld [vmem:[%s642 + $0x20] sm:$0xf]
          %v646 = vld [vmem:[%s642 + $0x24] sm:$0xf]
          %v647 = vld [vmem:[%s642 + $0x40] sm:$0xf]
          %v648 = vld [vmem:[%s642 + $0x44] sm:$0xf]
          %v649 = vld [vmem:[%s642 + $0x60] sm:$0xf]
          %v650 = vld [vmem:[%s642 + $0x64] sm:$0xf]
          %s651 = smul.addr %s639, 4
          %s652 = scalar_lea.vmem %s579, %s651
          %v653 = vld [vmem:[%s652] sm:$0xf]
          %v654 = vld [vmem:[%s652 + $0x4] sm:$0xf]
          %v655 = vld [vmem:[%s652 + $0x20] sm:$0xf]
          %v656 = vld [vmem:[%s652 + $0x24] sm:$0xf]
          %v657 = vld [vmem:[%s652 + $0x40] sm:$0xf]
          %v658 = vld [vmem:[%s652 + $0x44] sm:$0xf]
          %v659 = vld [vmem:[%s652 + $0x60] sm:$0xf]
          %v660 = vld [vmem:[%s652 + $0x64] sm:$0xf]
          %v663 = vunpack.c.l.b16 %v593
          %v664 = vunpack.c.l.b16 %v594
          %v665 = vpack.c.b16 %v664, %v663
          %v668 = vunpack.c.l.b16 %v643
          %v669 = vunpack.c.l.b16 %v644
          %v670 = vpack.c.b16 %v669, %v668
          %vm671 = vcmask 64512
          %v673 = vsel %vm671, %v665, 0
          %v676 = vsel %vm671, %v670, 0
          %678 = vmatpush.bf16.xpose.msra.mxu0 0
          %679 = vmatpush.bf16.xpose.msra.mxu0 0
          %680 = vmatpush.bf16.xpose.msra.mxu0 0
          %681 = vmatpush.bf16.xpose.msra.mxu0 0
          %682 = vmatpush.bf16.xpose.msra.mxu0 0
          %683 = vmatpush.bf16.xpose.msra.mxu0 0
          %684 = vmatpush.bf16.xpose.msra.mxu0 0
          %685 = vmatpush.bf16.xpose.msra.mxu0 %v676
          %686 = vmatmul.bf16.gmra.mxu0 %v673
          %v687 = vpop.f32.mrf.mxu0
          %v688 = vadd.f32 0.0, %v687
          %v689 = vpop.f32.mrf.mxu0
          %v690 = vadd.f32 0.0, %v689
          %691 = vdwg.mxu0
          %v694 = vunpack.c.l.b16 %v595
          %v695 = vunpack.c.l.b16 %v596
          %v696 = vpack.c.b16 %v695, %v694
          %v699 = vunpack.c.l.b16 %v645
          %v700 = vunpack.c.l.b16 %v646
          %v701 = vpack.c.b16 %v700, %v699
          %v703 = vsel %vm671, %v696, 0
          %v706 = vsel %vm671, %v701, 0
          %708 = vmatpush.bf16.xpose.msra.mxu0 0
          %709 = vmatpush.bf16.xpose.msra.mxu0 0
          %710 = vmatpush.bf16.xpose.msra.mxu0 0
          %711 = vmatpush.bf16.xpose.msra.mxu0 0
          %712 = vmatpush.bf16.xpose.msra.mxu0 0
          %713 = vmatpush.bf16.xpose.msra.mxu0 0
          %714 = vmatpush.bf16.xpose.msra.mxu0 0
          %715 = vmatpush.bf16.xpose.msra.mxu0 %v706
          %716 = vmatmul.bf16.gmra.mxu0 %v703
          %v717 = vpop.f32.mrf.mxu0
          %v718 = vadd.f32 0.0, %v717
          %v719 = vpop.f32.mrf.mxu0
          %v720 = vadd.f32 0.0, %v719
          %721 = vdwg.mxu0
          %v724 = vunpack.c.l.b16 %v597
          %v725 = vunpack.c.l.b16 %v598
          %v726 = vpack.c.b16 %v725, %v724
          %v729 = vunpack.c.l.b16 %v647
          %v730 = vunpack.c.l.b16 %v648
          %v731 = vpack.c.b16 %v730, %v729
          %v733 = vsel %vm671, %v726, 0
          %v736 = vsel %vm671, %v731, 0
          %738 = vmatpush.bf16.xpose.msra.mxu0 0
          %739 = vmatpush.bf16.xpose.msra.mxu0 0
          %740 = vmatpush.bf16.xpose.msra.mxu0 0
          %741 = vmatpush.bf16.xpose.msra.mxu0 0
          %742 = vmatpush.bf16.xpose.msra.mxu0 0
          %743 = vmatpush.bf16.xpose.msra.mxu0 0
          %744 = vmatpush.bf16.xpose.msra.mxu0 0
          %745 = vmatpush.bf16.xpose.msra.mxu0 %v736
          %746 = vmatmul.bf16.gmra.mxu0 %v733
          %v747 = vpop.f32.mrf.mxu0
          %v748 = vadd.f32 0.0, %v747
          %v749 = vpop.f32.mrf.mxu0
          %v750 = vadd.f32 0.0, %v749
          %751 = vdwg.mxu0
          %v754 = vunpack.c.l.b16 %v599
          %v755 = vunpack.c.l.b16 %v600
          %v756 = vpack.c.b16 %v755, %v754
          %v759 = vunpack.c.l.b16 %v649
          %v760 = vunpack.c.l.b16 %v650
          %v761 = vpack.c.b16 %v760, %v759
          %v763 = vsel %vm671, %v756, 0
          %v766 = vsel %vm671, %v761, 0
          %768 = vmatpush.bf16.xpose.msra.mxu0 0
          %769 = vmatpush.bf16.xpose.msra.mxu0 0
          %770 = vmatpush.bf16.xpose.msra.mxu0 0
          %771 = vmatpush.bf16.xpose.msra.mxu0 0
          %772 = vmatpush.bf16.xpose.msra.mxu0 0
          %773 = vmatpush.bf16.xpose.msra.mxu0 0
          %774 = vmatpush.bf16.xpose.msra.mxu0 0
          %775 = vmatpush.bf16.xpose.msra.mxu0 %v766
          %776 = vmatmul.bf16.gmra.mxu0 %v763
          %v777 = vpop.f32.mrf.mxu0
          %v778 = vadd.f32 0.0, %v777
          %v779 = vpop.f32.mrf.mxu0
          %v780 = vadd.f32 0.0, %v779
          %781 = vdwg.mxu0
          %vm782 = vcmask 130048
          %v783 = vsel %vm782, %v688, -inf
          %784 = vmax.xlane.f32.xlu0 %v783
          %v785 = vpop.xlane.xlu0 %784
          %v786 = vsel %vm782, %v690, -inf
          %787 = vmax.xlane.f32.xlu0 %v786
          %v788 = vpop.xlane.xlu0 %787
          %v789 = vsel %vm782, %v718, -inf
          %790 = vmax.xlane.f32.xlu0 %v789
          %v791 = vpop.xlane.xlu0 %790
          %v792 = vsel %vm782, %v720, -inf
          %793 = vmax.xlane.f32.xlu0 %v792
          %v794 = vpop.xlane.xlu0 %793
          %v795 = vsel %vm782, %v748, -inf
          %796 = vmax.xlane.f32.xlu0 %v795
          %v797 = vpop.xlane.xlu0 %796
          %v798 = vsel %vm782, %v750, -inf
          %799 = vmax.xlane.f32.xlu0 %v798
          %v800 = vpop.xlane.xlu0 %799
          %v801 = vsel %vm782, %v778, -inf
          %802 = vmax.xlane.f32.xlu0 %v801
          %v803 = vpop.xlane.xlu0 %802
          %v804 = vsel %vm782, %v780, -inf
          %805 = vmax.xlane.f32.xlu0 %v804
          %v806 = vpop.xlane.xlu0 %805
          %v807 = vmax.f32 %v614, %v785
          %v808 = vmax.f32 %v615, %v788
          %v809 = vmax.f32 %v616, %v791
          %v810 = vmax.f32 %v617, %v794
          %v811 = vmax.f32 %v618, %v797
          %v812 = vmax.f32 %v619, %v800
          %v813 = vmax.f32 %v620, %v803
          %v814 = vmax.f32 %v621, %v806
          %v815 = vsub.f32 %v614, %v807
          %v816 = vsub.f32 %v615, %v808
          %v817 = vsub.f32 %v616, %v809
          %v818 = vsub.f32 %v617, %v810
          %v819 = vsub.f32 %v618, %v811
          %v820 = vsub.f32 %v619, %v812
          %v821 = vsub.f32 %v620, %v813
          %v822 = vsub.f32 %v621, %v814
          %v823 = vmul.f32 %v815, 1.442695
          %v824 = vpow.pop %v823
          %v825 = vmul.f32 %v816, 1.442695
          %v826 = vpow.pop %v825
          %v827 = vmul.f32 %v817, 1.442695
          %v828 = vpow.pop %v827
          %v829 = vmul.f32 %v818, 1.442695
          %v830 = vpow.pop %v829
          %v831 = vmul.f32 %v819, 1.442695
          %v832 = vpow.pop %v831
          %v833 = vmul.f32 %v820, 1.442695
          %v834 = vpow.pop %v833
          %v835 = vmul.f32 %v821, 1.442695
          %v836 = vpow.pop %v835
          %v837 = vmul.f32 %v822, 1.442695
          %v838 = vpow.pop %v837
          %v839 = vsub.f32 %v688, %v807
          %v840 = vsub.f32 %v690, %v808
          %v841 = vsub.f32 %v718, %v809
          %v842 = vsub.f32 %v720, %v810
          %v843 = vsub.f32 %v748, %v811
          %v844 = vsub.f32 %v750, %v812
          %v845 = vsub.f32 %v778, %v813
          %v846 = vsub.f32 %v780, %v814
          %v847 = vmul.f32 %v839, 1.442695
          %v848 = vpow.pop %v847
          %v849 = vmul.f32 %v840, 1.442695
          %v850 = vpow.pop %v849
          %v851 = vmul.f32 %v841, 1.442695
          %v852 = vpow.pop %v851
          %v853 = vmul.f32 %v842, 1.442695
          %v854 = vpow.pop %v853
          %v855 = vmul.f32 %v843, 1.442695
          %v856 = vpow.pop %v855
          %v857 = vmul.f32 %v844, 1.442695
          %v858 = vpow.pop %v857
          %v859 = vmul.f32 %v845, 1.442695
          %v860 = vpow.pop %v859
          %v861 = vmul.f32 %v846, 1.442695
          %v862 = vpow.pop %v861
          %v863 = vmul.f32 %v824, %v622
          %v864 = vmul.f32 %v826, %v623
          %v865 = vmul.f32 %v828, %v624
          %v866 = vmul.f32 %v830, %v625
          %v867 = vmul.f32 %v832, %v626
          %v868 = vmul.f32 %v834, %v627
          %v869 = vmul.f32 %v836, %v628
          %v870 = vmul.f32 %v838, %v629
          %v871 = vsel %vm782, %v848, 0.0
          %872 = vadd.xlane.f32.xlu0 %v871
          %v873 = vpop.xlane.xlu0 %872
          %v874 = vsel %vm782, %v850, 0.0
          %875 = vadd.xlane.f32.xlu0 %v874
          %v876 = vpop.xlane.xlu0 %875
          %v877 = vsel %vm782, %v852, 0.0
          %878 = vadd.xlane.f32.xlu0 %v877
          %v879 = vpop.xlane.xlu0 %878
          %v880 = vsel %vm782, %v854, 0.0
          %881 = vadd.xlane.f32.xlu0 %v880
          %v882 = vpop.xlane.xlu0 %881
          %v883 = vsel %vm782, %v856, 0.0
          %884 = vadd.xlane.f32.xlu0 %v883
          %v885 = vpop.xlane.xlu0 %884
          %v886 = vsel %vm782, %v858, 0.0
          %887 = vadd.xlane.f32.xlu0 %v886
          %v888 = vpop.xlane.xlu0 %887
          %v889 = vsel %vm782, %v860, 0.0
          %890 = vadd.xlane.f32.xlu0 %v889
          %v891 = vpop.xlane.xlu0 %890
          %v892 = vsel %vm782, %v862, 0.0
          %893 = vadd.xlane.f32.xlu0 %v892
          %v894 = vpop.xlane.xlu0 %893
          %v895 = vadd.f32 %v863, %v873
          %v896 = vadd.f32 %v864, %v876
          %v897 = vadd.f32 %v865, %v879
          %v898 = vadd.f32 %v866, %v882
          %v899 = vadd.f32 %v867, %v885
          %v900 = vadd.f32 %v868, %v888
          %v901 = vadd.f32 %v869, %v891
          %v902 = vadd.f32 %v870, %v894
          %v903 = vmul.f32 %v824, %v630
          %v904 = vmul.f32 %v826, %v631
          %v905 = vmul.f32 %v828, %v632
          %v906 = vmul.f32 %v830, %v633
          %v907 = vmul.f32 %v832, %v634
          %v908 = vmul.f32 %v834, %v635
          %v909 = vmul.f32 %v836, %v636
          %v910 = vmul.f32 %v838, %v637
          %v911 = vpack.c.bf16 %v848, %v848
          %v912 = vpack.c.bf16 %v850, %v850
          %v913 = vpack.c.bf16 %v852, %v852
          %v914 = vpack.c.bf16 %v854, %v854
          %v915 = vpack.c.bf16 %v856, %v856
          %v916 = vpack.c.bf16 %v858, %v858
          %v917 = vpack.c.bf16 %v860, %v860
          %v918 = vpack.c.bf16 %v862, %v862
          %v921 = vunpack.c.l.b16 %v911
          %v922 = vunpack.c.l.b16 %v912
          %v923 = vpack.c.b16 %v922, %v921
          %v926 = vunpack.c.l.b16 %v653
          %v927 = vunpack.c.l.b16 %v654
          %v928 = vpack.c.b16 %v927, %v926
          %v931 = vsel %vm782, %v923, 0
          %933 = vmatpush.bf16.msra.mxu0 0
          %934 = vmatpush.bf16.msra.mxu0 0
          %935 = vmatpush.bf16.msra.mxu0 0
          %936 = vmatpush.bf16.msra.mxu0 0
          %937 = vmatpush.bf16.msra.mxu0 0
          %938 = vmatpush.bf16.msra.mxu0 0
          %939 = vmatpush.bf16.msra.mxu0 0
          %940 = vmatpush.bf16.msra.mxu0 %v928
          %941 = vmatmul.bf16.gmra.mxu0 %v931
          %v942 = vpop.f32.mrf.mxu0
          %v943 = vadd.f32 0.0, %v942
          %v944 = vpop.f32.mrf.mxu0
          %v945 = vadd.f32 0.0, %v944
          %946 = vdwg.mxu0
          %v949 = vunpack.c.l.b16 %v913
          %v950 = vunpack.c.l.b16 %v914
          %v951 = vpack.c.b16 %v950, %v949
          %v954 = vunpack.c.l.b16 %v655
          %v955 = vunpack.c.l.b16 %v656
          %v956 = vpack.c.b16 %v955, %v954
          %v959 = vsel %vm782, %v951, 0
          %961 = vmatpush.bf16.msra.mxu0 0
          %962 = vmatpush.bf16.msra.mxu0 0
          %963 = vmatpush.bf16.msra.mxu0 0
          %964 = vmatpush.bf16.msra.mxu0 0
          %965 = vmatpush.bf16.msra.mxu0 0
          %966 = vmatpush.bf16.msra.mxu0 0
          %967 = vmatpush.bf16.msra.mxu0 0
          %968 = vmatpush.bf16.msra.mxu0 %v956
          %969 = vmatmul.bf16.gmra.mxu0 %v959
          %v970 = vpop.f32.mrf.mxu0
          %v971 = vadd.f32 0.0, %v970
          %v972 = vpop.f32.mrf.mxu0
          %v973 = vadd.f32 0.0, %v972
          %974 = vdwg.mxu0
          %v977 = vunpack.c.l.b16 %v915
          %v978 = vunpack.c.l.b16 %v916
          %v979 = vpack.c.b16 %v978, %v977
          %v982 = vunpack.c.l.b16 %v657
          %v983 = vunpack.c.l.b16 %v658
          %v984 = vpack.c.b16 %v983, %v982
          %v987 = vsel %vm782, %v979, 0
          %989 = vmatpush.bf16.msra.mxu0 0
          %990 = vmatpush.bf16.msra.mxu0 0
          %991 = vmatpush.bf16.msra.mxu0 0
          %992 = vmatpush.bf16.msra.mxu0 0
          %993 = vmatpush.bf16.msra.mxu0 0
          %994 = vmatpush.bf16.msra.mxu0 0
          %995 = vmatpush.bf16.msra.mxu0 0
          %996 = vmatpush.bf16.msra.mxu0 %v984
          %997 = vmatmul.bf16.gmra.mxu0 %v987
          %v998 = vpop.f32.mrf.mxu0
          %v999 = vadd.f32 0.0, %v998
          %v1000 = vpop.f32.mrf.mxu0
          %v1001 = vadd.f32 0.0, %v1000
          %1002 = vdwg.mxu0
          %v1005 = vunpack.c.l.b16 %v917
          %v1006 = vunpack.c.l.b16 %v918
          %v1007 = vpack.c.b16 %v1006, %v1005
          %v1010 = vunpack.c.l.b16 %v659
          %v1011 = vunpack.c.l.b16 %v660
          %v1012 = vpack.c.b16 %v1011, %v1010
          %v1015 = vsel %vm782, %v1007, 0
          %1017 = vmatpush.bf16.msra.mxu0 0
          %1018 = vmatpush.bf16.msra.mxu0 0
          %1019 = vmatpush.bf16.msra.mxu0 0
          %1020 = vmatpush.bf16.msra.mxu0 0
          %1021 = vmatpush.bf16.msra.mxu0 0
          %1022 = vmatpush.bf16.msra.mxu0 0
          %1023 = vmatpush.bf16.msra.mxu0 0
          %1024 = vmatpush.bf16.msra.mxu0 %v1012
          %1025 = vmatmul.bf16.gmra.mxu0 %v1015
          %v1026 = vpop.f32.mrf.mxu0
          %v1027 = vadd.f32 0.0, %v1026
          %v1028 = vpop.f32.mrf.mxu0
          %v1029 = vadd.f32 0.0, %v1028
          %1030 = vdwg.mxu0
          %v1031 = vadd.f32 %v903, %v943
          %v1032 = vadd.f32 %v904, %v945
          %v1033 = vadd.f32 %v905, %v971
          %v1034 = vadd.f32 %v906, %v973
          %v1035 = vadd.f32 %v907, %v999
          %v1036 = vadd.f32 %v908, %v1001
          %v1037 = vadd.f32 %v909, %v1027
          %v1038 = vadd.f32 %v910, %v1029
        $region114: #{tpu_custom_call.1} parent=104 // loop_footer
          %s611 = sadd.s32 %s609, 1
        $region115: #{tpu_custom_call.1} parent=104 // loop_footer_branch
          %608 = sbr.rel target = $region111
        $region116: #{tpu_custom_call.1} parent=104 // loop_exit
          _
        %s1039 = smul.u32 %s28, 16
        %s1040 = sshra.s32 %s1039, 3
        %s1041 = sand.u32 %s1039, 7
        %s1042 = smul.addr %s1040, 4
        %s1043 = scalar_lea.vmem %s574, %s1042
        %v1044 = vld [vmem:[%s1043] sm:$0xf]
        %v1045 = vld [vmem:[%s1043 + $0x4] sm:$0xf]
        %v1046 = vld [vmem:[%s1043 + $0x20] sm:$0xf]
        %v1047 = vld [vmem:[%s1043 + $0x24] sm:$0xf]
        %v1048 = vld [vmem:[%s1043 + $0x40] sm:$0xf]
        %v1049 = vld [vmem:[%s1043 + $0x44] sm:$0xf]
        %v1050 = vld [vmem:[%s1043 + $0x60] sm:$0xf]
        %v1051 = vld [vmem:[%s1043 + $0x64] sm:$0xf]
        %s1052 = smul.addr %s1040, 4
        %s1053 = scalar_lea.vmem %s579, %s1052
        %v1054 = vld [vmem:[%s1053] sm:$0xf]
        %v1055 = vld [vmem:[%s1053 + $0x4] sm:$0xf]
        %v1056 = vld [vmem:[%s1053 + $0x20] sm:$0xf]
        %v1057 = vld [vmem:[%s1053 + $0x24] sm:$0xf]
        %v1058 = vld [vmem:[%s1053 + $0x40] sm:$0xf]
        %v1059 = vld [vmem:[%s1053 + $0x44] sm:$0xf]
        %v1060 = vld [vmem:[%s1053 + $0x60] sm:$0xf]
        %v1061 = vld [vmem:[%s1053 + $0x64] sm:$0xf]
        %v1064 = vunpack.c.l.b16 %v593
        %v1065 = vunpack.c.l.b16 %v594
        %v1066 = vpack.c.b16 %v1065, %v1064
        %v1069 = vunpack.c.l.b16 %v1044
        %v1070 = vunpack.c.l.b16 %v1045
        %v1071 = vpack.c.b16 %v1070, %v1069
        %vm1072 = vcmask 64512
        %v1074 = vsel %vm1072, %v1066, 0
        %v1077 = vsel %vm1072, %v1071, 0
        %1079 = vmatpush.bf16.xpose.msra.mxu0 0
        %1080 = vmatpush.bf16.xpose.msra.mxu0 0
        %1081 = vmatpush.bf16.xpose.msra.mxu0 0
        %1082 = vmatpush.bf16.xpose.msra.mxu0 0
        %1083 = vmatpush.bf16.xpose.msra.mxu0 0
        %1084 = vmatpush.bf16.xpose.msra.mxu0 0
        %1085 = vmatpush.bf16.xpose.msra.mxu0 0
        %1086 = vmatpush.bf16.xpose.msra.mxu0 %v1077
        %1087 = vmatmul.bf16.gmra.mxu0 %v1074
        %v1088 = vpop.f32.mrf.mxu0
        %v1089 = vadd.f32 0.0, %v1088
        %v1090 = vpop.f32.mrf.mxu0
        %v1091 = vadd.f32 0.0, %v1090
        %1092 = vdwg.mxu0
        %v1095 = vunpack.c.l.b16 %v595
        %v1096 = vunpack.c.l.b16 %v596
        %v1097 = vpack.c.b16 %v1096, %v1095
        %v1100 = vunpack.c.l.b16 %v1046
        %v1101 = vunpack.c.l.b16 %v1047
        %v1102 = vpack.c.b16 %v1101, %v1100
        %v1104 = vsel %vm1072, %v1097, 0
        %v1107 = vsel %vm1072, %v1102, 0
        %1109 = vmatpush.bf16.xpose.msra.mxu0 0
        %1110 = vmatpush.bf16.xpose.msra.mxu0 0
        %1111 = vmatpush.bf16.xpose.msra.mxu0 0
        %1112 = vmatpush.bf16.xpose.msra.mxu0 0
        %1113 = vmatpush.bf16.xpose.msra.mxu0 0
        %1114 = vmatpush.bf16.xpose.msra.mxu0 0
        %1115 = vmatpush.bf16.xpose.msra.mxu0 0
        %1116 = vmatpush.bf16.xpose.msra.mxu0 %v1107
        %1117 = vmatmul.bf16.gmra.mxu0 %v1104
        %v1118 = vpop.f32.mrf.mxu0
        %v1119 = vadd.f32 0.0, %v1118
        %v1120 = vpop.f32.mrf.mxu0
        %v1121 = vadd.f32 0.0, %v1120
        %1122 = vdwg.mxu0
        %v1125 = vunpack.c.l.b16 %v597
        %v1126 = vunpack.c.l.b16 %v598
        %v1127 = vpack.c.b16 %v1126, %v1125
        %v1130 = vunpack.c.l.b16 %v1048
        %v1131 = vunpack.c.l.b16 %v1049
        %v1132 = vpack.c.b16 %v1131, %v1130
        %v1134 = vsel %vm1072, %v1127, 0
        %v1137 = vsel %vm1072, %v1132, 0
        %1139 = vmatpush.bf16.xpose.msra.mxu0 0
        %1140 = vmatpush.bf16.xpose.msra.mxu0 0
        %1141 = vmatpush.bf16.xpose.msra.mxu0 0
        %1142 = vmatpush.bf16.xpose.msra.mxu0 0
        %1143 = vmatpush.bf16.xpose.msra.mxu0 0
        %1144 = vmatpush.bf16.xpose.msra.mxu0 0
        %1145 = vmatpush.bf16.xpose.msra.mxu0 0
        %1146 = vmatpush.bf16.xpose.msra.mxu0 %v1137
        %1147 = vmatmul.bf16.gmra.mxu0 %v1134
        %v1148 = vpop.f32.mrf.mxu0
        %v1149 = vadd.f32 0.0, %v1148
        %v1150 = vpop.f32.mrf.mxu0
        %v1151 = vadd.f32 0.0, %v1150
        %1152 = vdwg.mxu0
        %v1155 = vunpack.c.l.b16 %v599
        %v1156 = vunpack.c.l.b16 %v600
        %v1157 = vpack.c.b16 %v1156, %v1155
        %v1160 = vunpack.c.l.b16 %v1050
        %v1161 = vunpack.c.l.b16 %v1051
        %v1162 = vpack.c.b16 %v1161, %v1160
        %v1164 = vsel %vm1072, %v1157, 0
        %v1167 = vsel %vm1072, %v1162, 0
        %1169 = vmatpush.bf16.xpose.msra.mxu0 0
        %1170 = vmatpush.bf16.xpose.msra.mxu0 0
        %1171 = vmatpush.bf16.xpose.msra.mxu0 0
        %1172 = vmatpush.bf16.xpose.msra.mxu0 0
        %1173 = vmatpush.bf16.xpose.msra.mxu0 0
        %1174 = vmatpush.bf16.xpose.msra.mxu0 0
        %1175 = vmatpush.bf16.xpose.msra.mxu0 0
        %1176 = vmatpush.bf16.xpose.msra.mxu0 %v1167
        %1177 = vmatmul.bf16.gmra.mxu0 %v1164
        %v1178 = vpop.f32.mrf.mxu0
        %v1179 = vadd.f32 0.0, %v1178
        %v1180 = vpop.f32.mrf.mxu0
        %v1181 = vadd.f32 0.0, %v1180
        %1182 = vdwg.mxu0
        %v1183 = vsel %vm606, 1, 0
        %v1184 = vsel %vm607, 1, 0
        %vm1185 = vcmp.eq.s32.totalorder %v1183, 1
        %vm1186 = vcmp.eq.s32.totalorder %v1184, 1
        %v1187 = vsel %vm1185, %v1089, -1e+30
        %v1188 = vsel %vm1186, %v1091, -1e+30
        %v1189 = vsel %vm1185, %v1119, -1e+30
        %v1190 = vsel %vm1186, %v1121, -1e+30
        %v1191 = vsel %vm1185, %v1149, -1e+30
        %v1192 = vsel %vm1186, %v1151, -1e+30
        %v1193 = vsel %vm1185, %v1179, -1e+30
        %v1194 = vsel %vm1186, %v1181, -1e+30
        %vm1195 = vcmask 130048
        %v1196 = vsel %vm1195, %v1187, -inf
        %1197 = vmax.xlane.f32.xlu0 %v1196
        %v1198 = vpop.xlane.xlu0 %1197
        %v1199 = vsel %vm1195, %v1188, -inf
        %1200 = vmax.xlane.f32.xlu0 %v1199
        %v1201 = vpop.xlane.xlu0 %1200
        %v1202 = vsel %vm1195, %v1189, -inf
        %1203 = vmax.xlane.f32.xlu0 %v1202
        %v1204 = vpop.xlane.xlu0 %1203
        %v1205 = vsel %vm1195, %v1190, -inf
        %1206 = vmax.xlane.f32.xlu0 %v1205
        %v1207 = vpop.xlane.xlu0 %1206
        %v1208 = vsel %vm1195, %v1191, -inf
        %1209 = vmax.xlane.f32.xlu0 %v1208
        %v1210 = vpop.xlane.xlu0 %1209
        %v1211 = vsel %vm1195, %v1192, -inf
        %1212 = vmax.xlane.f32.xlu0 %v1211
        %v1213 = vpop.xlane.xlu0 %1212
        %v1214 = vsel %vm1195, %v1193, -inf
        %1215 = vmax.xlane.f32.xlu0 %v1214
        %v1216 = vpop.xlane.xlu0 %1215
        %v1217 = vsel %vm1195, %v1194, -inf
        %1218 = vmax.xlane.f32.xlu0 %v1217
        %v1219 = vpop.xlane.xlu0 %1218
        %v1220 = vmax.f32 %v614, %v1198
        %v1221 = vmax.f32 %v615, %v1201
        %v1222 = vmax.f32 %v616, %v1204
        %v1223 = vmax.f32 %v617, %v1207
        %v1224 = vmax.f32 %v618, %v1210
        %v1225 = vmax.f32 %v619, %v1213
        %v1226 = vmax.f32 %v620, %v1216
        %v1227 = vmax.f32 %v621, %v1219
        %v1228 = vsub.f32 %v614, %v1220
        %v1229 = vsub.f32 %v615, %v1221
        %v1230 = vsub.f32 %v616, %v1222
        %v1231 = vsub.f32 %v617, %v1223
        %v1232 = vsub.f32 %v618, %v1224
        %v1233 = vsub.f32 %v619, %v1225
        %v1234 = vsub.f32 %v620, %v1226
        %v1235 = vsub.f32 %v621, %v1227
        %v1236 = vmul.f32 %v1228, 1.442695
        %v1237 = vpow.pop %v1236
        %v1238 = vmul.f32 %v1229, 1.442695
        %v1239 = vpow.pop %v1238
        %v1240 = vmul.f32 %v1230, 1.442695
        %v1241 = vpow.pop %v1240
        %v1242 = vmul.f32 %v1231, 1.442695
        %v1243 = vpow.pop %v1242
        %v1244 = vmul.f32 %v1232, 1.442695
        %v1245 = vpow.pop %v1244
        %v1246 = vmul.f32 %v1233, 1.442695
        %v1247 = vpow.pop %v1246
        %v1248 = vmul.f32 %v1234, 1.442695
        %v1249 = vpow.pop %v1248
        %v1250 = vmul.f32 %v1235, 1.442695
        %v1251 = vpow.pop %v1250
        %v1252 = vsub.f32 %v1187, %v1220
        %v1253 = vsub.f32 %v1188, %v1221
        %v1254 = vsub.f32 %v1189, %v1222
        %v1255 = vsub.f32 %v1190, %v1223
        %v1256 = vsub.f32 %v1191, %v1224
        %v1257 = vsub.f32 %v1192, %v1225
        %v1258 = vsub.f32 %v1193, %v1226
        %v1259 = vsub.f32 %v1194, %v1227
        %v1260 = vmul.f32 %v1252, 1.442695
        %v1261 = vpow.pop %v1260
        %v1262 = vmul.f32 %v1253, 1.442695
        %v1263 = vpow.pop %v1262
        %v1264 = vmul.f32 %v1254, 1.442695
        %v1265 = vpow.pop %v1264
        %v1266 = vmul.f32 %v1255, 1.442695
        %v1267 = vpow.pop %v1266
        %v1268 = vmul.f32 %v1256, 1.442695
        %v1269 = vpow.pop %v1268
        %v1270 = vmul.f32 %v1257, 1.442695
        %v1271 = vpow.pop %v1270
        %v1272 = vmul.f32 %v1258, 1.442695
        %v1273 = vpow.pop %v1272
        %v1274 = vmul.f32 %v1259, 1.442695
        %v1275 = vpow.pop %v1274
        %v1276 = vmul.f32 %v1237, %v622
        %v1277 = vmul.f32 %v1239, %v623
        %v1278 = vmul.f32 %v1241, %v624
        %v1279 = vmul.f32 %v1243, %v625
        %v1280 = vmul.f32 %v1245, %v626
        %v1281 = vmul.f32 %v1247, %v627
        %v1282 = vmul.f32 %v1249, %v628
        %v1283 = vmul.f32 %v1251, %v629
        %v1284 = vsel %vm1195, %v1261, 0.0
        %1285 = vadd.xlane.f32.xlu0 %v1284
        %v1286 = vpop.xlane.xlu0 %1285
        %v1287 = vsel %vm1195, %v1263, 0.0
        %1288 = vadd.xlane.f32.xlu0 %v1287
        %v1289 = vpop.xlane.xlu0 %1288
        %v1290 = vsel %vm1195, %v1265, 0.0
        %1291 = vadd.xlane.f32.xlu0 %v1290
        %v1292 = vpop.xlane.xlu0 %1291
        %v1293 = vsel %vm1195, %v1267, 0.0
        %1294 = vadd.xlane.f32.xlu0 %v1293
        %v1295 = vpop.xlane.xlu0 %1294
        %v1296 = vsel %vm1195, %v1269, 0.0
        %1297 = vadd.xlane.f32.xlu0 %v1296
        %v1298 = vpop.xlane.xlu0 %1297
        %v1299 = vsel %vm1195, %v1271, 0.0
        %1300 = vadd.xlane.f32.xlu0 %v1299
        %v1301 = vpop.xlane.xlu0 %1300
        %v1302 = vsel %vm1195, %v1273, 0.0
        %1303 = vadd.xlane.f32.xlu0 %v1302
        %v1304 = vpop.xlane.xlu0 %1303
        %v1305 = vsel %vm1195, %v1275, 0.0
        %1306 = vadd.xlane.f32.xlu0 %v1305
        %v1307 = vpop.xlane.xlu0 %1306
        %v1308 = vadd.f32 %v1276, %v1286
        %v1309 = vadd.f32 %v1277, %v1289
        %v1310 = vadd.f32 %v1278, %v1292
        %v1311 = vadd.f32 %v1279, %v1295
        %v1312 = vadd.f32 %v1280, %v1298
        %v1313 = vadd.f32 %v1281, %v1301
        %v1314 = vadd.f32 %v1282, %v1304
        %v1315 = vadd.f32 %v1283, %v1307
        %v1316 = vmul.f32 %v1237, %v630
        %v1317 = vmul.f32 %v1239, %v631
        %v1318 = vmul.f32 %v1241, %v632
        %v1319 = vmul.f32 %v1243, %v633
        %v1320 = vmul.f32 %v1245, %v634
        %v1321 = vmul.f32 %v1247, %v635
        %v1322 = vmul.f32 %v1249, %v636
        %v1323 = vmul.f32 %v1251, %v637
        %v1324 = vpack.c.bf16 %v1261, %v1261
        %v1325 = vpack.c.bf16 %v1263, %v1263
        %v1326 = vpack.c.bf16 %v1265, %v1265
        %v1327 = vpack.c.bf16 %v1267, %v1267
        %v1328 = vpack.c.bf16 %v1269, %v1269
        %v1329 = vpack.c.bf16 %v1271, %v1271
        %v1330 = vpack.c.bf16 %v1273, %v1273
        %v1331 = vpack.c.bf16 %v1275, %v1275
        %v1334 = vunpack.c.l.b16 %v1324
        %v1335 = vunpack.c.l.b16 %v1325
        %v1336 = vpack.c.b16 %v1335, %v1334
        %v1339 = vunpack.c.l.b16 %v1054
        %v1340 = vunpack.c.l.b16 %v1055
        %v1341 = vpack.c.b16 %v1340, %v1339
        %v1344 = vsel %vm1195, %v1336, 0
        %1346 = vmatpush.bf16.msra.mxu0 0
        %1347 = vmatpush.bf16.msra.mxu0 0
        %1348 = vmatpush.bf16.msra.mxu0 0
        %1349 = vmatpush.bf16.msra.mxu0 0
        %1350 = vmatpush.bf16.msra.mxu0 0
        %1351 = vmatpush.bf16.msra.mxu0 0
        %1352 = vmatpush.bf16.msra.mxu0 0
        %1353 = vmatpush.bf16.msra.mxu0 %v1341
        %1354 = vmatmul.bf16.gmra.mxu0 %v1344
        %v1355 = vpop.f32.mrf.mxu0
        %v1356 = vadd.f32 0.0, %v1355
        %v1357 = vpop.f32.mrf.mxu0
        %v1358 = vadd.f32 0.0, %v1357
        %1359 = vdwg.mxu0
        %v1362 = vunpack.c.l.b16 %v1326
        %v1363 = vunpack.c.l.b16 %v1327
        %v1364 = vpack.c.b16 %v1363, %v1362
        %v1367 = vunpack.c.l.b16 %v1056
        %v1368 = vunpack.c.l.b16 %v1057
        %v1369 = vpack.c.b16 %v1368, %v1367
        %v1372 = vsel %vm1195, %v1364, 0
        %1374 = vmatpush.bf16.msra.mxu0 0
        %1375 = vmatpush.bf16.msra.mxu0 0
        %1376 = vmatpush.bf16.msra.mxu0 0
        %1377 = vmatpush.bf16.msra.mxu0 0
        %1378 = vmatpush.bf16.msra.mxu0 0
        %1379 = vmatpush.bf16.msra.mxu0 0
        %1380 = vmatpush.bf16.msra.mxu0 0
        %1381 = vmatpush.bf16.msra.mxu0 %v1369
        %1382 = vmatmul.bf16.gmra.mxu0 %v1372
        %v1383 = vpop.f32.mrf.mxu0
        %v1384 = vadd.f32 0.0, %v1383
        %v1385 = vpop.f32.mrf.mxu0
        %v1386 = vadd.f32 0.0, %v1385
        %1387 = vdwg.mxu0
        %v1390 = vunpack.c.l.b16 %v1328
        %v1391 = vunpack.c.l.b16 %v1329
        %v1392 = vpack.c.b16 %v1391, %v1390
        %v1395 = vunpack.c.l.b16 %v1058
        %v1396 = vunpack.c.l.b16 %v1059
        %v1397 = vpack.c.b16 %v1396, %v1395
        %v1400 = vsel %vm1195, %v1392, 0
        %1402 = vmatpush.bf16.msra.mxu0 0
        %1403 = vmatpush.bf16.msra.mxu0 0
        %1404 = vmatpush.bf16.msra.mxu0 0
        %1405 = vmatpush.bf16.msra.mxu0 0
        %1406 = vmatpush.bf16.msra.mxu0 0
        %1407 = vmatpush.bf16.msra.mxu0 0
        %1408 = vmatpush.bf16.msra.mxu0 0
        %1409 = vmatpush.bf16.msra.mxu0 %v1397
        %1410 = vmatmul.bf16.gmra.mxu0 %v1400
        %v1411 = vpop.f32.mrf.mxu0
        %v1412 = vadd.f32 0.0, %v1411
        %v1413 = vpop.f32.mrf.mxu0
        %v1414 = vadd.f32 0.0, %v1413
        %1415 = vdwg.mxu0
        %v1418 = vunpack.c.l.b16 %v1330
        %v1419 = vunpack.c.l.b16 %v1331
        %v1420 = vpack.c.b16 %v1419, %v1418
        %v1423 = vunpack.c.l.b16 %v1060
        %v1424 = vunpack.c.l.b16 %v1061
        %v1425 = vpack.c.b16 %v1424, %v1423
        %v1428 = vsel %vm1195, %v1420, 0
        %1430 = vmatpush.bf16.msra.mxu0 0
        %1431 = vmatpush.bf16.msra.mxu0 0
        %1432 = vmatpush.bf16.msra.mxu0 0
        %1433 = vmatpush.bf16.msra.mxu0 0
        %1434 = vmatpush.bf16.msra.mxu0 0
        %1435 = vmatpush.bf16.msra.mxu0 0
        %1436 = vmatpush.bf16.msra.mxu0 0
        %1437 = vmatpush.bf16.msra.mxu0 %v1425
        %1438 = vmatmul.bf16.gmra.mxu0 %v1428
        %v1439 = vpop.f32.mrf.mxu0
        %v1440 = vadd.f32 0.0, %v1439
        %v1441 = vpop.f32.mrf.mxu0
        %v1442 = vadd.f32 0.0, %v1441
        %1443 = vdwg.mxu0
        %v1444 = vadd.f32 %v1316, %v1356
        %v1445 = vadd.f32 %v1317, %v1358
        %v1446 = vadd.f32 %v1318, %v1384
        %v1447 = vadd.f32 %v1319, %v1386
        %v1448 = vadd.f32 %v1320, %v1412
        %v1449 = vadd.f32 %v1321, %v1414
        %v1450 = vadd.f32 %v1322, %v1440
        %v1451 = vadd.f32 %v1323, %v1442
        %v1452 = vrcp.pop %v1308
        %v1453 = vrcp.pop %v1309
        %v1454 = vrcp.pop %v1310
        %v1455 = vrcp.pop %v1311
        %v1456 = vrcp.pop %v1312
        %v1457 = vrcp.pop %v1313
        %v1458 = vrcp.pop %v1314
        %v1459 = vrcp.pop %v1315
        %v1460 = vmul.f32 %v1444, %v1452
        %v1461 = vmul.f32 %v1445, %v1453
        %v1462 = vmul.f32 %v1446, %v1454
        %v1463 = vmul.f32 %v1447, %v1455
        %v1464 = vmul.f32 %v1448, %v1456
        %v1465 = vmul.f32 %v1449, %v1457
        %v1466 = vmul.f32 %v1450, %v1458
        %v1467 = vmul.f32 %v1451, %v1459
        %v1468 = vrot.slane %v1464, 4
        %vm1469 = vcmask 1047556
        %v1470 = vsel %vm1469, %v1468, %v1460
        %v1471 = vrot.slane %v1460, 4
        %v1472 = vsel %vm1469, %v1464, %v1471
        %v1474 = vunpack.c.l.s4 1983009808
        %v1475 = vunpack.c.0.s8 %v1474
        %v1476 = vperm.slane %v1470, %v1475
        %v1478 = vunpack.c.l.s4 1983009808
        %v1479 = vunpack.c.0.s8 %v1478
        %v1480 = vperm.slane %v1472, %v1479
        %v1481 = vrot.slane %v1466, 4
        %v1482 = vsel %vm1469, %v1481, %v1462
        %v1483 = vrot.slane %v1462, 4
        %v1484 = vsel %vm1469, %v1466, %v1483
        %v1486 = vunpack.c.l.s4 1983009808
        %v1487 = vunpack.c.0.s8 %v1486
        %v1488 = vperm.slane %v1482, %v1487
        %v1490 = vunpack.c.l.s4 1983009808
        %v1491 = vunpack.c.0.s8 %v1490
        %v1492 = vperm.slane %v1484, %v1491
        %v1493 = vrot.slane %v1488, 4
        %v1494 = vsel %vm1469, %v1493, %v1476
        %v1495 = vrot.slane %v1476, 4
        %v1496 = vsel %vm1469, %v1488, %v1495
        %v1498 = vunpack.c.l.s4 1934713408
        %v1499 = vunpack.c.0.s8 %v1498
        %v1500 = vperm.slane %v1494, %v1499
        %v1502 = vunpack.c.l.s4 1934713408
        %v1503 = vunpack.c.0.s8 %v1502
        %v1504 = vperm.slane %v1496, %v1503
        %v1505 = vrot.slane %v1492, 4
        %v1506 = vsel %vm1469, %v1505, %v1480
        %v1507 = vrot.slane %v1480, 4
        %v1508 = vsel %vm1469, %v1492, %v1507
        %v1510 = vunpack.c.l.s4 1934713408
        %v1511 = vunpack.c.0.s8 %v1510
        %v1512 = vperm.slane %v1506, %v1511
        %v1514 = vunpack.c.l.s4 1934713408
        %v1515 = vunpack.c.0.s8 %v1514
        %v1516 = vperm.slane %v1508, %v1515
        %v1517 = vrot.slane %v1500, 4
        %v1518 = vsel %vm1469, 0.0, %v1517
        %v1519 = vrot.slane %v1504, 4
        %v1520 = vsel %vm1469, 0.0, %v1519
        %v1521 = vrot.slane %v1512, 4
        %v1522 = vsel %vm1469, 0.0, %v1521
        %v1523 = vrot.slane %v1516, 4
        %v1524 = vsel %vm1469, 0.0, %v1523
        %v1525 = vrot.slane %v1465, 4
        %v1526 = vsel %vm1469, %v1525, %v1461
        %v1527 = vrot.slane %v1461, 4
        %v1528 = vsel %vm1469, %v1465, %v1527
        %v1530 = vunpack.c.l.s4 1983009808
        %v1531 = vunpack.c.0.s8 %v1530
        %v1532 = vperm.slane %v1526, %v1531
        %v1534 = vunpack.c.l.s4 1983009808
        %v1535 = vunpack.c.0.s8 %v1534
        %v1536 = vperm.slane %v1528, %v1535
        %v1537 = vrot.slane %v1467, 4
        %v1538 = vsel %vm1469, %v1537, %v1463
        %v1539 = vrot.slane %v1463, 4
        %v1540 = vsel %vm1469, %v1467, %v1539
        %v1542 = vunpack.c.l.s4 1983009808
        %v1543 = vunpack.c.0.s8 %v1542
        %v1544 = vperm.slane %v1538, %v1543
        %v1546 = vunpack.c.l.s4 1983009808
        %v1547 = vunpack.c.0.s8 %v1546
        %v1548 = vperm.slane %v1540, %v1547
        %v1549 = vrot.slane %v1544, 4
        %v1550 = vsel %vm1469, %v1549, %v1532
        %v1551 = vrot.slane %v1532, 4
        %v1552 = vsel %vm1469, %v1544, %v1551
        %v1554 = vunpack.c.l.s4 1934713408
        %v1555 = vunpack.c.0.s8 %v1554
        %v1556 = vperm.slane %v1550, %v1555
        %v1558 = vunpack.c.l.s4 1934713408
        %v1559 = vunpack.c.0.s8 %v1558
        %v1560 = vperm.slane %v1552, %v1559
        %v1561 = vrot.slane %v1548, 4
        %v1562 = vsel %vm1469, %v1561, %v1536
        %v1563 = vrot.slane %v1536, 4
        %v1564 = vsel %vm1469, %v1548, %v1563
        %v1566 = vunpack.c.l.s4 1934713408
        %v1567 = vunpack.c.0.s8 %v1566
        %v1568 = vperm.slane %v1562, %v1567
        %v1570 = vunpack.c.l.s4 1934713408
        %v1571 = vunpack.c.0.s8 %v1570
        %v1572 = vperm.slane %v1564, %v1571
        %v1573 = vrot.slane %v1556, 4
        %v1574 = vsel %vm1469, 0.0, %v1573
        %v1575 = vrot.slane %v1560, 4
        %v1576 = vsel %vm1469, 0.0, %v1575
        %v1577 = vrot.slane %v1568, 4
        %v1578 = vsel %vm1469, 0.0, %v1577
        %v1579 = vrot.slane %v1572, 4
        %v1580 = vsel %vm1469, 0.0, %v1579
        %v1581 = vsel %vm1469, %v1519, %v1500
        %v1583 = vunpack.c.l.s4 1983009808
        %v1584 = vunpack.c.0.s8 %v1583
        %v1585 = vperm.slane %v1581, %v1584
        %v1586 = vrot.slane %v1520, 4
        %v1587 = vsel %vm1469, %v1586, %v1518
        %v1589 = vunpack.c.l.s4 1983009808
        %v1590 = vunpack.c.0.s8 %v1589
        %v1591 = vperm.slane %v1587, %v1590
        %v1592 = vsel %vm1469, %v1523, %v1512
        %v1594 = vunpack.c.l.s4 1983009808
        %v1595 = vunpack.c.0.s8 %v1594
        %v1596 = vperm.slane %v1592, %v1595
        %v1597 = vrot.slane %v1524, 4
        %v1598 = vsel %vm1469, %v1597, %v1522
        %v1600 = vunpack.c.l.s4 1983009808
        %v1601 = vunpack.c.0.s8 %v1600
        %v1602 = vperm.slane %v1598, %v1601
        %v1603 = vrot.slane %v1591, 4
        %v1604 = vsel %vm1469, %v1603, %v1585
        %v1605 = vrot.slane %v1585, 4
        %v1606 = vsel %vm1469, %v1591, %v1605
        %v1608 = vunpack.c.l.s4 1934713408
        %v1609 = vunpack.c.0.s8 %v1608
        %v1610 = vperm.slane %v1604, %v1609
        %v1612 = vunpack.c.l.s4 1934713408
        %v1613 = vunpack.c.0.s8 %v1612
        %v1614 = vperm.slane %v1606, %v1613
        %v1615 = vrot.slane %v1602, 4
        %v1616 = vsel %vm1469, %v1615, %v1596
        %v1617 = vrot.slane %v1596, 4
        %v1618 = vsel %vm1469, %v1602, %v1617
        %v1620 = vunpack.c.l.s4 1934713408
        %v1621 = vunpack.c.0.s8 %v1620
        %v1622 = vperm.slane %v1616, %v1621
        %v1624 = vunpack.c.l.s4 1934713408
        %v1625 = vunpack.c.0.s8 %v1624
        %v1626 = vperm.slane %v1618, %v1625
        %v1627 = vrot.slane %v1622, 4
        %v1628 = vsel %vm1469, %v1627, %v1610
        %v1629 = vrot.slane %v1610, 4
        %v1630 = vsel %vm1469, %v1622, %v1629
        %v1631 = vrot.slane %v1626, 4
        %v1632 = vsel %vm1469, %v1631, %v1614
        %v1633 = vrot.slane %v1614, 4
        %v1634 = vsel %vm1469, %v1626, %v1633
        %v1635 = vsel %vm1469, %v1575, %v1556
        %v1637 = vunpack.c.l.s4 1983009808
        %v1638 = vunpack.c.0.s8 %v1637
        %v1639 = vperm.slane %v1635, %v1638
        %v1640 = vrot.slane %v1576, 4
        %v1641 = vsel %vm1469, %v1640, %v1574
        %v1643 = vunpack.c.l.s4 1983009808
        %v1644 = vunpack.c.0.s8 %v1643
        %v1645 = vperm.slane %v1641, %v1644
        %v1646 = vsel %vm1469, %v1579, %v1568
        %v1648 = vunpack.c.l.s4 1983009808
        %v1649 = vunpack.c.0.s8 %v1648
        %v1650 = vperm.slane %v1646, %v1649
        %v1651 = vrot.slane %v1580, 4
        %v1652 = vsel %vm1469, %v1651, %v1578
        %v1654 = vunpack.c.l.s4 1983009808
        %v1655 = vunpack.c.0.s8 %v1654
        %v1656 = vperm.slane %v1652, %v1655
        %v1657 = vrot.slane %v1645, 4
        %v1658 = vsel %vm1469, %v1657, %v1639
        %v1659 = vrot.slane %v1639, 4
        %v1660 = vsel %vm1469, %v1645, %v1659
        %v1662 = vunpack.c.l.s4 1934713408
        %v1663 = vunpack.c.0.s8 %v1662
        %v1664 = vperm.slane %v1658, %v1663
        %v1666 = vunpack.c.l.s4 1934713408
        %v1667 = vunpack.c.0.s8 %v1666
        %v1668 = vperm.slane %v1660, %v1667
        %v1669 = vrot.slane %v1656, 4
        %v1670 = vsel %vm1469, %v1669, %v1650
        %v1671 = vrot.slane %v1650, 4
        %v1672 = vsel %vm1469, %v1656, %v1671
        %v1674 = vunpack.c.l.s4 1934713408
        %v1675 = vunpack.c.0.s8 %v1674
        %v1676 = vperm.slane %v1670, %v1675
        %v1678 = vunpack.c.l.s4 1934713408
        %v1679 = vunpack.c.0.s8 %v1678
        %v1680 = vperm.slane %v1672, %v1679
        %v1681 = vrot.slane %v1676, 4
        %v1682 = vsel %vm1469, %v1681, %v1664
        %v1683 = vrot.slane %v1664, 4
        %v1684 = vsel %vm1469, %v1676, %v1683
        %v1685 = vrot.slane %v1680, 4
        %v1686 = vsel %vm1469, %v1685, %v1668
        %v1687 = vrot.slane %v1668, 4
        %v1688 = vsel %vm1469, %v1680, %v1687
        %1691 = vrot.lane.b32.xlu0 %v1630, 8
        %v1692 = vpop.permute.xlu0 %1691
        %1693 = vrot.lane.b32.xlu0 %v1684, 8
        %v1694 = vpop.permute.xlu0 %1693
        %1699 = vrot.lane.b32.xlu0 %v1632, 16
        %v1700 = vpop.permute.xlu0 %1699
        %1701 = vrot.lane.b32.xlu0 %v1686, 16
        %v1702 = vpop.permute.xlu0 %1701
        %1707 = vrot.lane.b32.xlu0 %v1634, 24
        %v1708 = vpop.permute.xlu0 %1707
        %1709 = vrot.lane.b32.xlu0 %v1688, 24
        %v1710 = vpop.permute.xlu0 %1709
        %v1713 = vsel %vm1072, %v1628, %v1692
        %v1714 = vsel %vm1072, %v1682, %v1694
        %v1715 = vsel %vm1195, %v1713, %v1700
        %v1716 = vsel %vm1195, %v1714, %v1702
        %vm1717 = vcmask 195584
        %v1718 = vsel %vm1717, %v1715, %v1708
        %v1719 = vsel %vm1717, %v1716, %v1710
        %v1720 = vpack.c.bf16 %v1719, %v1718
        %v1721 = vld [vmem:[%s4] sm:$0xf]
        %v1722 = vld [vmem:[%s4 + $0x4] sm:$0xf]
        %v1723 = vld [vmem:[%s4 + $0x8] sm:$0xf]
        %v1724 = vld [vmem:[%s4 + $0xc] sm:$0xf]
        %v1725 = vld [vmem:[%s5] sm:$0x1]
        %v1727 = vperm.slane %v1725, 0
        %v1733 = vunpack.c.l.b16 %v1721
        %v1734 = vunpack.c.l.b16 %v1722
        %v1735 = vunpack.c.l.b16 %v1723
        %v1736 = vunpack.c.l.b16 %v1724
        %v1737 = vpack.c.b16 %v1734, %v1733
        %v1738 = vpack.c.b16 %v1736, %v1735
        %vm1741 = vcmask 261120
        %v1743 = vsel %vm1741, %v1720, 0
        %1745 = vmatpush.bf16.msra.mxu0 0
        %1746 = vmatpush.bf16.msra.mxu0 0
        %1747 = vmatpush.bf16.msra.mxu0 0
        %1748 = vmatpush.bf16.msra.mxu0 0
        %1749 = vmatpush.bf16.msra.mxu0 0
        %1750 = vmatpush.bf16.msra.mxu0 0
        %1751 = vmatpush.bf16.msra.mxu0 %v1738
        %1752 = vmatpush.bf16.msra.mxu0 %v1737
        %1753 = vmatmul.bf16.gmra.mxu0 %v1743
        %v1754 = vpop.f32.mrf.mxu0
        %v1755 = vadd.f32 %v1727, %v1754
        %v1756 = vpop.f32.mrf.mxu0
        %v1757 = vadd.f32 %v1727, %v1756
        %1758 = vdwg.mxu0
        %v1759 = vadd.f32 %v591, %v1755
        %v1760 = vadd.f32 %v592, %v1757
        %v1761 = vld [vmem:[%s6] sm:$0x1]
        %v1762 = vld [vmem:[%s7] sm:$0x1]
        %v1763 = vsel %vm1741, %v1759, 0.0
        %1764 = vadd.xlane.f32.xlu0 %v1763
        %v1765 = vpop.xlane.xlu0 %1764
        %v1766 = vsel %vm1741, %v1760, 0.0
        %1767 = vadd.xlane.f32.xlu0 %v1766
        %v1768 = vpop.xlane.xlu0 %1767
        %v1769 = vrcp.pop 32.0
        %v1770 = vmul.f32 32.0, %v1769
        %v1771 = vsub.f32 1.0, %v1770
        %v1772 = vmul.f32 %v1769, %v1771
        %v1773 = vadd.f32 %v1769, %v1772
        %vm1774 = vweird.f32 %v1769
        %v1775 = vsel %vm1774, %v1769, %v1773
        %v1776 = vmul.f32 %v1765, %v1775
        %v1777 = vmul.f32 %v1768, %v1775
        %v1778 = vsub.f32 %v1759, %v1776
        %v1779 = vsub.f32 %v1760, %v1777
        %v1780 = vmul.f32 %v1778, %v1778
        %v1781 = vmul.f32 %v1779, %v1779
        %v1782 = vsel %vm1741, %v1780, 0.0
        %1783 = vadd.xlane.f32.xlu0 %v1782
        %v1784 = vpop.xlane.xlu0 %1783
        %v1785 = vsel %vm1741, %v1781, 0.0
        %1786 = vadd.xlane.f32.xlu0 %v1785
        %v1787 = vpop.xlane.xlu0 %1786
        %v1788 = vmul.f32 %v1784, %v1775
        %v1789 = vmul.f32 %v1787, %v1775
        %v1790 = vadd.f32 %v1788, 1e-05
        %v1791 = vadd.f32 %v1789, 1e-05
        %v1792 = vrsqrt.pop %v1790
        %v1793 = vmul.f32 %v1792, %v1790
        %v1794 = vmul.f32 %v1793, %v1792
        %v1795 = vmul.f32 0.5, %v1794
        %v1796 = vsub.f32 1.5, %v1795
        %v1797 = vmul.f32 %v1792, %v1796
        %vm1798 = vweird.f32 %v1790
        %vm1799 = vweird.f32 %v1792
        %vm1800 = vmor %vm1798, %vm1799
        %v1801 = vsel %vm1800, %v1792, %v1797
        %v1802 = vrsqrt.pop %v1791
        %v1803 = vmul.f32 %v1802, %v1791
        %v1804 = vmul.f32 %v1803, %v1802
        %v1805 = vmul.f32 0.5, %v1804
        %v1806 = vsub.f32 1.5, %v1805
        %v1807 = vmul.f32 %v1802, %v1806
        %vm1808 = vweird.f32 %v1791
        %vm1809 = vweird.f32 %v1802
        %vm1810 = vmor %vm1808, %vm1809
        %v1811 = vsel %vm1810, %v1802, %v1807
        %v1812 = vmul.f32 %v1778, %v1801
        %v1813 = vmul.f32 %v1779, %v1811
        %v1815 = vperm.slane %v1761, 0
        %v1817 = vmul.f32 %v1812, %v1815
        %v1818 = vmul.f32 %v1813, %v1815
        %v1820 = vperm.slane %v1762, 0
        %v1822 = vadd.f32 %v1817, %v1820
        %v1823 = vadd.f32 %v1818, %v1820
        %v1824 = vpack.c.bf16 %v1823, %v1822
        %v1825 = vld [vmem:[%s8] sm:$0xf]
        %v1826 = vld [vmem:[%s8 + $0x4] sm:$0xf]
        %v1827 = vld [vmem:[%s8 + $0x8] sm:$0xf]
        %v1828 = vld [vmem:[%s8 + $0xc] sm:$0xf]
        %v1829 = vld [vmem:[%s9] sm:$0x1]
        %v1831 = vperm.slane %v1829, 0
        %v1837 = vunpack.c.l.b16 %v1825
        %v1838 = vunpack.c.l.b16 %v1826
        %v1839 = vunpack.c.l.b16 %v1827
        %v1840 = vunpack.c.l.b16 %v1828
        %v1841 = vpack.c.b16 %v1838, %v1837
        %v1842 = vpack.c.b16 %v1840, %v1839
        %v1846 = vsel %vm1741, %v1824, 0
        %1848 = vmatpush.bf16.msra.mxu0 0
        %1849 = vmatpush.bf16.msra.mxu0 0
        %1850 = vmatpush.bf16.msra.mxu0 0
        %1851 = vmatpush.bf16.msra.mxu0 0
        %1852 = vmatpush.bf16.msra.mxu0 0
        %1853 = vmatpush.bf16.msra.mxu0 0
        %1854 = vmatpush.bf16.msra.mxu0 %v1842
        %1855 = vmatpush.bf16.msra.mxu0 %v1841
        %1856 = vmatmul.bf16.gmra.mxu0 %v1846
        %v1857 = vpop.f32.mrf.mxu0
        %v1858 = vadd.f32 %v1831, %v1857
        %v1859 = vpop.f32.mrf.mxu0
        %v1860 = vadd.f32 %v1831, %v1859
        %1861 = vdwg.mxu0
        %v1862 = vmul.f32 %v1858, 1.702
        %v1863 = vmul.f32 %v1860, 1.702
        %v1864 = vxor.u32 %v1862, 2147483648
        %v1865 = vxor.u32 %v1863, 2147483648
        %v1866 = vmul.f32 %v1864, 1.442695
        %v1867 = vpow.pop %v1866
        %v1868 = vmul.f32 %v1865, 1.442695
        %v1869 = vpow.pop %v1868
        %v1870 = vadd.f32 %v1867, 1.0
        %v1871 = vadd.f32 %v1869, 1.0
        %v1872 = vrcp.pop %v1870
        %v1873 = vmul.f32 %v1870, %v1872
        %v1874 = vsub.f32 1.0, %v1873
        %v1875 = vmul.f32 %v1872, %v1874
        %v1876 = vadd.f32 %v1872, %v1875
        %vm1877 = vweird.f32 %v1870
        %vm1878 = vweird.f32 %v1872
        %vm1879 = vmor %vm1877, %vm1878
        %v1880 = vsel %vm1879, %v1872, %v1876
        %v1881 = vand.u32 2147483647, %v1870
        %vm1882 = vcmp.eq.f32.partialorder %v1881, 8.507059e+37
        %v1883 = vand.u32 %v1870, 2147483648
        %v1884 = vor.u32 1.1754944e-38, %v1883
        %v1885 = vsel %vm1882, %v1884, %v1880
        %v1886 = vmul.f32 1.0, %v1885
        %v1887 = vrcp.pop %v1871
        %v1888 = vmul.f32 %v1871, %v1887
        %v1889 = vsub.f32 1.0, %v1888
        %v1890 = vmul.f32 %v1887, %v1889
        %v1891 = vadd.f32 %v1887, %v1890
        %vm1892 = vweird.f32 %v1871
        %vm1893 = vweird.f32 %v1887
        %vm1894 = vmor %vm1892, %vm1893
        %v1895 = vsel %vm1894, %v1887, %v1891
        %v1896 = vand.u32 2147483647, %v1871
        %vm1897 = vcmp.eq.f32.partialorder %v1896, 8.507059e+37
        %v1898 = vand.u32 %v1871, 2147483648
        %v1899 = vor.u32 1.1754944e-38, %v1898
        %v1900 = vsel %vm1897, %v1899, %v1895
        %v1901 = vmul.f32 1.0, %v1900
        %v1902 = vmul.f32 %v1858, %v1886
        %v1903 = vmul.f32 %v1860, %v1901
        %v1904 = vpack.c.bf16 %v1903, %v1902
        %v1905 = vld [vmem:[%s10] sm:$0xf]
        %v1906 = vld [vmem:[%s10 + $0x4] sm:$0xf]
        %v1907 = vld [vmem:[%s10 + $0x8] sm:$0xf]
        %v1908 = vld [vmem:[%s10 + $0xc] sm:$0xf]
        %v1909 = vld [vmem:[%s10 + $0x10] sm:$0xf]
        %v1910 = vld [vmem:[%s10 + $0x14] sm:$0xf]
        %v1911 = vld [vmem:[%s10 + $0x18] sm:$0xf]
        %v1912 = vld [vmem:[%s10 + $0x1c] sm:$0xf]
        %v1913 = vld [vmem:[%s11] sm:$0x1]
        %v1915 = vperm.slane %v1913, 0
        %v1925 = vunpack.c.l.b16 %v1905
        %v1926 = vunpack.c.l.b16 %v1906
        %v1927 = vunpack.c.l.b16 %v1907
        %v1928 = vunpack.c.l.b16 %v1908
        %v1929 = vunpack.c.l.b16 %v1909
        %v1930 = vunpack.c.l.b16 %v1910
        %v1931 = vunpack.c.l.b16 %v1911
        %v1932 = vunpack.c.l.b16 %v1912
        %v1933 = vpack.c.b16 %v1926, %v1925
        %v1934 = vpack.c.b16 %v1928, %v1927
        %v1935 = vpack.c.b16 %v1930, %v1929
        %v1936 = vpack.c.b16 %v1932, %v1931
        %vm1941 = vcmask 523264
        %v1943 = vsel %vm1941, %v1904, 0
        %1945 = vmatpush.bf16.msra.mxu0 0
        %1946 = vmatpush.bf16.msra.mxu0 0
        %1947 = vmatpush.bf16.msra.mxu0 0
        %1948 = vmatpush.bf16.msra.mxu0 0
        %1949 = vmatpush.bf16.msra.mxu0 %v1936
        %1950 = vmatpush.bf16.msra.mxu0 %v1935
        %1951 = vmatpush.bf16.msra.mxu0 %v1934
        %1952 = vmatpush.bf16.msra.mxu0 %v1933
        %1953 = vmatmul.bf16.gmra.mxu0 %v1943
        %v1954 = vpop.f32.mrf.mxu0
        %v1955 = vadd.f32 %v1915, %v1954
        %v1956 = vpop.f32.mrf.mxu0
        %v1957 = vadd.f32 %v1915, %v1956
        %1958 = vdwg.mxu0
        %v1959 = vadd.f32 %v1759, %v1955
        %v1960 = vadd.f32 %v1760, %v1957
        %1961 = vst.msk [vmem:[%s588] sm:$0xff] %vm1741, %v1959
        %1962 = vst.msk [vmem:[%s588 + $0x8] sm:$0xff] %vm1741, %v1960
        %s1963 = smul.u32 2, %s28
        %p1964 = scmp.lt.s32.totalorder %s27, 1
        %s1965 = scalar_select %p1964, %s27, 1
        %p1966 = scmp.lt.s32.totalorder %s1963, 7
        %s1967 = scalar_select %p1966, %s1963, 7
        %s1968 = smul.addr %s1965, 8
        %s1969 = sadd.s32 %s1967, %s1968
        %s1970 = smul.addr %s1969, 8
        %s1971 = scalar_lea.vmem %s12, %s1970
        // Predicated region
        $region117: #{tpu_custom_call.1} parent=104 // pred_check
          %p1972 = pneg %p331
        $region118: #{tpu_custom_call.1} parent=104 // pred_check_branch
          %1974 = sbr.rel (%p1972) target = $region120
        $region119: #{tpu_custom_call.1} parent=104 // pred_region
          %s1975 = smul.u32 2, %s28
        $region120: #{tpu_custom_call.1} parent=104 // pred_fallthru
          _
      $region105: #{tpu_custom_call.1} parent=5 // pred_fallthru
        _
      %p1976 = scmp.le.s32.totalorder 2, %s18
      // Predicated region
      $region121: #{tpu_custom_call.1} parent=5 // pred_check
        %p1977 = pneg %p1976
      $region122: #{tpu_custom_call.1} parent=5 // pred_check_branch
        %1979 = sbr.rel (%p1977) target = $region124
      $region123: #{tpu_custom_call.1} parent=5 // pred_region
        %s1980 = ssub.s32 %s18, 2
        // Predicated region
        $region125: #{tpu_custom_call.1} parent=123 // pred_check
          %p1981 = pneg %p337
        $region126: #{tpu_custom_call.1} parent=123 // pred_check_branch
          %1983 = sbr.rel (%p1981) target = $region128
        $region127: #{tpu_custom_call.1} parent=123 // pred_region
          %s1984 = smul.u32 2, %s30
          %p1985 = scmp.lt.s32.totalorder %s29, 1
          %s1986 = scalar_select %p1985, %s29, 1
          %p1987 = scmp.lt.s32.totalorder %s1984, 7
          %s1988 = scalar_select %p1987, %s1984, 7
          %s1989 = smul.addr %s1986, 8
          %s1990 = sadd.s32 %s1988, %s1989
          %s1991 = smul.addr %s1990, 8
          %s1992 = scalar_lea.vmem %s12, %s1991
        $region128: #{tpu_custom_call.1} parent=123 // pred_fallthru
          _
      $region124: #{tpu_custom_call.1} parent=5 // pred_fallthru
        _
    $region6: #{tpu_custom_call.1} parent=1 // loop_footer
      %s22 = sadd.s32 1, %s18
    $region7: #{tpu_custom_call.1} parent=1 // loop_footer_branch
      %17 = sbr.rel target = $region3
    $region8: #{tpu_custom_call.1} parent=1 // loop_exit
      _

// kernel: tpu_custom_call.1
$region0: #{tpu_custom_call.1}
  #allocation0 [shape = 'u32[]', space=smem, size = 0x4, offset = 0x4, fixed_abs, tag = 'smem constant byte address 0x4 - core index']
  #allocation1 [shape = 'u32[72,128]{1,0:T(1,128)}', space=vmem, size = 0x9000, scoped, tag = 'internal scratch']
  %s0 = inlined_call_operand.vmem [shape: f32[2,64,32], index: 0, kind: input, shape index: {}]
  %s1 = inlined_call_operand.vmem [shape: bf16[2,4,64,8], index: 1, kind: input, shape index: {}]
  %s2 = inlined_call_operand.vmem [shape: bf16[2,4,64,8], index: 2, kind: input, shape index: {}]
  %s3 = inlined_call_operand.vmem [shape: bf16[2,4,64,8], index: 3, kind: input, shape index: {}]
  %s4 = inlined_call_operand.vmem [shape: bf16[32,32], index: 4, kind: input, shape index: {}]
  %s5 = inlined_call_operand.vmem [shape: f32[1,32], index: 5, kind: input, shape index: {}]
  %s6 = inlined_call_operand.vmem [shape: f32[1,32], index: 6, kind: input, shape index: {}]
  %s7 = inlined_call_operand.vmem [shape: f32[1,32], index: 7, kind: input, shape index: {}]
  %s8 = inlined_call_operand.vmem [shape: bf16[32,64], index: 8, kind: input, shape index: {}]
  %s9 = inlined_call_operand.vmem [shape: f32[1,64], index: 9, kind: input, shape index: {}]
  %s10 = inlined_call_operand.vmem [shape: bf16[64,32], index: 10, kind: input, shape index: {}]
  %s11 = inlined_call_operand.vmem [shape: f32[1,32], index: 11, kind: input, shape index: {}]
  %s12 = inlined_call_operand.vmem [shape: f32[2,64,32], index: 12, kind: output, shape index: {}]
  %s13 = sld [smem:[#allocation0]]
  $region129: #{tpu_custom_call.1} parent=0
    _
  %s15 = ssub.s32 1, %s13
  %s16 = scalar_select 0, %s15, %s13
  $region1: #{tpu_custom_call.1} parent=0
    #allocation2 [shape = 'u8[32768]{0}', space=vmem, size = 0x8000, scoped, tag = 'input window, operand 1']
    loop: start=0, step=1, limit=10
    $region2: #{tpu_custom_call.1} parent=1 // loop_pre_header
      _
    $region3: #{tpu_custom_call.1} parent=1 // loop_header
      %s18 = sphi 0, %s22
      %p19 = scmp.ge.s32.totalorder %s18, 10
      %s25 = sphi 0, %s37
      %s26 = sphi 0, %s33
      %s27 = sphi 0, %s25
      %s28 = sphi 0, %s26
      %s29 = sphi 0, %s27
      %s30 = sphi 0, %s28
      %s42 = sphi 0, %s44
      %s45 = sphi 0, %s42
      %s46 = sphi 0, %s45
      %s62 = sphi 0, %s46
      %s70 = sphi 0, %s72
      %s73 = sphi 0, %s70
      %s74 = sphi 0, %s73
      %s90 = sphi 0, %s74
      %s96 = sphi 0, %s98
      %s99 = sphi 0, %s96
      %s100 = sphi 0, %s99
      %s116 = sphi 0, %s100
      %s122 = sphi 0, %s124
      %s125 = sphi 0, %s122
      %s126 = sphi 0, %s125
      %s142 = sphi 0, %s126
      %s146 = sphi 0, %s146
      %s148 = sphi 0, %s146
      %s149 = sphi 0, %s148
      %s163 = sphi 0, %s149
      %s167 = sphi 0, %s167
      %s169 = sphi 0, %s167
      %s170 = sphi 0, %s169
      %s184 = sphi 0, %s170
      %s188 = sphi 0, %s188
      %s190 = sphi 0, %s188
      %s191 = sphi 0, %s190
      %s205 = sphi 0, %s191
      %s209 = sphi 0, %s209
      %s211 = sphi 0, %s209
      %s212 = sphi 0, %s211
      %s226 = sphi 0, %s212
      %s230 = sphi 0, %s230
      %s232 = sphi 0, %s230
      %s233 = sphi 0, %s232
      %s247 = sphi 0, %s233
      %s251 = sphi 0, %s251
      %s253 = sphi 0, %s251
      %s254 = sphi 0, %s253
      %s268 = sphi 0, %s254
      %s272 = sphi 0, %s272
      %s274 = sphi 0, %s272
      %s275 = sphi 0, %s274
      %s289 = sphi 0, %s275
      %s293 = sphi 0, %s293
      %s295 = sphi 0, %s293
      %s296 = sphi 0, %s295
      %s310 = sphi 0, %s296
      %s318 = sphi 0, %s320
      %s321 = sphi 0, %s318
      %s322 = sphi 0, %s321
      %s338 = sphi 0, %s322
    $region4: #{tpu_custom_call.1} parent=1 // loop_header_branch
      %21 = sbr.rel (%p19) target = $region8
    $region5: #{tpu_custom_call.1} parent=1 // loop_body
      %s23 = ssub.s32 %s18, 1
      %s24 = ssub.s32 %s18, 2
      %s31 = sadd.s32 1, %s26
      %p32 = scmp.ge.s32.totalorder %s31, 4
      %s33 = scalar_select %p32, 0, %s31
      %s34 = sadd.s32 1, %s25
      %s35 = scalar_select %p32, %s34, %s25
      %p36 = scmp.ge.s32.totalorder %s35, 2
      %s37 = scalar_select %p36, 0, %s35
      %s38 = ssub.s32 %s25, %s37
      %s39 = ssub.s32 %s26, %s33
      %s40 = sor.u32 %s38, %s39
      %p41 = scmp.eq.s32.totalorder %s40, 0
      %s43 = sadd.s32 %s42, 1
      %s44 = scalar_select %p41, %s42, %s43
      %p47 = pneg %p41
      %p48 = scmp.eq.s32.totalorder %s18, 7
      %p49 = por %p47, %p48
      %p50 = scmp.ne.s32.totalorder %s42, %s45
      %p51 = scmp.eq.s32.totalorder %s18, 0
      %p52 = por %p50, %p51
      %p53 = scmp.ne.s32.totalorder %s42, %s45
      %p54 = scmp.eq.s32.totalorder %s23, 7
      %p55 = por %p53, %p54
      %p56 = scmp.ne.s32.totalorder %s45, %s46
      %p57 = scmp.eq.s32.totalorder %s23, 0
      %p58 = por %p56, %p57
      %p59 = scmp.ne.s32.totalorder %s45, %s46
      %p60 = scmp.eq.s32.totalorder %s24, 7
      %p61 = por %p59, %p60
      %p63 = scmp.ne.s32.totalorder %s46, %s62
      %p64 = scmp.eq.s32.totalorder %s24, 0
      %p65 = por %p63, %p64
      %s66 = ssub.s32 %s25, %s37
      %s67 = ssub.s32 %s26, %s33
      %s68 = sor.u32 %s66, %s67
      %p69 = scmp.eq.s32.totalorder %s68, 0
      %s71 = sadd.s32 %s70, 1
      %s72 = scalar_select %p69, %s70, %s71
      %p75 = pneg %p69
      %p76 = scmp.eq.s32.totalorder %s18, 7
      %p77 = por %p75, %p76
      %p78 = scmp.ne.s32.totalorder %s70, %s73
      %p79 = scmp.eq.s32.totalorder %s18, 0
      %p80 = por %p78, %p79
      %p81 = scmp.ne.s32.totalorder %s70, %s73
      %p82 = scmp.eq.s32.totalorder %s23, 7
      %p83 = por %p81, %p82
      %p84 = scmp.ne.s32.totalorder %s73, %s74
      %p85 = scmp.eq.s32.totalorder %s23, 0
      %p86 = por %p84, %p85
      %p87 = scmp.ne.s32.totalorder %s73, %s74
      %p88 = scmp.eq.s32.totalorder %s24, 7
      %p89 = por %p87, %p88
      %p91 = scmp.ne.s32.totalorder %s74, %s90
      %p92 = scmp.eq.s32.totalorder %s24, 0
      %p93 = por %p91, %p92
      %s94 = ssub.s32 %s25, %s37
      %p95 = scmp.eq.s32.totalorder %s94, 0
      %s97 = sadd.s32 %s96, 1
      %s98 = scalar_select %p95, %s96, %s97
      %p101 = pneg %p95
      %p102 = scmp.eq.s32.totalorder %s18, 7
      %p103 = por %p101, %p102
      %p104 = scmp.ne.s32.totalorder %s96, %s99
      %p105 = scmp.eq.s32.totalorder %s18, 0
      %p106 = por %p104, %p105
      %p107 = scmp.ne.s32.totalorder %s96, %s99
      %p108 = scmp.eq.s32.totalorder %s23, 7
      %p109 = por %p107, %p108
      %p110 = scmp.ne.s32.totalorder %s99, %s100
      %p111 = scmp.eq.s32.totalorder %s23, 0
      %p112 = por %p110, %p111
      %p113 = scmp.ne.s32.totalorder %s99, %s100
      %p114 = scmp.eq.s32.totalorder %s24, 7
      %p115 = por %p113, %p114
      %p117 = scmp.ne.s32.totalorder %s100, %s116
      %p118 = scmp.eq.s32.totalorder %s24, 0
      %p119 = por %p117, %p118
      %s120 = ssub.s32 %s25, %s37
      %p121 = scmp.eq.s32.totalorder %s120, 0
      %s123 = sadd.s32 %s122, 1
      %s124 = scalar_select %p121, %s122, %s123
      %p127 = pneg %p121
      %p128 = scmp.eq.s32.totalorder %s18, 7
      %p129 = por %p127, %p128
      %p130 = scmp.ne.s32.totalorder %s122, %s125
      %p131 = scmp.eq.s32.totalorder %s18, 0
      %p132 = por %p130, %p131
      %p133 = scmp.ne.s32.totalorder %s122, %s125
      %p134 = scmp.eq.s32.totalorder %s23, 7
      %p135 = por %p133, %p134
      %p136 = scmp.ne.s32.totalorder %s125, %s126
      %p137 = scmp.eq.s32.totalorder %s23, 0
      %p138 = por %p136, %p137
      %p139 = scmp.ne.s32.totalorder %s125, %s126
      %p140 = scmp.eq.s32.totalorder %s24, 7
      %p141 = por %p139, %p140
      %p143 = scmp.ne.s32.totalorder %s126, %s142
      %p144 = scmp.eq.s32.totalorder %s24, 0
      %p145 = por %p143, %p144
      %s147 = sadd.s32 %s146, 1
      %p150 = scmp.eq.s32.totalorder %s18, 7
      %p151 = scmp.ne.s32.totalorder %s146, %s148
      %p152 = scmp.eq.s32.totalorder %s18, 0
      %p153 = por %p151, %p152
      %p154 = scmp.ne.s32.totalorder %s146, %s148
      %p155 = scmp.eq.s32.totalorder %s23, 7
      %p156 = por %p154, %p155
      %p157 = scmp.ne.s32.totalorder %s148, %s149
      %p158 = scmp.eq.s32.totalorder %s23, 0
      %p159 = por %p157, %p158
      %p160 = scmp.ne.s32.totalorder %s148, %s149
      %p161 = scmp.eq.s32.totalorder %s24, 7
      %p162 = por %p160, %p161
      %p164 = scmp.ne.s32.totalorder %s149, %s163
      %p165 = scmp.eq.s32.totalorder %s24, 0
      %p166 = por %p164, %p165
      %s168 = sadd.s32 %s167, 1
      %p171 = scmp.eq.s32.totalorder %s18, 7
      %p172 = scmp.ne.s32.totalorder %s167, %s169
      %p173 = scmp.eq.s32.totalorder %s18, 0
      %p174 = por %p172, %p173
      %p175 = scmp.ne.s32.totalorder %s167, %s169
      %p176 = scmp.eq.s32.totalorder %s23, 7
      %p177 = por %p175, %p176
      %p178 = scmp.ne.s32.totalorder %s169, %s170
      %p179 = scmp.eq.s32.totalorder %s23, 0
      %p180 = por %p178, %p179
      %p181 = scmp.ne.s32.totalorder %s169, %s170
      %p182 = scmp.eq.s32.totalorder %s24, 7
      %p183 = por %p181, %p182
      %p185 = scmp.ne.s32.totalorder %s170, %s184
      %p186 = scmp.eq.s32.totalorder %s24, 0
      %p187 = por %p185, %p186
      %s189 = sadd.s32 %s188, 1
      %p192 = scmp.eq.s32.totalorder %s18, 7
      %p193 = scmp.ne.s32.totalorder %s188, %s190
      %p194 = scmp.eq.s32.totalorder %s18, 0
      %p195 = por %p193, %p194
      %p196 = scmp.ne.s32.totalorder %s188, %s190
      %p197 = scmp.eq.s32.totalorder %s23, 7
      %p198 = por %p196, %p197
      %p199 = scmp.ne.s32.totalorder %s190, %s191
      %p200 = scmp.eq.s32.totalorder %s23, 0
      %p201 = por %p199, %p200
      %p202 = scmp.ne.s32.totalorder %s190, %s191
      %p203 = scmp.eq.s32.totalorder %s24, 7
      %p204 = por %p202, %p203
      %p206 = scmp.ne.s32.totalorder %s191, %s205
      %p207 = scmp.eq.s32.totalorder %s24, 0
      %p208 = por %p206, %p207
      %s210 = sadd.s32 %s209, 1
      %p213 = scmp.eq.s32.totalorder %s18, 7
      %p214 = scmp.ne.s32.totalorder %s209, %s211
      %p215 = scmp.eq.s32.totalorder %s18, 0
      %p216 = por %p214, %p215
      %p217 = scmp.ne.s32.totalorder %s209, %s211
      %p218 = scmp.eq.s32.totalorder %s23, 7
      %p219 = por %p217, %p218
      %p220 = scmp.ne.s32.totalorder %s211, %s212
      %p221 = scmp.eq.s32.totalorder %s23, 0
      %p222 = por %p220, %p221
      %p223 = scmp.ne.s32.totalorder %s211, %s212
      %p224 = scmp.eq.s32.totalorder %s24, 7
      %p225 = por %p223, %p224
      %p227 = scmp.ne.s32.totalorder %s212, %s226
      %p228 = scmp.eq.s32.totalorder %s24, 0
      %p229 = por %p227, %p228
      %s231 = sadd.s32 %s230, 1
      %p234 = scmp.eq.s32.totalorder %s18, 7
      %p235 = scmp.ne.s32.totalorder %s230, %s232
      %p236 = scmp.eq.s32.totalorder %s18, 0
      %p237 = por %p235, %p236
      %p238 = scmp.ne.s32.totalorder %s230, %s232
      %p239 = scmp.eq.s32.totalorder %s23, 7
      %p240 = por %p238, %p239
      %p241 = scmp.ne.s32.totalorder %s232, %s233
      %p242 = scmp.eq.s32.totalorder %s23, 0
      %p243 = por %p241, %p242
      %p244 = scmp.ne.s32.totalorder %s232, %s233
      %p245 = scmp.eq.s32.totalorder %s24, 7
      %p246 = por %p244, %p245
      %p248 = scmp.ne.s32.totalorder %s233, %s247
      %p249 = scmp.eq.s32.totalorder %s24, 0
      %p250 = por %p248, %p249
      %s252 = sadd.s32 %s251, 1
      %p255 = scmp.eq.s32.totalorder %s18, 7
      %p256 = scmp.ne.s32.totalorder %s251, %s253
      %p257 = scmp.eq.s32.totalorder %s18, 0
      %p258 = por %p256, %p257
      %p259 = scmp.ne.s32.totalorder %s251, %s253
      %p260 = scmp.eq.s32.totalorder %s23, 7
      %p261 = por %p259, %p260
      %p262 = scmp.ne.s32.totalorder %s253, %s254
      %p263 = scmp.eq.s32.totalorder %s23, 0
      %p264 = por %p262, %p263
      %p265 = scmp.ne.s32.totalorder %s253, %s254
      %p266 = scmp.eq.s32.totalorder %s24, 7
      %p267 = por %p265, %p266
      %p269 = scmp.ne.s32.totalorder %s254, %s268
      %p270 = scmp.eq.s32.totalorder %s24, 0
      %p271 = por %p269, %p270
      %s273 = sadd.s32 %s272, 1
      %p276 = scmp.eq.s32.totalorder %s18, 7
      %p277 = scmp.ne.s32.totalorder %s272, %s274
      %p278 = scmp.eq.s32.totalorder %s18, 0
      %p279 = por %p277, %p278
      %p280 = scmp.ne.s32.totalorder %s272, %s274
      %p281 = scmp.eq.s32.totalorder %s23, 7
      %p282 = por %p280, %p281
      %p283 = scmp.ne.s32.totalorder %s274, %s275
      %p284 = scmp.eq.s32.totalorder %s23, 0
      %p285 = por %p283, %p284
      %p286 = scmp.ne.s32.totalorder %s274, %s275
      %p287 = scmp.eq.s32.totalorder %s24, 7
      %p288 = por %p286, %p287
      %p290 = scmp.ne.s32.totalorder %s275, %s289
      %p291 = scmp.eq.s32.totalorder %s24, 0
      %p292 = por %p290, %p291
      %s294 = sadd.s32 %s293, 1
      %p297 = scmp.eq.s32.totalorder %s18, 7
      %p298 = scmp.ne.s32.totalorder %s293, %s295
      %p299 = scmp.eq.s32.totalorder %s18, 0
      %p300 = por %p298, %p299
      %p301 = scmp.ne.s32.totalorder %s293, %s295
      %p302 = scmp.eq.s32.totalorder %s23, 7
      %p303 = por %p301, %p302
      %p304 = scmp.ne.s32.totalorder %s295, %s296
      %p305 = scmp.eq.s32.totalorder %s23, 0
      %p306 = por %p304, %p305
      %p307 = scmp.ne.s32.totalorder %s295, %s296
      %p308 = scmp.eq.s32.totalorder %s24, 7
      %p309 = por %p307, %p308
      %p311 = scmp.ne.s32.totalorder %s296, %s310
      %p312 = scmp.eq.s32.totalorder %s24, 0
      %p313 = por %p311, %p312
      %s314 = ssub.s32 %s25, %s37
      %s315 = ssub.s32 %s26, %s33
      %s316 = sor.u32 %s314, %s315
      %p317 = scmp.eq.s32.totalorder %s316, 0
      %s319 = sadd.s32 %s318, 1
      %s320 = scalar_select %p317, %s318, %s319
      %p323 = pneg %p317
      %p324 = scmp.eq.s32.totalorder %s18, 7
      %p325 = por %p323, %p324
      %p326 = scmp.ne.s32.totalorder %s318, %s321
      %p327 = scmp.eq.s32.totalorder %s18, 0
      %p328 = por %p326, %p327
      %p329 = scmp.ne.s32.totalorder %s318, %s321
      %p330 = scmp.eq.s32.totalorder %s23, 7
      %p331 = por %p329, %p330
      %p332 = scmp.ne.s32.totalorder %s321, %s322
      %p333 = scmp.eq.s32.totalorder %s23, 0
      %p334 = por %p332, %p333
      %p335 = scmp.ne.s32.totalorder %s321, %s322
      %p336 = scmp.eq.s32.totalorder %s24, 7
      %p337 = por %p335, %p336
      %p339 = scmp.ne.s32.totalorder %s322, %s338
      %p340 = scmp.eq.s32.totalorder %s24, 0
      %p341 = por %p339, %p340
      %p342 = scmp.le.s32.totalorder 1, %s18
      %p343 = scmp.lt.s32.totalorder %s18, 9
      %p344 = pnand %p342, %p343
      %p345 = pneg %p344
      // Predicated region
      $region9: #{tpu_custom_call.1} parent=5 // pred_check
        _
      $region10: #{tpu_custom_call.1} parent=5 // pred_check_branch
        %347 = sbr.rel (%p344) target = $region12
      $region11: #{tpu_custom_call.1} parent=5 // pred_region
        %s348 = ssub.s32 %s18, 1
        // Predicated region
        $region13: #{tpu_custom_call.1} parent=11 // pred_check
          %p349 = pneg %p159
        $region14: #{tpu_custom_call.1} parent=11 // pred_check_branch
          %351 = sbr.rel (%p349) target = $region16
        $region15: #{tpu_custom_call.1} parent=11 // pred_region
          _
        $region16: #{tpu_custom_call.1} parent=11 // pred_fallthru
          _
        // Predicated region
        $region17: #{tpu_custom_call.1} parent=11 // pred_check
          %p352 = pneg %p180
        $region18: #{tpu_custom_call.1} parent=11 // pred_check_branch
          %354 = sbr.rel (%p352) target = $region20
        $region19: #{tpu_custom_call.1} parent=11 // pred_region
          _
        $region20: #{tpu_custom_call.1} parent=11 // pred_fallthru
          _
        // Predicated region
        $region21: #{tpu_custom_call.1} parent=11 // pred_check
          %p355 = pneg %p201
        $region22: #{tpu_custom_call.1} parent=11 // pred_check_branch
          %357 = sbr.rel (%p355) target = $region24
        $region23: #{tpu_custom_call.1} parent=11 // pred_region
          _
        $region24: #{tpu_custom_call.1} parent=11 // pred_fallthru
          _
        // Predicated region
        $region25: #{tpu_custom_call.1} parent=11 // pred_check
          %p358 = pneg %p222
        $region26: #{tpu_custom_call.1} parent=11 // pred_check_branch
          %360 = sbr.rel (%p358) target = $region28
        $region27: #{tpu_custom_call.1} parent=11 // pred_region
          _
        $region28: #{tpu_custom_call.1} parent=11 // pred_fallthru
          _
        // Predicated region
        $region29: #{tpu_custom_call.1} parent=11 // pred_check
          %p361 = pneg %p243
        $region30: #{tpu_custom_call.1} parent=11 // pred_check_branch
          %363 = sbr.rel (%p361) target = $region32
        $region31: #{tpu_custom_call.1} parent=11 // pred_region
          _
        $region32: #{tpu_custom_call.1} parent=11 // pred_fallthru
          _
        // Predicated region
        $region33: #{tpu_custom_call.1} parent=11 // pred_check
          %p364 = pneg %p264
        $region34: #{tpu_custom_call.1} parent=11 // pred_check_branch
          %366 = sbr.rel (%p364) target = $region36
        $region35: #{tpu_custom_call.1} parent=11 // pred_region
          _
        $region36: #{tpu_custom_call.1} parent=11 // pred_fallthru
          _
        // Predicated region
        $region37: #{tpu_custom_call.1} parent=11 // pred_check
          %p367 = pneg %p285
        $region38: #{tpu_custom_call.1} parent=11 // pred_check_branch
          %369 = sbr.rel (%p367) target = $region40
        $region39: #{tpu_custom_call.1} parent=11 // pred_region
          _
        $region40: #{tpu_custom_call.1} parent=11 // pred_fallthru
          _
        // Predicated region
        $region41: #{tpu_custom_call.1} parent=11 // pred_check
          %p370 = pneg %p306
        $region42: #{tpu_custom_call.1} parent=11 // pred_check_branch
          %372 = sbr.rel (%p370) target = $region44
        $region43: #{tpu_custom_call.1} parent=11 // pred_region
          _
        $region44: #{tpu_custom_call.1} parent=11 // pred_fallthru
          _
      $region12: #{tpu_custom_call.1} parent=5 // pred_fallthru
        _
      %p373 = scmp.lt.s32.totalorder %s18, 8
      // Predicated region
      $region45: #{tpu_custom_call.1} parent=5 // pred_check
        %p374 = pneg %p373
      $region46: #{tpu_custom_call.1} parent=5 // pred_check_branch
        %376 = sbr.rel (%p374) target = $region48
      $region47: #{tpu_custom_call.1} parent=5 // pred_region
        // Predicated region
        $region49: #{tpu_custom_call.1} parent=47 // pred_check
          %p377 = pneg %p52
        $region50: #{tpu_custom_call.1} parent=47 // pred_check_branch
          %379 = sbr.rel (%p377) target = $region52
        $region51: #{tpu_custom_call.1} parent=47 // pred_region
          %s380 = smul.u32 2, %s26
          %p381 = scmp.lt.s32.totalorder %s25, 1
          %s382 = scalar_select %p381, %s25, 1
          %p383 = scmp.lt.s32.totalorder %s380, 7
          %s384 = scalar_select %p383, %s380, 7
          %s385 = smul.addr %s382, 8
          %s386 = sadd.s32 %s384, %s385
          %s387 = smul.addr %s386, 8
          %s388 = scalar_lea.vmem %s0, %s387
          %s389 = smul.u32 2, %s26
        $region52: #{tpu_custom_call.1} parent=47 // pred_fallthru
          _
        // Predicated region
        $region53: #{tpu_custom_call.1} parent=47 // pred_check
          %p390 = pneg %p80
        $region54: #{tpu_custom_call.1} parent=47 // pred_check_branch
          %392 = sbr.rel (%p390) target = $region56
        $region55: #{tpu_custom_call.1} parent=47 // pred_region
          %s393 = sand.u32 %s70, 1
          %s394 = sand.u32 %s70, 1
          %s395 = smul.addr %s394, 32
          %s396 = scalar_lea.vmem [#allocation2], %s395
          %s397 = smul.u32 2, %s26
          %s398 = smul.addr %s25, 32
          %s399 = sadd.s32 %s397, %s398
          %s400 = smul.addr %s399, 4
          %s401 = scalar_lea.vmem %s1, %s400
          // Predicated region
          $region57: #{tpu_custom_call.1} parent=55 // pred_check
            _
          $region58: #{tpu_custom_call.1} parent=55 // pred_check_branch
            %403 = sbr.rel (0) target = $region60
          $region59: #{tpu_custom_call.1} parent=55 // pred_region
            // Predicated region
            $region61: #{tpu_custom_call.1} parent=59 // pred_check
              _
            $region62: #{tpu_custom_call.1} parent=59 // pred_check_branch
              %405 = sbr.rel target = $region64
            $region63: #{tpu_custom_call.1} parent=59 // pred_region
              // Predicated region
              $region76: #{tpu_custom_call.1} parent=63 // pred_check
                _
              $region77: #{tpu_custom_call.1} parent=63 // pred_check_branch
                %435 = sbr.rel (0) target = $region79
              $region78: #{tpu_custom_call.1} parent=63 // pred_region
                loop: start=0, step=1, limit=1
                $region80: #{tpu_custom_call.1} parent=78 // loop_pre_header
                  _
                $region81: #{tpu_custom_call.1} parent=78 // loop_header
                  %s437 = sphi 0, %s441
                  %p438 = scmp.ge.s32.totalorder %s437, 1
                  %s442 = sphi %s401, %s401
                  %s443 = sphi %s396, %s396
                $region82: #{tpu_custom_call.1} parent=78 // loop_header_branch
                  %440 = sbr.rel (%p438) target = $region86
                $region83: #{tpu_custom_call.1} parent=78 // loop_body
                  _
                $region84: #{tpu_custom_call.1} parent=78 // loop_footer
                  %s441 = sadd.s32 1, %s437
                $region85: #{tpu_custom_call.1} parent=78 // loop_footer_branch
                  %436 = sbr.rel target = $region81
                $region86: #{tpu_custom_call.1} parent=78 // loop_exit
                  _
                %s445 = ssub.s32 16, 1
                loop: start=0, step=1, limit=1
                $region87: #{tpu_custom_call.1} parent=78 // loop_pre_header
                  _
                $region88: #{tpu_custom_call.1} parent=78 // loop_header
                  %s447 = sphi 0, %s451
                  %p448 = scmp.ge.s32.totalorder %s447, 1
                  %s452 = sphi %s401, %s401
                  %s453 = sphi %s396, %s396
                $region89: #{tpu_custom_call.1} parent=78 // loop_header_branch
                  %450 = sbr.rel (%p448) target = $region93
                $region90: #{tpu_custom_call.1} parent=78 // loop_body
                  %v454 = vld [vmem:[%s452] sm:%s445]
                  %455 = vst [vmem:[%s453] sm:%s445] %v454
                  %v456 = vld [vmem:[%s452 + $0x4] sm:%s445]
                  %457 = vst [vmem:[%s453 + $0x4] sm:%s445] %v456
                  %v458 = vld [vmem:[%s452 + $0x20] sm:%s445]
                  %459 = vst [vmem:[%s453 + $0x8] sm:%s445] %v458
                  %v460 = vld [vmem:[%s452 + $0x24] sm:%s445]
                  %461 = vst [vmem:[%s453 + $0xc] sm:%s445] %v460
                  %v462 = vld [vmem:[%s452 + $0x40] sm:%s445]
                  %463 = vst [vmem:[%s453 + $0x10] sm:%s445] %v462
                  %v464 = vld [vmem:[%s452 + $0x44] sm:%s445]
                  %465 = vst [vmem:[%s453 + $0x14] sm:%s445] %v464
                  %v466 = vld [vmem:[%s452 + $0x60] sm:%s445]
                  %467 = vst [vmem:[%s453 + $0x18] sm:%s445] %v466
                  %v468 = vld [vmem:[%s452 + $0x64] sm:%s445]
                  %469 = vst [vmem:[%s453 + $0x1c] sm:%s445] %v468
                $region91: #{tpu_custom_call.1} parent=78 // loop_footer
                  %s451 = sadd.s32 1, %s447
                $region92: #{tpu_custom_call.1} parent=78 // loop_footer_branch
                  %446 = sbr.rel target = $region88
                $region93: #{tpu_custom_call.1} parent=78 // loop_exit
                  _
              $region79: #{tpu_custom_call.1} parent=63 // pred_fallthru
                _
            $region64: #{tpu_custom_call.1} parent=59 // pred_fallthru
              _
            // Predicated region
            $region65: #{tpu_custom_call.1} parent=59 // pred_check
              _
            $region66: #{tpu_custom_call.1} parent=59 // pred_check_branch
              %407 = sbr.rel (0) target = $region68
            $region67: #{tpu_custom_call.1} parent=59 // pred_region
              %s409 = ssub.s32 16, 1
              loop: start=0, step=1, limit=1
              $region69: #{tpu_custom_call.1} parent=67 // loop_pre_header
                _
              $region70: #{tpu_custom_call.1} parent=67 // loop_header
                %s411 = sphi 0, %s415
                %p412 = scmp.ge.s32.totalorder %s411, 1
                %s416 = sphi %s401, %s401
                %s417 = sphi %s396, %s396
              $region71: #{tpu_custom_call.1} parent=67 // loop_header_branch
                %414 = sbr.rel (%p412) target = $region75
              $region72: #{tpu_custom_call.1} parent=67 // loop_body
                %v418 = vld [vmem:[%s416] sm:%s409]
                %419 = vst [vmem:[%s417] sm:%s409] %v418
                %v420 = vld [vmem:[%s416 + $0x4] sm:%s409]
                %421 = vst [vmem:[%s417 + $0x4] sm:%s409] %v420
                %v422 = vld [vmem:[%s416 + $0x20] sm:%s409]
                %423 = vst [vmem:[%s417 + $0x8] sm:%s409] %v422
                %v424 = vld [vmem:[%s416 + $0x24] sm:%s409]
                %425 = vst [vmem:[%s417 + $0xc] sm:%s409] %v424
                %v426 = vld [vmem:[%s416 + $0x40] sm:%s409]
                %427 = vst [vmem:[%s417 + $0x10] sm:%s409] %v426
                %v428 = vld [vmem:[%s416 + $0x44] sm:%s409]
                %429 = vst [vmem:[%s417 + $0x14] sm:%s409] %v428
                %v430 = vld [vmem:[%s416 + $0x60] sm:%s409]
                %431 = vst [vmem:[%s417 + $0x18] sm:%s409] %v430
                %v432 = vld [vmem:[%s416 + $0x64] sm:%s409]
                %433 = vst [vmem:[%s417 + $0x1c] sm:%s409] %v432
              $region73: #{tpu_custom_call.1} parent=67 // loop_footer
                %s415 = sadd.s32 1, %s411
              $region74: #{tpu_custom_call.1} parent=67 // loop_footer_branch
                %410 = sbr.rel target = $region70
              $region75: #{tpu_custom_call.1} parent=67 // loop_exit
                _
            $region68: #{tpu_custom_call.1} parent=59 // pred_fallthru
              _
          $region60: #{tpu_custom_call.1} parent=55 // pred_fallthru
            _
          %470 = vnop
        $region56: #{tpu_custom_call.1} parent=47 // pred_fallthru
          _
        // Predicated region
        $region94: #{tpu_custom_call.1} parent=47 // pred_check
          %p471 = pneg %p106
        $region95: #{tpu_custom_call.1} parent=47 // pred_check_branch
          %473 = sbr.rel (%p471) target = $region97
        $region96: #{tpu_custom_call.1} parent=47 // pred_region
          %p474 = scmp.lt.s32.totalorder %s25, 1
          %s475 = scalar_select %p474, %s25, 1
          %s476 = smul.addr %s475, 32
          %s477 = smul.addr %s476, 4
          %s478 = scalar_lea.vmem %s2, %s477
        $region97: #{tpu_custom_call.1} parent=47 // pred_fallthru
          _
        // Predicated region
        $region98: #{tpu_custom_call.1} parent=47 // pred_check
          %p479 = pneg %p132
        $region99: #{tpu_custom_call.1} parent=47 // pred_check_branch
          %481 = sbr.rel (%p479) target = $region101
        $region100: #{tpu_custom_call.1} parent=47 // pred_region
          %p482 = scmp.lt.s32.totalorder %s25, 1
          %s483 = scalar_select %p482, %s25, 1
          %s484 = smul.addr %s483, 32
          %s485 = smul.addr %s484, 4
          %s486 = scalar_lea.vmem %s3, %s485
        $region101: #{tpu_custom_call.1} parent=47 // pred_fallthru
          _
      $region48: #{tpu_custom_call.1} parent=5 // pred_fallthru
        _
      %p487 = scmp.le.s32.totalorder 1, %s18
      %p488 = scmp.lt.s32.totalorder %s18, 9
      %p489 = pnand %p487, %p488
      %p490 = pneg %p489
      // Predicated region
      $region102: #{tpu_custom_call.1} parent=5 // pred_check
        _
      $region103: #{tpu_custom_call.1} parent=5 // pred_check_branch
        %492 = sbr.rel (%p489) target = $region105
      $region104: #{tpu_custom_call.1} parent=5 // pred_region
        %s493 = ssub.s32 %s18, 1
        %s494 = sand.u32 %s73, 1
        %s495 = sand.u32 %s73, 1
        %s496 = smul.addr %s495, 32
        %s497 = scalar_lea.vmem [#allocation2], %s496
        // Predicated region
        $region106: #{tpu_custom_call.1} parent=104 // pred_check
          %p498 = pneg %p86
        $region107: #{tpu_custom_call.1} parent=104 // pred_check_branch
          %500 = sbr.rel (%p498) target = $region109
        $region108: #{tpu_custom_call.1} parent=104 // pred_region
          _
        $region109: #{tpu_custom_call.1} parent=104 // pred_fallthru
          _
        %s501 = smul.u32 2, %s28
        %p502 = scmp.lt.s32.totalorder %s27, 1
        %s503 = scalar_select %p502, %s27, 1
        %p504 = scmp.lt.s32.totalorder %s501, 7
        %s505 = scalar_select %p504, %s501, 7
        %s506 = smul.addr %s503, 8
        %s507 = sadd.s32 %s505, %s506
        %s508 = smul.addr %s507, 8
        %s509 = scalar_lea.vmem %s0, %s508
        %p510 = pneg %p58
        %p511 = pneg %p55
        %s512 = sand.u32 %s73, 1
        %s513 = sand.u32 %s73, 1
        %s514 = smul.addr %s513, 32
        %s515 = scalar_lea.vmem [#allocation2], %s514
        %p516 = pneg %p86
        %p517 = pneg %p83
        %p518 = scmp.lt.s32.totalorder %s27, 1
        %s519 = scalar_select %p518, %s27, 1
        %s520 = smul.addr %s519, 32
        %s521 = smul.addr %s520, 4
        %s522 = scalar_lea.vmem %s2, %s521
        %p523 = pneg %p112
        %p524 = pneg %p109
        %p525 = scmp.lt.s32.totalorder %s27, 1
        %s526 = scalar_select %p525, %s27, 1
        %s527 = smul.addr %s526, 32
        %s528 = smul.addr %s527, 4
        %s529 = scalar_lea.vmem %s3, %s528
        %p530 = pneg %p138
        %p531 = pneg %p135
        %p532 = pneg %p159
        %p533 = pneg %p156
        %p534 = pneg %p180
        %p535 = pneg %p177
        %p536 = pneg %p201
        %p537 = pneg %p198
        %p538 = pneg %p222
        %p539 = pneg %p219
        %p540 = pneg %p243
        %p541 = pneg %p240
        %p542 = pneg %p264
        %p543 = pneg %p261
        %p544 = pneg %p285
        %p545 = pneg %p282
        %p546 = pneg %p306
        %p547 = pneg %p303
        %p548 = pneg %p334
        %p549 = pneg %p331
        %s550 = smul.u32 2, %s28
        %p551 = scmp.lt.s32.totalorder %s27, 1
        %s552 = scalar_select %p551, %s27, 1
        %p553 = scmp.lt.s32.totalorder %s550, 7
        %s554 = scalar_select %p553, %s550, 7
        %s555 = smul.addr %s552, 8
        %s556 = sadd.s32 %s554, %s555
        %s557 = smul.addr %s556, 8
        %s558 = scalar_lea.vmem %s12, %s557
        %s559 = smul.u32 2, %s28
        %p560 = scmp.lt.s32.totalorder %s27, 1
        %s561 = scalar_select %p560, %s27, 1
        %p562 = scmp.lt.s32.totalorder %s559, 7
        %s563 = scalar_select %p562, %s559, 7
        %s564 = smul.addr %s561, 8
        %s565 = sadd.s32 %s563, %s564
        %s566 = smul.addr %s565, 8
        %s567 = scalar_lea.vmem %s0, %s566
        %s568 = smul.u32 2, %s28
        %s569 = smul.u32 2, %s28
        %p570 = scmp.lt.s32.totalorder %s27, 1
        %s571 = scalar_select %p570, %s27, 1
        %s572 = smul.addr %s571, 32
        %s573 = smul.addr %s572, 4
        %s574 = scalar_lea.vmem %s2, %s573
        %p575 = scmp.lt.s32.totalorder %s27, 1
        %s576 = scalar_select %p575, %s27, 1
        %s577 = smul.addr %s576, 32
        %s578 = smul.addr %s577, 4
        %s579 = scalar_lea.vmem %s3, %s578
        %s580 = smul.u32 2, %s28
        %p581 = scmp.lt.s32.totalorder %s27, 1
        %s582 = scalar_select %p581, %s27, 1
        %p583 = scmp.lt.s32.totalorder %s580, 7
        %s584 = scalar_select %p583, %s580, 7
        %s585 = smul.addr %s582, 8
        %s586 = sadd.s32 %s584, %s585
        %s587 = smul.addr %s586, 8
        %s588 = scalar_lea.vmem %s12, %s587
        %s589 = smul.u32 2, %s28
        %v591 = vld [vmem:[%s567] sm:$0xff]
        %v592 = vld [vmem:[%s567 + $0x8] sm:$0xff]
        %v593 = vld [vmem:[%s497] sm:$0xf]
        %v594 = vld [vmem:[%s497 + $0x4] sm:$0xf]
        %v595 = vld [vmem:[%s497 + $0x8] sm:$0xf]
        %v596 = vld [vmem:[%s497 + $0xc] sm:$0xf]
        %v597 = vld [vmem:[%s497 + $0x10] sm:$0xf]
        %v598 = vld [vmem:[%s497 + $0x14] sm:$0xf]
        %v599 = vld [vmem:[%s497 + $0x18] sm:$0xf]
        %v600 = vld [vmem:[%s497 + $0x1c] sm:$0xf]
        %v601 = vlaneseq
        %v602 = vshrl.u32 %v601, 7
        %v603 = vadd.s32 %v602, 8
        %v604 = vlaneseq
        %v605 = vand.u32 %v604, 127
        %vm606 = vcmp.le.s32.totalorder %v605, %v602
        %vm607 = vcmp.le.s32.totalorder %v605, %v603
        // While loop
        $region110: #{tpu_custom_call.1} parent=104 // loop_pre_header
          _
        $region111: #{tpu_custom_call.1} parent=104 // loop_header
          %s609 = sphi 0, %s611
          %p610 = scmp.ge.s32.totalorder %s609, %s28
          %v614 = vphi -1e+30, %v807
          %v615 = vphi -1e+30, %v808
          %v616 = vphi -1e+30, %v809
          %v617 = vphi -1e+30, %v810
          %v618 = vphi -1e+30, %v811
          %v619 = vphi -1e+30, %v812
          %v620 = vphi -1e+30, %v813
          %v621 = vphi -1e+30, %v814
          %v622 = vphi 0.0, %v895
          %v623 = vphi 0.0, %v896
          %v624 = vphi 0.0, %v897
          %v625 = vphi 0.0, %v898
          %v626 = vphi 0.0, %v899
          %v627 = vphi 0.0, %v900
          %v628 = vphi 0.0, %v901
          %v629 = vphi 0.0, %v902
          %v630 = vphi 0.0, %v1031
          %v631 = vphi 0.0, %v1032
          %v632 = vphi 0.0, %v1033
          %v633 = vphi 0.0, %v1034
          %v634 = vphi 0.0, %v1035
          %v635 = vphi 0.0, %v1036
          %v636 = vphi 0.0, %v1037
          %v637 = vphi 0.0, %v1038
        $region112: #{tpu_custom_call.1} parent=104 // loop_header_branch
          %613 = sbr.rel (%p610) target = $region116
        $region113: #{tpu_custom_call.1} parent=104 // loop_body
          %s638 = smul.u32 %s609, 16
          %s639 = sshra.s32 %s638, 3
          %s640 = sand.u32 %s638, 7
          %s641 = smul.addr %s639, 4
          %s642 = scalar_lea.vmem %s574, %s641
          %v643 = vld [vmem:[%s642] sm:$0xf]
          %v644 = vld [vmem:[%s642 + $0x4] sm:$0xf]
          %v645 = vld [vmem:[%s642 + $0x20] sm:$0xf]
          %v646 = vld [vmem:[%s642 + $0x24] sm:$0xf]
          %v647 = vld [vmem:[%s642 + $0x40] sm:$0xf]
          %v648 = vld [vmem:[%s642 + $0x44] sm:$0xf]
          %v649 = vld [vmem:[%s642 + $0x60] sm:$0xf]
          %v650 = vld [vmem:[%s642 + $0x64] sm:$0xf]
          %s651 = smul.addr %s639, 4
          %s652 = scalar_lea.vmem %s579, %s651
          %v653 = vld [vmem:[%s652] sm:$0xf]
          %v654 = vld [vmem:[%s652 + $0x4] sm:$0xf]
          %v655 = vld [vmem:[%s652 + $0x20] sm:$0xf]
          %v656 = vld [vmem:[%s652 + $0x24] sm:$0xf]
          %v657 = vld [vmem:[%s652 + $0x40] sm:$0xf]
          %v658 = vld [vmem:[%s652 + $0x44] sm:$0xf]
          %v659 = vld [vmem:[%s652 + $0x60] sm:$0xf]
          %v660 = vld [vmem:[%s652 + $0x64] sm:$0xf]
          %v663 = vunpack.c.l.b16 %v593
          %v664 = vunpack.c.l.b16 %v594
          %v665 = vpack.c.b16 %v664, %v663
          %v668 = vunpack.c.l.b16 %v643
          %v669 = vunpack.c.l.b16 %v644
          %v670 = vpack.c.b16 %v669, %v668
          %vm671 = vcmask 64512
          %v673 = vsel %vm671, %v665, 0
          %v676 = vsel %vm671, %v670, 0
          %678 = vmatpush.bf16.xpose.msra.mxu0 0
          %679 = vmatpush.bf16.xpose.msra.mxu0 0
          %680 = vmatpush.bf16.xpose.msra.mxu0 0
          %681 = vmatpush.bf16.xpose.msra.mxu0 0
          %682 = vmatpush.bf16.xpose.msra.mxu0 0
          %683 = vmatpush.bf16.xpose.msra.mxu0 0
          %684 = vmatpush.bf16.xpose.msra.mxu0 0
          %685 = vmatpush.bf16.xpose.msra.mxu0 %v676
          %686 = vmatmul.bf16.gmra.mxu0 %v673
          %v687 = vpop.f32.mrf.mxu0
          %v688 = vadd.f32 0.0, %v687
          %v689 = vpop.f32.mrf.mxu0
          %v690 = vadd.f32 0.0, %v689
          %691 = vdwg.mxu0
          %v694 = vunpack.c.l.b16 %v595
          %v695 = vunpack.c.l.b16 %v596
          %v696 = vpack.c.b16 %v695, %v694
          %v699 = vunpack.c.l.b16 %v645
          %v700 = vunpack.c.l.b16 %v646
          %v701 = vpack.c.b16 %v700, %v699
          %v703 = vsel %vm671, %v696, 0
          %v706 = vsel %vm671, %v701, 0
          %708 = vmatpush.bf16.xpose.msra.mxu0 0
          %709 = vmatpush.bf16.xpose.msra.mxu0 0
          %710 = vmatpush.bf16.xpose.msra.mxu0 0
          %711 = vmatpush.bf16.xpose.msra.mxu0 0
          %712 = vmatpush.bf16.xpose.msra.mxu0 0
          %713 = vmatpush.bf16.xpose.msra.mxu0 0
          %714 = vmatpush.bf16.xpose.msra.mxu0 0
          %715 = vmatpush.bf16.xpose.msra.mxu0 %v706
          %716 = vmatmul.bf16.gmra.mxu0 %v703
          %v717 = vpop.f32.mrf.mxu0
          %v718 = vadd.f32 0.0, %v717
          %v719 = vpop.f32.mrf.mxu0
          %v720 = vadd.f32 0.0, %v719
          %721 = vdwg.mxu0
          %v724 = vunpack.c.l.b16 %v597
          %v725 = vunpack.c.l.b16 %v598
          %v726 = vpack.c.b16 %v725, %v724
          %v729 = vunpack.c.l.b16 %v647
          %v730 = vunpack.c.l.b16 %v648
          %v731 = vpack.c.b16 %v730, %v729
          %v733 = vsel %vm671, %v726, 0
          %v736 = vsel %vm671, %v731, 0
          %738 = vmatpush.bf16.xpose.msra.mxu0 0
          %739 = vmatpush.bf16.xpose.msra.mxu0 0
          %740 = vmatpush.bf16.xpose.msra.mxu0 0
          %741 = vmatpush.bf16.xpose.msra.mxu0 0
          %742 = vmatpush.bf16.xpose.msra.mxu0 0
          %743 = vmatpush.bf16.xpose.msra.mxu0 0
          %744 = vmatpush.bf16.xpose.msra.mxu0 0
          %745 = vmatpush.bf16.xpose.msra.mxu0 %v736
          %746 = vmatmul.bf16.gmra.mxu0 %v733
          %v747 = vpop.f32.mrf.mxu0
          %v748 = vadd.f32 0.0, %v747
          %v749 = vpop.f32.mrf.mxu0
          %v750 = vadd.f32 0.0, %v749
          %751 = vdwg.mxu0
          %v754 = vunpack.c.l.b16 %v599
          %v755 = vunpack.c.l.b16 %v600
          %v756 = vpack.c.b16 %v755, %v754
          %v759 = vunpack.c.l.b16 %v649
          %v760 = vunpack.c.l.b16 %v650
          %v761 = vpack.c.b16 %v760, %v759
          %v763 = vsel %vm671, %v756, 0
          %v766 = vsel %vm671, %v761, 0
          %768 = vmatpush.bf16.xpose.msra.mxu0 0
          %769 = vmatpush.bf16.xpose.msra.mxu0 0
          %770 = vmatpush.bf16.xpose.msra.mxu0 0
          %771 = vmatpush.bf16.xpose.msra.mxu0 0
          %772 = vmatpush.bf16.xpose.msra.mxu0 0
          %773 = vmatpush.bf16.xpose.msra.mxu0 0
          %774 = vmatpush.bf16.xpose.msra.mxu0 0
          %775 = vmatpush.bf16.xpose.msra.mxu0 %v766
          %776 = vmatmul.bf16.gmra.mxu0 %v763
          %v777 = vpop.f32.mrf.mxu0
          %v778 = vadd.f32 0.0, %v777
          %v779 = vpop.f32.mrf.mxu0
          %v780 = vadd.f32 0.0, %v779
          %781 = vdwg.mxu0
          %vm782 = vcmask 130048
          %v783 = vsel %vm782, %v688, -inf
          %784 = vmax.xlane.f32.xlu0 %v783
          %v785 = vpop.xlane.xlu0 %784
          %v786 = vsel %vm782, %v690, -inf
          %787 = vmax.xlane.f32.xlu0 %v786
          %v788 = vpop.xlane.xlu0 %787
          %v789 = vsel %vm782, %v718, -inf
          %790 = vmax.xlane.f32.xlu0 %v789
          %v791 = vpop.xlane.xlu0 %790
          %v792 = vsel %vm782, %v720, -inf
          %793 = vmax.xlane.f32.xlu0 %v792
          %v794 = vpop.xlane.xlu0 %793
          %v795 = vsel %vm782, %v748, -inf
          %796 = vmax.xlane.f32.xlu0 %v795
          %v797 = vpop.xlane.xlu0 %796
          %v798 = vsel %vm782, %v750, -inf
          %799 = vmax.xlane.f32.xlu0 %v798
          %v800 = vpop.xlane.xlu0 %799
          %v801 = vsel %vm782, %v778, -inf
          %802 = vmax.xlane.f32.xlu0 %v801
          %v803 = vpop.xlane.xlu0 %802
          %v804 = vsel %vm782, %v780, -inf
          %805 = vmax.xlane.f32.xlu0 %v804
          %v806 = vpop.xlane.xlu0 %805
          %v807 = vmax.f32 %v614, %v785
          %v808 = vmax.f32 %v615, %v788
          %v809 = vmax.f32 %v616, %v791
          %v810 = vmax.f32 %v617, %v794
          %v811 = vmax.f32 %v618, %v797
          %v812 = vmax.f32 %v619, %v800
          %v813 = vmax.f32 %v620, %v803
          %v814 = vmax.f32 %v621, %v806
          %v815 = vsub.f32 %v614, %v807
          %v816 = vsub.f32 %v615, %v808
          %v817 = vsub.f32 %v616, %v809
          %v818 = vsub.f32 %v617, %v810
          %v819 = vsub.f32 %v618, %v811
          %v820 = vsub.f32 %v619, %v812
          %v821 = vsub.f32 %v620, %v813
          %v822 = vsub.f32 %v621, %v814
          %v823 = vmul.f32 %v815, 1.442695
          %v824 = vpow.pop %v823
          %v825 = vmul.f32 %v816, 1.442695
          %v826 = vpow.pop %v825
          %v827 = vmul.f32 %v817, 1.442695
          %v828 = vpow.pop %v827
          %v829 = vmul.f32 %v818, 1.442695
          %v830 = vpow.pop %v829
          %v831 = vmul.f32 %v819, 1.442695
          %v832 = vpow.pop %v831
          %v833 = vmul.f32 %v820, 1.442695
          %v834 = vpow.pop %v833
          %v835 = vmul.f32 %v821, 1.442695
          %v836 = vpow.pop %v835
          %v837 = vmul.f32 %v822, 1.442695
          %v838 = vpow.pop %v837
          %v839 = vsub.f32 %v688, %v807
          %v840 = vsub.f32 %v690, %v808
          %v841 = vsub.f32 %v718, %v809
          %v842 = vsub.f32 %v720, %v810
          %v843 = vsub.f32 %v748, %v811
          %v844 = vsub.f32 %v750, %v812
          %v845 = vsub.f32 %v778, %v813
          %v846 = vsub.f32 %v780, %v814
          %v847 = vmul.f32 %v839, 1.442695
          %v848 = vpow.pop %v847
          %v849 = vmul.f32 %v840, 1.442695
          %v850 = vpow.pop %v849
          %v851 = vmul.f32 %v841, 1.442695
          %v852 = vpow.pop %v851
          %v853 = vmul.f32 %v842, 1.442695
          %v854 = vpow.pop %v853
          %v855 = vmul.f32 %v843, 1.442695
          %v856 = vpow.pop %v855
          %v857 = vmul.f32 %v844, 1.442695
          %v858 = vpow.pop %v857
          %v859 = vmul.f32 %v845, 1.442695
          %v860 = vpow.pop %v859
          %v861 = vmul.f32 %v846, 1.442695
          %v862 = vpow.pop %v861
          %v863 = vmul.f32 %v824, %v622
          %v864 = vmul.f32 %v826, %v623
          %v865 = vmul.f32 %v828, %v624
          %v866 = vmul.f32 %v830, %v625
          %v867 = vmul.f32 %v832, %v626
          %v868 = vmul.f32 %v834, %v627
          %v869 = vmul.f32 %v836, %v628
          %v870 = vmul.f32 %v838, %v629
          %v871 = vsel %vm782, %v848, 0.0
          %872 = vadd.xlane.f32.xlu0 %v871
          %v873 = vpop.xlane.xlu0 %872
          %v874 = vsel %vm782, %v850, 0.0
          %875 = vadd.xlane.f32.xlu0 %v874
          %v876 = vpop.xlane.xlu0 %875
          %v877 = vsel %vm782, %v852, 0.0
          %878 = vadd.xlane.f32.xlu0 %v877
          %v879 = vpop.xlane.xlu0 %878
          %v880 = vsel %vm782, %v854, 0.0
          %881 = vadd.xlane.f32.xlu0 %v880
          %v882 = vpop.xlane.xlu0 %881
          %v883 = vsel %vm782, %v856, 0.0
          %884 = vadd.xlane.f32.xlu0 %v883
          %v885 = vpop.xlane.xlu0 %884
          %v886 = vsel %vm782, %v858, 0.0
          %887 = vadd.xlane.f32.xlu0 %v886
          %v888 = vpop.xlane.xlu0 %887
          %v889 = vsel %vm782, %v860, 0.0
          %890 = vadd.xlane.f32.xlu0 %v889
          %v891 = vpop.xlane.xlu0 %890
          %v892 = vsel %vm782, %v862, 0.0
          %893 = vadd.xlane.f32.xlu0 %v892
          %v894 = vpop.xlane.xlu0 %893
          %v895 = vadd.f32 %v863, %v873
          %v896 = vadd.f32 %v864, %v876
          %v897 = vadd.f32 %v865, %v879
          %v898 = vadd.f32 %v866, %v882
          %v899 = vadd.f32 %v867, %v885
          %v900 = vadd.f32 %v868, %v888
          %v901 = vadd.f32 %v869, %v891
          %v902 = vadd.f32 %v870, %v894
          %v903 = vmul.f32 %v824, %v630
          %v904 = vmul.f32 %v826, %v631
          %v905 = vmul.f32 %v828, %v632
          %v906 = vmul.f32 %v830, %v633
          %v907 = vmul.f32 %v832, %v634
          %v908 = vmul.f32 %v834, %v635
          %v909 = vmul.f32 %v836, %v636
          %v910 = vmul.f32 %v838, %v637
          %v911 = vpack.c.bf16 %v848, %v848
          %v912 = vpack.c.bf16 %v850, %v850
          %v913 = vpack.c.bf16 %v852, %v852
          %v914 = vpack.c.bf16 %v854, %v854
          %v915 = vpack.c.bf16 %v856, %v856
          %v916 = vpack.c.bf16 %v858, %v858
          %v917 = vpack.c.bf16 %v860, %v860
          %v918 = vpack.c.bf16 %v862, %v862
          %v921 = vunpack.c.l.b16 %v911
          %v922 = vunpack.c.l.b16 %v912
          %v923 = vpack.c.b16 %v922, %v921
          %v926 = vunpack.c.l.b16 %v653
          %v927 = vunpack.c.l.b16 %v654
          %v928 = vpack.c.b16 %v927, %v926
          %v931 = vsel %vm782, %v923, 0
          %933 = vmatpush.bf16.msra.mxu0 0
          %934 = vmatpush.bf16.msra.mxu0 0
          %935 = vmatpush.bf16.msra.mxu0 0
          %936 = vmatpush.bf16.msra.mxu0 0
          %937 = vmatpush.bf16.msra.mxu0 0
          %938 = vmatpush.bf16.msra.mxu0 0
          %939 = vmatpush.bf16.msra.mxu0 0
          %940 = vmatpush.bf16.msra.mxu0 %v928
          %941 = vmatmul.bf16.gmra.mxu0 %v931
          %v942 = vpop.f32.mrf.mxu0
          %v943 = vadd.f32 0.0, %v942
          %v944 = vpop.f32.mrf.mxu0
          %v945 = vadd.f32 0.0, %v944
          %946 = vdwg.mxu0
          %v949 = vunpack.c.l.b16 %v913
          %v950 = vunpack.c.l.b16 %v914
          %v951 = vpack.c.b16 %v950, %v949
          %v954 = vunpack.c.l.b16 %v655
          %v955 = vunpack.c.l.b16 %v656
          %v956 = vpack.c.b16 %v955, %v954
          %v959 = vsel %vm782, %v951, 0
          %961 = vmatpush.bf16.msra.mxu0 0
          %962 = vmatpush.bf16.msra.mxu0 0
          %963 = vmatpush.bf16.msra.mxu0 0
          %964 = vmatpush.bf16.msra.mxu0 0
          %965 = vmatpush.bf16.msra.mxu0 0
          %966 = vmatpush.bf16.msra.mxu0 0
          %967 = vmatpush.bf16.msra.mxu0 0
          %968 = vmatpush.bf16.msra.mxu0 %v956
          %969 = vmatmul.bf16.gmra.mxu0 %v959
          %v970 = vpop.f32.mrf.mxu0
          %v971 = vadd.f32 0.0, %v970
          %v972 = vpop.f32.mrf.mxu0
          %v973 = vadd.f32 0.0, %v972
          %974 = vdwg.mxu0
          %v977 = vunpack.c.l.b16 %v915
          %v978 = vunpack.c.l.b16 %v916
          %v979 = vpack.c.b16 %v978, %v977
          %v982 = vunpack.c.l.b16 %v657
          %v983 = vunpack.c.l.b16 %v658
          %v984 = vpack.c.b16 %v983, %v982
          %v987 = vsel %vm782, %v979, 0
          %989 = vmatpush.bf16.msra.mxu0 0
          %990 = vmatpush.bf16.msra.mxu0 0
          %991 = vmatpush.bf16.msra.mxu0 0
          %992 = vmatpush.bf16.msra.mxu0 0
          %993 = vmatpush.bf16.msra.mxu0 0
          %994 = vmatpush.bf16.msra.mxu0 0
          %995 = vmatpush.bf16.msra.mxu0 0
          %996 = vmatpush.bf16.msra.mxu0 %v984
          %997 = vmatmul.bf16.gmra.mxu0 %v987
          %v998 = vpop.f32.mrf.mxu0
          %v999 = vadd.f32 0.0, %v998
          %v1000 = vpop.f32.mrf.mxu0
          %v1001 = vadd.f32 0.0, %v1000
          %1002 = vdwg.mxu0
          %v1005 = vunpack.c.l.b16 %v917
          %v1006 = vunpack.c.l.b16 %v918
          %v1007 = vpack.c.b16 %v1006, %v1005
          %v1010 = vunpack.c.l.b16 %v659
          %v1011 = vunpack.c.l.b16 %v660
          %v1012 = vpack.c.b16 %v1011, %v1010
          %v1015 = vsel %vm782, %v1007, 0
          %1017 = vmatpush.bf16.msra.mxu0 0
          %1018 = vmatpush.bf16.msra.mxu0 0
          %1019 = vmatpush.bf16.msra.mxu0 0
          %1020 = vmatpush.bf16.msra.mxu0 0
          %1021 = vmatpush.bf16.msra.mxu0 0
          %1022 = vmatpush.bf16.msra.mxu0 0
          %1023 = vmatpush.bf16.msra.mxu0 0
          %1024 = vmatpush.bf16.msra.mxu0 %v1012
          %1025 = vmatmul.bf16.gmra.mxu0 %v1015
          %v1026 = vpop.f32.mrf.mxu0
          %v1027 = vadd.f32 0.0, %v1026
          %v1028 = vpop.f32.mrf.mxu0
          %v1029 = vadd.f32 0.0, %v1028
          %1030 = vdwg.mxu0
          %v1031 = vadd.f32 %v903, %v943
          %v1032 = vadd.f32 %v904, %v945
          %v1033 = vadd.f32 %v905, %v971
          %v1034 = vadd.f32 %v906, %v973
          %v1035 = vadd.f32 %v907, %v999
          %v1036 = vadd.f32 %v908, %v1001
          %v1037 = vadd.f32 %v909, %v1027
          %v1038 = vadd.f32 %v910, %v1029
        $region114: #{tpu_custom_call.1} parent=104 // loop_footer
          %s611 = sadd.s32 %s609, 1
        $region115: #{tpu_custom_call.1} parent=104 // loop_footer_branch
          %608 = sbr.rel target = $region111
        $region116: #{tpu_custom_call.1} parent=104 // loop_exit
          _
        %s1039 = smul.u32 %s28, 16
        %s1040 = sshra.s32 %s1039, 3
        %s1041 = sand.u32 %s1039, 7
        %s1042 = smul.addr %s1040, 4
        %s1043 = scalar_lea.vmem %s574, %s1042
        %v1044 = vld [vmem:[%s1043] sm:$0xf]
        %v1045 = vld [vmem:[%s1043 + $0x4] sm:$0xf]
        %v1046 = vld [vmem:[%s1043 + $0x20] sm:$0xf]
        %v1047 = vld [vmem:[%s1043 + $0x24] sm:$0xf]
        %v1048 = vld [vmem:[%s1043 + $0x40] sm:$0xf]
        %v1049 = vld [vmem:[%s1043 + $0x44] sm:$0xf]
        %v1050 = vld [vmem:[%s1043 + $0x60] sm:$0xf]
        %v1051 = vld [vmem:[%s1043 + $0x64] sm:$0xf]
        %s1052 = smul.addr %s1040, 4
        %s1053 = scalar_lea.vmem %s579, %s1052
        %v1054 = vld [vmem:[%s1053] sm:$0xf]
        %v1055 = vld [vmem:[%s1053 + $0x4] sm:$0xf]
        %v1056 = vld [vmem:[%s1053 + $0x20] sm:$0xf]
        %v1057 = vld [vmem:[%s1053 + $0x24] sm:$0xf]
        %v1058 = vld [vmem:[%s1053 + $0x40] sm:$0xf]
        %v1059 = vld [vmem:[%s1053 + $0x44] sm:$0xf]
        %v1060 = vld [vmem:[%s1053 + $0x60] sm:$0xf]
        %v1061 = vld [vmem:[%s1053 + $0x64] sm:$0xf]
        %v1064 = vunpack.c.l.b16 %v593
        %v1065 = vunpack.c.l.b16 %v594
        %v1066 = vpack.c.b16 %v1065, %v1064
        %v1069 = vunpack.c.l.b16 %v1044
        %v1070 = vunpack.c.l.b16 %v1045
        %v1071 = vpack.c.b16 %v1070, %v1069
        %vm1072 = vcmask 64512
        %v1074 = vsel %vm1072, %v1066, 0
        %v1077 = vsel %vm1072, %v1071, 0
        %1079 = vmatpush.bf16.xpose.msra.mxu0 0
        %1080 = vmatpush.bf16.xpose.msra.mxu0 0
        %1081 = vmatpush.bf16.xpose.msra.mxu0 0
        %1082 = vmatpush.bf16.xpose.msra.mxu0 0
        %1083 = vmatpush.bf16.xpose.msra.mxu0 0
        %1084 = vmatpush.bf16.xpose.msra.mxu0 0
        %1085 = vmatpush.bf16.xpose.msra.mxu0 0
        %1086 = vmatpush.bf16.xpose.msra.mxu0 %v1077
        %1087 = vmatmul.bf16.gmra.mxu0 %v1074
        %v1088 = vpop.f32.mrf.mxu0
        %v1089 = vadd.f32 0.0, %v1088
        %v1090 = vpop.f32.mrf.mxu0
        %v1091 = vadd.f32 0.0, %v1090
        %1092 = vdwg.mxu0
        %v1095 = vunpack.c.l.b16 %v595
        %v1096 = vunpack.c.l.b16 %v596
        %v1097 = vpack.c.b16 %v1096, %v1095
        %v1100 = vunpack.c.l.b16 %v1046
        %v1101 = vunpack.c.l.b16 %v1047
        %v1102 = vpack.c.b16 %v1101, %v1100
        %v1104 = vsel %vm1072, %v1097, 0
        %v1107 = vsel %vm1072, %v1102, 0
        %1109 = vmatpush.bf16.xpose.msra.mxu0 0
        %1110 = vmatpush.bf16.xpose.msra.mxu0 0
        %1111 = vmatpush.bf16.xpose.msra.mxu0 0
        %1112 = vmatpush.bf16.xpose.msra.mxu0 0
        %1113 = vmatpush.bf16.xpose.msra.mxu0 0
        %1114 = vmatpush.bf16.xpose.msra.mxu0 0
        %1115 = vmatpush.bf16.xpose.msra.mxu0 0
        %1116 = vmatpush.bf16.xpose.msra.mxu0 %v1107
        %1117 = vmatmul.bf16.gmra.mxu0 %v1104
        %v1118 = vpop.f32.mrf.mxu0
        %v1119 = vadd.f32 0.0, %v1118
        %v1120 = vpop.f32.mrf.mxu0
        %v1121 = vadd.f32 0.0, %v1120
        %1122 = vdwg.mxu0
        %v1125 = vunpack.c.l.b16 %v597
        %v1126 = vunpack.c.l.b16 %v598
        %v1127 = vpack.c.b16 %v1126, %v1125
        %v1130 = vunpack.c.l.b16 %v1048
        %v1131 = vunpack.c.l.b16 %v1049
        %v1132 = vpack.c.b16 %v1131, %v1130
        %v1134 = vsel %vm1072, %v1127, 0
        %v1137 = vsel %vm1072, %v1132, 0
        %1139 = vmatpush.bf16.xpose.msra.mxu0 0
        %1140 = vmatpush.bf16.xpose.msra.mxu0 0
        %1141 = vmatpush.bf16.xpose.msra.mxu0 0
        %1142 = vmatpush.bf16.xpose.msra.mxu0 0
        %1143 = vmatpush.bf16.xpose.msra.mxu0 0
        %1144 = vmatpush.bf16.xpose.msra.mxu0 0
        %1145 = vmatpush.bf16.xpose.msra.mxu0 0
        %1146 = vmatpush.bf16.xpose.msra.mxu0 %v1137
        %1147 = vmatmul.bf16.gmra.mxu0 %v1134
        %v1148 = vpop.f32.mrf.mxu0
        %v1149 = vadd.f32 0.0, %v1148
        %v1150 = vpop.f32.mrf.mxu0
        %v1151 = vadd.f32 0.0, %v1150
        %1152 = vdwg.mxu0
        %v1155 = vunpack.c.l.b16 %v599
        %v1156 = vunpack.c.l.b16 %v600
        %v1157 = vpack.c.b16 %v1156, %v1155
        %v1160 = vunpack.c.l.b16 %v1050
        %v1161 = vunpack.c.l.b16 %v1051
        %v1162 = vpack.c.b16 %v1161, %v1160
        %v1164 = vsel %vm1072, %v1157, 0
        %v1167 = vsel %vm1072, %v1162, 0
        %1169 = vmatpush.bf16.xpose.msra.mxu0 0
        %1170 = vmatpush.bf16.xpose.msra.mxu0 0
        %1171 = vmatpush.bf16.xpose.msra.mxu0 0
        %1172 = vmatpush.bf16.xpose.msra.mxu0 0
        %1173 = vmatpush.bf16.xpose.msra.mxu0 0
        %1174 = vmatpush.bf16.xpose.msra.mxu0 0
        %1175 = vmatpush.bf16.xpose.msra.mxu0 0
        %1176 = vmatpush.bf16.xpose.msra.mxu0 %v1167
        %1177 = vmatmul.bf16.gmra.mxu0 %v1164
        %v1178 = vpop.f32.mrf.mxu0
        %v1179 = vadd.f32 0.0, %v1178
        %v1180 = vpop.f32.mrf.mxu0
        %v1181 = vadd.f32 0.0, %v1180
        %1182 = vdwg.mxu0
        %v1183 = vsel %vm606, 1, 0
        %v1184 = vsel %vm607, 1, 0
        %vm1185 = vcmp.eq.s32.totalorder %v1183, 1
        %vm1186 = vcmp.eq.s32.totalorder %v1184, 1
        %v1187 = vsel %vm1185, %v1089, -1e+30
        %v1188 = vsel %vm1186, %v1091, -1e+30
        %v1189 = vsel %vm1185, %v1119, -1e+30
        %v1190 = vsel %vm1186, %v1121, -1e+30
        %v1191 = vsel %vm1185, %v1149, -1e+30
        %v1192 = vsel %vm1186, %v1151, -1e+30
        %v1193 = vsel %vm1185, %v1179, -1e+30
        %v1194 = vsel %vm1186, %v1181, -1e+30
        %vm1195 = vcmask 130048
        %v1196 = vsel %vm1195, %v1187, -inf
        %1197 = vmax.xlane.f32.xlu0 %v1196
        %v1198 = vpop.xlane.xlu0 %1197
        %v1199 = vsel %vm1195, %v1188, -inf
        %1200 = vmax.xlane.f32.xlu0 %v1199
        %v1201 = vpop.xlane.xlu0 %1200
        %v1202 = vsel %vm1195, %v1189, -inf
        %1203 = vmax.xlane.f32.xlu0 %v1202
        %v1204 = vpop.xlane.xlu0 %1203
        %v1205 = vsel %vm1195, %v1190, -inf
        %1206 = vmax.xlane.f32.xlu0 %v1205
        %v1207 = vpop.xlane.xlu0 %1206
        %v1208 = vsel %vm1195, %v1191, -inf
        %1209 = vmax.xlane.f32.xlu0 %v1208
        %v1210 = vpop.xlane.xlu0 %1209
        %v1211 = vsel %vm1195, %v1192, -inf
        %1212 = vmax.xlane.f32.xlu0 %v1211
        %v1213 = vpop.xlane.xlu0 %1212
        %v1214 = vsel %vm1195, %v1193, -inf
        %1215 = vmax.xlane.f32.xlu0 %v1214
        %v1216 = vpop.xlane.xlu0 %1215
        %v1217 = vsel %vm1195, %v1194, -inf
        %1218 = vmax.xlane.f32.xlu0 %v1217
        %v1219 = vpop.xlane.xlu0 %1218
        %v1220 = vmax.f32 %v614, %v1198
        %v1221 = vmax.f32 %v615, %v1201
        %v1222 = vmax.f32 %v616, %v1204
        %v1223 = vmax.f32 %v617, %v1207
        %v1224 = vmax.f32 %v618, %v1210
        %v1225 = vmax.f32 %v619, %v1213
        %v1226 = vmax.f32 %v620, %v1216
        %v1227 = vmax.f32 %v621, %v1219
        %v1228 = vsub.f32 %v614, %v1220
        %v1229 = vsub.f32 %v615, %v1221
        %v1230 = vsub.f32 %v616, %v1222
        %v1231 = vsub.f32 %v617, %v1223
        %v1232 = vsub.f32 %v618, %v1224
        %v1233 = vsub.f32 %v619, %v1225
        %v1234 = vsub.f32 %v620, %v1226
        %v1235 = vsub.f32 %v621, %v1227
        %v1236 = vmul.f32 %v1228, 1.442695
        %v1237 = vpow.pop %v1236
        %v1238 = vmul.f32 %v1229, 1.442695
        %v1239 = vpow.pop %v1238
        %v1240 = vmul.f32 %v1230, 1.442695
        %v1241 = vpow.pop %v1240
        %v1242 = vmul.f32 %v1231, 1.442695
        %v1243 = vpow.pop %v1242
        %v1244 = vmul.f32 %v1232, 1.442695
        %v1245 = vpow.pop %v1244
        %v1246 = vmul.f32 %v1233, 1.442695
        %v1247 = vpow.pop %v1246
        %v1248 = vmul.f32 %v1234, 1.442695
        %v1249 = vpow.pop %v1248
        %v1250 = vmul.f32 %v1235, 1.442695
        %v1251 = vpow.pop %v1250
        %v1252 = vsub.f32 %v1187, %v1220
        %v1253 = vsub.f32 %v1188, %v1221
        %v1254 = vsub.f32 %v1189, %v1222
        %v1255 = vsub.f32 %v1190, %v1223
        %v1256 = vsub.f32 %v1191, %v1224
        %v1257 = vsub.f32 %v1192, %v1225
        %v1258 = vsub.f32 %v1193, %v1226
        %v1259 = vsub.f32 %v1194, %v1227
        %v1260 = vmul.f32 %v1252, 1.442695
        %v1261 = vpow.pop %v1260
        %v1262 = vmul.f32 %v1253, 1.442695
        %v1263 = vpow.pop %v1262
        %v1264 = vmul.f32 %v1254, 1.442695
        %v1265 = vpow.pop %v1264
        %v1266 = vmul.f32 %v1255, 1.442695
        %v1267 = vpow.pop %v1266
        %v1268 = vmul.f32 %v1256, 1.442695
        %v1269 = vpow.pop %v1268
        %v1270 = vmul.f32 %v1257, 1.442695
        %v1271 = vpow.pop %v1270
        %v1272 = vmul.f32 %v1258, 1.442695
        %v1273 = vpow.pop %v1272
        %v1274 = vmul.f32 %v1259, 1.442695
        %v1275 = vpow.pop %v1274
        %v1276 = vmul.f32 %v1237, %v622
        %v1277 = vmul.f32 %v1239, %v623
        %v1278 = vmul.f32 %v1241, %v624
        %v1279 = vmul.f32 %v1243, %v625
        %v1280 = vmul.f32 %v1245, %v626
        %v1281 = vmul.f32 %v1247, %v627
        %v1282 = vmul.f32 %v1249, %v628
        %v1283 = vmul.f32 %v1251, %v629
        %v1284 = vsel %vm1195, %v1261, 0.0
        %1285 = vadd.xlane.f32.xlu0 %v1284
        %v1286 = vpop.xlane.xlu0 %1285
        %v1287 = vsel %vm1195, %v1263, 0.0
        %1288 = vadd.xlane.f32.xlu0 %v1287
        %v1289 = vpop.xlane.xlu0 %1288
        %v1290 = vsel %vm1195, %v1265, 0.0
        %1291 = vadd.xlane.f32.xlu0 %v1290
        %v1292 = vpop.xlane.xlu0 %1291
        %v1293 = vsel %vm1195, %v1267, 0.0
        %1294 = vadd.xlane.f32.xlu0 %v1293
        %v1295 = vpop.xlane.xlu0 %1294
        %v1296 = vsel %vm1195, %v1269, 0.0
        %1297 = vadd.xlane.f32.xlu0 %v1296
        %v1298 = vpop.xlane.xlu0 %1297
        %v1299 = vsel %vm1195, %v1271, 0.0
        %1300 = vadd.xlane.f32.xlu0 %v1299
        %v1301 = vpop.xlane.xlu0 %1300
        %v1302 = vsel %vm1195, %v1273, 0.0
        %1303 = vadd.xlane.f32.xlu0 %v1302
        %v1304 = vpop.xlane.xlu0 %1303
        %v1305 = vsel %vm1195, %v1275, 0.0
        %1306 = vadd.xlane.f32.xlu0 %v1305
        %v1307 = vpop.xlane.xlu0 %1306
        %v1308 = vadd.f32 %v1276, %v1286
        %v1309 = vadd.f32 %v1277, %v1289
        %v1310 = vadd.f32 %v1278, %v1292
        %v1311 = vadd.f32 %v1279, %v1295
        %v1312 = vadd.f32 %v1280, %v1298
        %v1313 = vadd.f32 %v1281, %v1301
        %v1314 = vadd.f32 %v1282, %v1304
        %v1315 = vadd.f32 %v1283, %v1307
        %v1316 = vmul.f32 %v1237, %v630
        %v1317 = vmul.f32 %v1239, %v631
        %v1318 = vmul.f32 %v1241, %v632
        %v1319 = vmul.f32 %v1243, %v633
        %v1320 = vmul.f32 %v1245, %v634
        %v1321 = vmul.f32 %v1247, %v635
        %v1322 = vmul.f32 %v1249, %v636
        %v1323 = vmul.f32 %v1251, %v637
        %v1324 = vpack.c.bf16 %v1261, %v1261
        %v1325 = vpack.c.bf16 %v1263, %v1263
        %v1326 = vpack.c.bf16 %v1265, %v1265
        %v1327 = vpack.c.bf16 %v1267, %v1267
        %v1328 = vpack.c.bf16 %v1269, %v1269
        %v1329 = vpack.c.bf16 %v1271, %v1271
        %v1330 = vpack.c.bf16 %v1273, %v1273
        %v1331 = vpack.c.bf16 %v1275, %v1275
        %v1334 = vunpack.c.l.b16 %v1324
        %v1335 = vunpack.c.l.b16 %v1325
        %v1336 = vpack.c.b16 %v1335, %v1334
        %v1339 = vunpack.c.l.b16 %v1054
        %v1340 = vunpack.c.l.b16 %v1055
        %v1341 = vpack.c.b16 %v1340, %v1339
        %v1344 = vsel %vm1195, %v1336, 0
        %1346 = vmatpush.bf16.msra.mxu0 0
        %1347 = vmatpush.bf16.msra.mxu0 0
        %1348 = vmatpush.bf16.msra.mxu0 0
        %1349 = vmatpush.bf16.msra.mxu0 0
        %1350 = vmatpush.bf16.msra.mxu0 0
        %1351 = vmatpush.bf16.msra.mxu0 0
        %1352 = vmatpush.bf16.msra.mxu0 0
        %1353 = vmatpush.bf16.msra.mxu0 %v1341
        %1354 = vmatmul.bf16.gmra.mxu0 %v1344
        %v1355 = vpop.f32.mrf.mxu0
        %v1356 = vadd.f32 0.0, %v1355
        %v1357 = vpop.f32.mrf.mxu0
        %v1358 = vadd.f32 0.0, %v1357
        %1359 = vdwg.mxu0
        %v1362 = vunpack.c.l.b16 %v1326
        %v1363 = vunpack.c.l.b16 %v1327
        %v1364 = vpack.c.b16 %v1363, %v1362
        %v1367 = vunpack.c.l.b16 %v1056
        %v1368 = vunpack.c.l.b16 %v1057
        %v1369 = vpack.c.b16 %v1368, %v1367
        %v1372 = vsel %vm1195, %v1364, 0
        %1374 = vmatpush.bf16.msra.mxu0 0
        %1375 = vmatpush.bf16.msra.mxu0 0
        %1376 = vmatpush.bf16.msra.mxu0 0
        %1377 = vmatpush.bf16.msra.mxu0 0
        %1378 = vmatpush.bf16.msra.mxu0 0
        %1379 = vmatpush.bf16.msra.mxu0 0
        %1380 = vmatpush.bf16.msra.mxu0 0
        %1381 = vmatpush.bf16.msra.mxu0 %v1369
        %1382 = vmatmul.bf16.gmra.mxu0 %v1372
        %v1383 = vpop.f32.mrf.mxu0
        %v1384 = vadd.f32 0.0, %v1383
        %v1385 = vpop.f32.mrf.mxu0
        %v1386 = vadd.f32 0.0, %v1385
        %1387 = vdwg.mxu0
        %v1390 = vunpack.c.l.b16 %v1328
        %v1391 = vunpack.c.l.b16 %v1329
        %v1392 = vpack.c.b16 %v1391, %v1390
        %v1395 = vunpack.c.l.b16 %v1058
        %v1396 = vunpack.c.l.b16 %v1059
        %v1397 = vpack.c.b16 %v1396, %v1395
        %v1400 = vsel %vm1195, %v1392, 0
        %1402 = vmatpush.bf16.msra.mxu0 0
        %1403 = vmatpush.bf16.msra.mxu0 0
        %1404 = vmatpush.bf16.msra.mxu0 0
        %1405 = vmatpush.bf16.msra.mxu0 0
        %1406 = vmatpush.bf16.msra.mxu0 0
        %1407 = vmatpush.bf16.msra.mxu0 0
        %1408 = vmatpush.bf16.msra.mxu0 0
        %1409 = vmatpush.bf16.msra.mxu0 %v1397
        %1410 = vmatmul.bf16.gmra.mxu0 %v1400
        %v1411 = vpop.f32.mrf.mxu0
        %v1412 = vadd.f32 0.0, %v1411
        %v1413 = vpop.f32.mrf.mxu0
        %v1414 = vadd.f32 0.0, %v1413
        %1415 = vdwg.mxu0
        %v1418 = vunpack.c.l.b16 %v1330
        %v1419 = vunpack.c.l.b16 %v1331
        %v1420 = vpack.c.b16 %v1419, %v1418
        %v1423 = vunpack.c.l.b16 %v1060
        %v1424 = vunpack.c.l.b16 %v1061
        %v1425 = vpack.c.b16 %v1424, %v1423
        %v1428 = vsel %vm1195, %v1420, 0
        %1430 = vmatpush.bf16.msra.mxu0 0
        %1431 = vmatpush.bf16.msra.mxu0 0
        %1432 = vmatpush.bf16.msra.mxu0 0
        %1433 = vmatpush.bf16.msra.mxu0 0
        %1434 = vmatpush.bf16.msra.mxu0 0
        %1435 = vmatpush.bf16.msra.mxu0 0
        %1436 = vmatpush.bf16.msra.mxu0 0
        %1437 = vmatpush.bf16.msra.mxu0 %v1425
        %1438 = vmatmul.bf16.gmra.mxu0 %v1428
        %v1439 = vpop.f32.mrf.mxu0
        %v1440 = vadd.f32 0.0, %v1439
        %v1441 = vpop.f32.mrf.mxu0
        %v1442 = vadd.f32 0.0, %v1441
        %1443 = vdwg.mxu0
        %v1444 = vadd.f32 %v1316, %v1356
        %v1445 = vadd.f32 %v1317, %v1358
        %v1446 = vadd.f32 %v1318, %v1384
        %v1447 = vadd.f32 %v1319, %v1386
        %v1448 = vadd.f32 %v1320, %v1412
        %v1449 = vadd.f32 %v1321, %v1414
        %v1450 = vadd.f32 %v1322, %v1440
        %v1451 = vadd.f32 %v1323, %v1442
        %v1452 = vrcp.pop %v1308
        %v1453 = vrcp.pop %v1309
        %v1454 = vrcp.pop %v1310
        %v1455 = vrcp.pop %v1311
        %v1456 = vrcp.pop %v1312
        %v1457 = vrcp.pop %v1313
        %v1458 = vrcp.pop %v1314
        %v1459 = vrcp.pop %v1315
        %v1460 = vmul.f32 %v1444, %v1452
        %v1461 = vmul.f32 %v1445, %v1453
        %v1462 = vmul.f32 %v1446, %v1454
        %v1463 = vmul.f32 %v1447, %v1455
        %v1464 = vmul.f32 %v1448, %v1456
        %v1465 = vmul.f32 %v1449, %v1457
        %v1466 = vmul.f32 %v1450, %v1458
        %v1467 = vmul.f32 %v1451, %v1459
        %v1468 = vrot.slane %v1464, 4
        %vm1469 = vcmask 1047556
        %v1470 = vsel %vm1469, %v1468, %v1460
        %v1471 = vrot.slane %v1460, 4
        %v1472 = vsel %vm1469, %v1464, %v1471
        %v1474 = vunpack.c.l.s4 1983009808
        %v1475 = vunpack.c.0.s8 %v1474
        %v1476 = vperm.slane %v1470, %v1475
        %v1478 = vunpack.c.l.s4 1983009808
        %v1479 = vunpack.c.0.s8 %v1478
        %v1480 = vperm.slane %v1472, %v1479
        %v1481 = vrot.slane %v1466, 4
        %v1482 = vsel %vm1469, %v1481, %v1462
        %v1483 = vrot.slane %v1462, 4
        %v1484 = vsel %vm1469, %v1466, %v1483
        %v1486 = vunpack.c.l.s4 1983009808
        %v1487 = vunpack.c.0.s8 %v1486
        %v1488 = vperm.slane %v1482, %v1487
        %v1490 = vunpack.c.l.s4 1983009808
        %v1491 = vunpack.c.0.s8 %v1490
        %v1492 = vperm.slane %v1484, %v1491
        %v1493 = vrot.slane %v1488, 4
        %v1494 = vsel %vm1469, %v1493, %v1476
        %v1495 = vrot.slane %v1476, 4
        %v1496 = vsel %vm1469, %v1488, %v1495
        %v1498 = vunpack.c.l.s4 1934713408
        %v1499 = vunpack.c.0.s8 %v1498
        %v1500 = vperm.slane %v1494, %v1499
        %v1502 = vunpack.c.l.s4 1934713408
        %v1503 = vunpack.c.0.s8 %v1502
        %v1504 = vperm.slane %v1496, %v1503
        %v1505 = vrot.slane %v1492, 4
        %v1506 = vsel %vm1469, %v1505, %v1480
        %v1507 = vrot.slane %v1480, 4
        %v1508 = vsel %vm1469, %v1492, %v1507
        %v1510 = vunpack.c.l.s4 1934713408
        %v1511 = vunpack.c.0.s8 %v1510
        %v1512 = vperm.slane %v1506, %v1511
        %v1514 = vunpack.c.l.s4 1934713408
        %v1515 = vunpack.c.0.s8 %v1514
        %v1516 = vperm.slane %v1508, %v1515
        %v1517 = vrot.slane %v1500, 4
        %v1518 = vsel %vm1469, 0.0, %v1517
        %v1519 = vrot.slane %v1504, 4
        %v1520 = vsel %vm1469, 0.0, %v1519
        %v1521 = vrot.slane %v1512, 4
        %v1522 = vsel %vm1469, 0.0, %v1521
        %v1523 = vrot.slane %v1516, 4
        %v1524 = vsel %vm1469, 0.0, %v1523
        %v1525 = vrot.slane %v1465, 4
        %v1526 = vsel %vm1469, %v1525, %v1461
        %v1527 = vrot.slane %v1461, 4
        %v1528 = vsel %vm1469, %v1465, %v1527
        %v1530 = vunpack.c.l.s4 1983009808
        %v1531 = vunpack.c.0.s8 %v1530
        %v1532 = vperm.slane %v1526, %v1531
        %v1534 = vunpack.c.l.s4 1983009808
        %v1535 = vunpack.c.0.s8 %v1534
        %v1536 = vperm.slane %v1528, %v1535
        %v1537 = vrot.slane %v1467, 4
        %v1538 = vsel %vm1469, %v1537, %v1463
        %v1539 = vrot.slane %v1463, 4
        %v1540 = vsel %vm1469, %v1467, %v1539
        %v1542 = vunpack.c.l.s4 1983009808
        %v1543 = vunpack.c.0.s8 %v1542
        %v1544 = vperm.slane %v1538, %v1543
        %v1546 = vunpack.c.l.s4 1983009808
        %v1547 = vunpack.c.0.s8 %v1546
        %v1548 = vperm.slane %v1540, %v1547
        %v1549 = vrot.slane %v1544, 4
        %v1550 = vsel %vm1469, %v1549, %v1532
        %v1551 = vrot.slane %v1532, 4
        %v1552 = vsel %vm1469, %v1544, %v1551
        %v1554 = vunpack.c.l.s4 1934713408
        %v1555 = vunpack.c.0.s8 %v1554
        %v1556 = vperm.slane %v1550, %v1555
        %v1558 = vunpack.c.l.s4 1934713408
        %v1559 = vunpack.c.0.s8 %v1558
        %v1560 = vperm.slane %v1552, %v1559
        %v1561 = vrot.slane %v1548, 4
        %v1562 = vsel %vm1469, %v1561, %v1536
        %v1563 = vrot.slane %v1536, 4
        %v1564 = vsel %vm1469, %v1548, %v1563
        %v1566 = vunpack.c.l.s4 1934713408
        %v1567 = vunpack.c.0.s8 %v1566
        %v1568 = vperm.slane %v1562, %v1567
        %v1570 = vunpack.c.l.s4 1934713408
        %v1571 = vunpack.c.0.s8 %v1570
        %v1572 = vperm.slane %v1564, %v1571
        %v1573 = vrot.slane %v1556, 4
        %v1574 = vsel %vm1469, 0.0, %v1573
        %v1575 = vrot.slane %v1560, 4
        %v1576 = vsel %vm1469, 0.0, %v1575
        %v1577 = vrot.slane %v1568, 4
        %v1578 = vsel %vm1469, 0.0, %v1577
        %v1579 = vrot.slane %v1572, 4
        %v1580 = vsel %vm1469, 0.0, %v1579
        %v1581 = vsel %vm1469, %v1519, %v1500
        %v1583 = vunpack.c.l.s4 1983009808
        %v1584 = vunpack.c.0.s8 %v1583
        %v1585 = vperm.slane %v1581, %v1584
        %v1586 = vrot.slane %v1520, 4
        %v1587 = vsel %vm1469, %v1586, %v1518
        %v1589 = vunpack.c.l.s4 1983009808
        %v1590 = vunpack.c.0.s8 %v1589
        %v1591 = vperm.slane %v1587, %v1590
        %v1592 = vsel %vm1469, %v1523, %v1512
        %v1594 = vunpack.c.l.s4 1983009808
        %v1595 = vunpack.c.0.s8 %v1594
        %v1596 = vperm.slane %v1592, %v1595
        %v1597 = vrot.slane %v1524, 4
        %v1598 = vsel %vm1469, %v1597, %v1522
        %v1600 = vunpack.c.l.s4 1983009808
        %v1601 = vunpack.c.0.s8 %v1600
        %v1602 = vperm.slane %v1598, %v1601
        %v1603 = vrot.slane %v1591, 4
        %v1604 = vsel %vm1469, %v1603, %v1585
        %v1605 = vrot.slane %v1585, 4
        %v1606 = vsel %vm1469, %v1591, %v1605
        %v1608 = vunpack.c.l.s4 1934713408
        %v1609 = vunpack.c.0.s8 %v1608
        %v1610 = vperm.slane %v1604, %v1609
        %v1612 = vunpack.c.l.s4 1934713408
        %v1613 = vunpack.c.0.s8 %v1612
        %v1614 = vperm.slane %v1606, %v1613
        %v1615 = vrot.slane %v1602, 4
        %v1616 = vsel %vm1469, %v1615, %v1596
        %v1617 = vrot.slane %v1596, 4
        %v1618 = vsel %vm1469, %v1602, %v1617
        %v1620 = vunpack.c.l.s4 1934713408
        %v1621 = vunpack.c.0.s8 %v1620
        %v1622 = vperm.slane %v1616, %v1621
        %v1624 = vunpack.c.l.s4 1934713408
        %v1625 = vunpack.c.0.s8 %v1624
        %v1626 = vperm.slane %v1618, %v1625
        %v1627 = vrot.slane %v1622, 4
        %v1628 = vsel %vm1469, %v1627, %v1610
        %v1629 = vrot.slane %v1610, 4
        %v1630 = vsel %vm1469, %v1622, %v1629
        %v1631 = vrot.slane %v1626, 4
        %v1632 = vsel %vm1469, %v1631, %v1614
        %v1633 = vrot.slane %v1614, 4
        %v1634 = vsel %vm1469, %v1626, %v1633
        %v1635 = vsel %vm1469, %v1575, %v1556
        %v1637 = vunpack.c.l.s4 1983009808
        %v1638 = vunpack.c.0.s8 %v1637
        %v1639 = vperm.slane %v1635, %v1638
        %v1640 = vrot.slane %v1576, 4
        %v1641 = vsel %vm1469, %v1640, %v1574
        %v1643 = vunpack.c.l.s4 1983009808
        %v1644 = vunpack.c.0.s8 %v1643
        %v1645 = vperm.slane %v1641, %v1644
        %v1646 = vsel %vm1469, %v1579, %v1568
        %v1648 = vunpack.c.l.s4 1983009808
        %v1649 = vunpack.c.0.s8 %v1648
        %v1650 = vperm.slane %v1646, %v1649
        %v1651 = vrot.slane %v1580, 4
        %v1652 = vsel %vm1469, %v1651, %v1578
        %v1654 = vunpack.c.l.s4 1983009808
        %v1655 = vunpack.c.0.s8 %v1654
        %v1656 = vperm.slane %v1652, %v1655
        %v1657 = vrot.slane %v1645, 4
        %v1658 = vsel %vm1469, %v1657, %v1639
        %v1659 = vrot.slane %v1639, 4
        %v1660 = vsel %vm1469, %v1645, %v1659
        %v1662 = vunpack.c.l.s4 1934713408
        %v1663 = vunpack.c.0.s8 %v1662
        %v1664 = vperm.slane %v1658, %v1663
        %v1666 = vunpack.c.l.s4 1934713408
        %v1667 = vunpack.c.0.s8 %v1666
        %v1668 = vperm.slane %v1660, %v1667
        %v1669 = vrot.slane %v1656, 4
        %v1670 = vsel %vm1469, %v1669, %v1650
        %v1671 = vrot.slane %v1650, 4
        %v1672 = vsel %vm1469, %v1656, %v1671
        %v1674 = vunpack.c.l.s4 1934713408
        %v1675 = vunpack.c.0.s8 %v1674
        %v1676 = vperm.slane %v1670, %v1675
        %v1678 = vunpack.c.l.s4 1934713408
        %v1679 = vunpack.c.0.s8 %v1678
        %v1680 = vperm.slane %v1672, %v1679
        %v1681 = vrot.slane %v1676, 4
        %v1682 = vsel %vm1469, %v1681, %v1664
        %v1683 = vrot.slane %v1664, 4
        %v1684 = vsel %vm1469, %v1676, %v1683
        %v1685 = vrot.slane %v1680, 4
        %v1686 = vsel %vm1469, %v1685, %v1668
        %v1687 = vrot.slane %v1668, 4
        %v1688 = vsel %vm1469, %v1680, %v1687
        %1691 = vrot.lane.b32.xlu0 %v1630, 8
        %v1692 = vpop.permute.xlu0 %1691
        %1693 = vrot.lane.b32.xlu0 %v1684, 8
        %v1694 = vpop.permute.xlu0 %1693
        %1699 = vrot.lane.b32.xlu0 %v1632, 16
        %v1700 = vpop.permute.xlu0 %1699
        %1701 = vrot.lane.b32.xlu0 %v1686, 16
        %v1702 = vpop.permute.xlu0 %1701
        %1707 = vrot.lane.b32.xlu0 %v1634, 24
        %v1708 = vpop.permute.xlu0 %1707
        %1709 = vrot.lane.b32.xlu0 %v1688, 24
        %v1710 = vpop.permute.xlu0 %1709
        %v1713 = vsel %vm1072, %v1628, %v1692
        %v1714 = vsel %vm1072, %v1682, %v1694
        %v1715 = vsel %vm1195, %v1713, %v1700
        %v1716 = vsel %vm1195, %v1714, %v1702
        %vm1717 = vcmask 195584
        %v1718 = vsel %vm1717, %v1715, %v1708
        %v1719 = vsel %vm1717, %v1716, %v1710
        %v1720 = vpack.c.bf16 %v1719, %v1718
        %v1721 = vld [vmem:[%s4] sm:$0xf]
        %v1722 = vld [vmem:[%s4 + $0x4] sm:$0xf]
        %v1723 = vld [vmem:[%s4 + $0x8] sm:$0xf]
        %v1724 = vld [vmem:[%s4 + $0xc] sm:$0xf]
        %v1725 = vld [vmem:[%s5] sm:$0x1]
        %v1727 = vperm.slane %v1725, 0
        %v1733 = vunpack.c.l.b16 %v1721
        %v1734 = vunpack.c.l.b16 %v1722
        %v1735 = vunpack.c.l.b16 %v1723
        %v1736 = vunpack.c.l.b16 %v1724
        %v1737 = vpack.c.b16 %v1734, %v1733
        %v1738 = vpack.c.b16 %v1736, %v1735
        %vm1741 = vcmask 261120
        %v1743 = vsel %vm1741, %v1720, 0
        %1745 = vmatpush.bf16.msra.mxu0 0
        %1746 = vmatpush.bf16.msra.mxu0 0
        %1747 = vmatpush.bf16.msra.mxu0 0
        %1748 = vmatpush.bf16.msra.mxu0 0
        %1749 = vmatpush.bf16.msra.mxu0 0
        %1750 = vmatpush.bf16.msra.mxu0 0
        %1751 = vmatpush.bf16.msra.mxu0 %v1738
        %1752 = vmatpush.bf16.msra.mxu0 %v1737
        %1753 = vmatmul.bf16.gmra.mxu0 %v1743
        %v1754 = vpop.f32.mrf.mxu0
        %v1755 = vadd.f32 %v1727, %v1754
        %v1756 = vpop.f32.mrf.mxu0
        %v1757 = vadd.f32 %v1727, %v1756
        %1758 = vdwg.mxu0
        %v1759 = vadd.f32 %v591, %v1755
        %v1760 = vadd.f32 %v592, %v1757
        %v1761 = vld [vmem:[%s6] sm:$0x1]
        %v1762 = vld [vmem:[%s7] sm:$0x1]
        %v1763 = vsel %vm1741, %v1759, 0.0
        %1764 = vadd.xlane.f32.xlu0 %v1763
        %v1765 = vpop.xlane.xlu0 %1764
        %v1766 = vsel %vm1741, %v1760, 0.0
        %1767 = vadd.xlane.f32.xlu0 %v1766
        %v1768 = vpop.xlane.xlu0 %1767
        %v1769 = vrcp.pop 32.0
        %v1770 = vmul.f32 32.0, %v1769
        %v1771 = vsub.f32 1.0, %v1770
        %v1772 = vmul.f32 %v1769, %v1771
        %v1773 = vadd.f32 %v1769, %v1772
        %vm1774 = vweird.f32 %v1769
        %v1775 = vsel %vm1774, %v1769, %v1773
        %v1776 = vmul.f32 %v1765, %v1775
        %v1777 = vmul.f32 %v1768, %v1775
        %v1778 = vsub.f32 %v1759, %v1776
        %v1779 = vsub.f32 %v1760, %v1777
        %v1780 = vmul.f32 %v1778, %v1778
        %v1781 = vmul.f32 %v1779, %v1779
        %v1782 = vsel %vm1741, %v1780, 0.0
        %1783 = vadd.xlane.f32.xlu0 %v1782
        %v1784 = vpop.xlane.xlu0 %1783
        %v1785 = vsel %vm1741, %v1781, 0.0
        %1786 = vadd.xlane.f32.xlu0 %v1785
        %v1787 = vpop.xlane.xlu0 %1786
        %v1788 = vmul.f32 %v1784, %v1775
        %v1789 = vmul.f32 %v1787, %v1775
        %v1790 = vadd.f32 %v1788, 1e-05
        %v1791 = vadd.f32 %v1789, 1e-05
        %v1792 = vrsqrt.pop %v1790
        %v1793 = vmul.f32 %v1792, %v1790
        %v1794 = vmul.f32 %v1793, %v1792
        %v1795 = vmul.f32 0.5, %v1794
        %v1796 = vsub.f32 1.5, %v1795
        %v1797 = vmul.f32 %v1792, %v1796
        %vm1798 = vweird.f32 %v1790
        %vm1799 = vweird.f32 %v1792
        %vm1800 = vmor %vm1798, %vm1799
        %v1801 = vsel %vm1800, %v1792, %v1797
        %v1802 = vrsqrt.pop %v1791
        %v1803 = vmul.f32 %v1802, %v1791
        %v1804 = vmul.f32 %v1803, %v1802
        %v1805 = vmul.f32 0.5, %v1804
        %v1806 = vsub.f32 1.5, %v1805
        %v1807 = vmul.f32 %v1802, %v1806
        %vm1808 = vweird.f32 %v1791
        %vm1809 = vweird.f32 %v1802
        %vm1810 = vmor %vm1808, %vm1809
        %v1811 = vsel %vm1810, %v1802, %v1807
        %v1812 = vmul.f32 %v1778, %v1801
        %v1813 = vmul.f32 %v1779, %v1811
        %v1815 = vperm.slane %v1761, 0
        %v1817 = vmul.f32 %v1812, %v1815
        %v1818 = vmul.f32 %v1813, %v1815
        %v1820 = vperm.slane %v1762, 0
        %v1822 = vadd.f32 %v1817, %v1820
        %v1823 = vadd.f32 %v1818, %v1820
        %v1824 = vpack.c.bf16 %v1823, %v1822
        %v1825 = vld [vmem:[%s8] sm:$0xf]
        %v1826 = vld [vmem:[%s8 + $0x4] sm:$0xf]
        %v1827 = vld [vmem:[%s8 + $0x8] sm:$0xf]
        %v1828 = vld [vmem:[%s8 + $0xc] sm:$0xf]
        %v1829 = vld [vmem:[%s9] sm:$0x1]
        %v1831 = vperm.slane %v1829, 0
        %v1837 = vunpack.c.l.b16 %v1825
        %v1838 = vunpack.c.l.b16 %v1826
        %v1839 = vunpack.c.l.b16 %v1827
        %v1840 = vunpack.c.l.b16 %v1828
        %v1841 = vpack.c.b16 %v1838, %v1837
        %v1842 = vpack.c.b16 %v1840, %v1839
        %v1846 = vsel %vm1741, %v1824, 0
        %1848 = vmatpush.bf16.msra.mxu0 0
        %1849 = vmatpush.bf16.msra.mxu0 0
        %1850 = vmatpush.bf16.msra.mxu0 0
        %1851 = vmatpush.bf16.msra.mxu0 0
        %1852 = vmatpush.bf16.msra.mxu0 0
        %1853 = vmatpush.bf16.msra.mxu0 0
        %1854 = vmatpush.bf16.msra.mxu0 %v1842
        %1855 = vmatpush.bf16.msra.mxu0 %v1841
        %1856 = vmatmul.bf16.gmra.mxu0 %v1846
        %v1857 = vpop.f32.mrf.mxu0
        %v1858 = vadd.f32 %v1831, %v1857
        %v1859 = vpop.f32.mrf.mxu0
        %v1860 = vadd.f32 %v1831, %v1859
        %1861 = vdwg.mxu0
        %v1862 = vmul.f32 %v1858, 1.702
        %v1863 = vmul.f32 %v1860, 1.702
        %v1864 = vxor.u32 %v1862, 2147483648
        %v1865 = vxor.u32 %v1863, 2147483648
        %v1866 = vmul.f32 %v1864, 1.442695
        %v1867 = vpow.pop %v1866
        %v1868 = vmul.f32 %v1865, 1.442695
        %v1869 = vpow.pop %v1868
        %v1870 = vadd.f32 %v1867, 1.0
        %v1871 = vadd.f32 %v1869, 1.0
        %v1872 = vrcp.pop %v1870
        %v1873 = vmul.f32 %v1870, %v1872
        %v1874 = vsub.f32 1.0, %v1873
        %v1875 = vmul.f32 %v1872, %v1874
        %v1876 = vadd.f32 %v1872, %v1875
        %vm1877 = vweird.f32 %v1870
        %vm1878 = vweird.f32 %v1872
        %vm1879 = vmor %vm1877, %vm1878
        %v1880 = vsel %vm1879, %v1872, %v1876
        %v1881 = vand.u32 2147483647, %v1870
        %vm1882 = vcmp.eq.f32.partialorder %v1881, 8.507059e+37
        %v1883 = vand.u32 %v1870, 2147483648
        %v1884 = vor.u32 1.1754944e-38, %v1883
        %v1885 = vsel %vm1882, %v1884, %v1880
        %v1886 = vmul.f32 1.0, %v1885
        %v1887 = vrcp.pop %v1871
        %v1888 = vmul.f32 %v1871, %v1887
        %v1889 = vsub.f32 1.0, %v1888
        %v1890 = vmul.f32 %v1887, %v1889
        %v1891 = vadd.f32 %v1887, %v1890
        %vm1892 = vweird.f32 %v1871
        %vm1893 = vweird.f32 %v1887
        %vm1894 = vmor %vm1892, %vm1893
        %v1895 = vsel %vm1894, %v1887, %v1891
        %v1896 = vand.u32 2147483647, %v1871
        %vm1897 = vcmp.eq.f32.partialorder %v1896, 8.507059e+37
        %v1898 = vand.u32 %v1871, 2147483648
        %v1899 = vor.u32 1.1754944e-38, %v1898
        %v1900 = vsel %vm1897, %v1899, %v1895
        %v1901 = vmul.f32 1.0, %v1900
        %v1902 = vmul.f32 %v1858, %v1886
        %v1903 = vmul.f32 %v1860, %v1901
        %v1904 = vpack.c.bf16 %v1903, %v1902
        %v1905 = vld [vmem:[%s10] sm:$0xf]
        %v1906 = vld [vmem:[%s10 + $0x4] sm:$0xf]
        %v1907 = vld [vmem:[%s10 + $0x8] sm:$0xf]
        %v1908 = vld [vmem:[%s10 + $0xc] sm:$0xf]
        %v1909 = vld [vmem:[%s10 + $0x10] sm:$0xf]
        %v1910 = vld [vmem:[%s10 + $0x14] sm:$0xf]
        %v1911 = vld [vmem:[%s10 + $0x18] sm:$0xf]
        %v1912 = vld [vmem:[%s10 + $0x1c] sm:$0xf]
        %v1913 = vld [vmem:[%s11] sm:$0x1]
        %v1915 = vperm.slane %v1913, 0
        %v1925 = vunpack.c.l.b16 %v1905
        %v1926 = vunpack.c.l.b16 %v1906
        %v1927 = vunpack.c.l.b16 %v1907
        %v1928 = vunpack.c.l.b16 %v1908
        %v1929 = vunpack.c.l.b16 %v1909
        %v1930 = vunpack.c.l.b16 %v1910
        %v1931 = vunpack.c.l.b16 %v1911
        %v1932 = vunpack.c.l.b16 %v1912
        %v1933 = vpack.c.b16 %v1926, %v1925
        %v1934 = vpack.c.b16 %v1928, %v1927
        %v1935 = vpack.c.b16 %v1930, %v1929
        %v1936 = vpack.c.b16 %v1932, %v1931
        %vm1941 = vcmask 523264
        %v1943 = vsel %vm1941, %v1904, 0
        %1945 = vmatpush.bf16.msra.mxu0 0
        %1946 = vmatpush.bf16.msra.mxu0 0
        %1947 = vmatpush.bf16.msra.mxu0 0
        %1948 = vmatpush.bf16.msra.mxu0 0
        %1949 = vmatpush.bf16.msra.mxu0 %v1936
        %1950 = vmatpush.bf16.msra.mxu0 %v1935
        %1951 = vmatpush.bf16.msra.mxu0 %v1934
        %1952 = vmatpush.bf16.msra.mxu0 %v1933
        %1953 = vmatmul.bf16.gmra.mxu0 %v1943
        %v1954 = vpop.f32.mrf.mxu0
        %v1955 = vadd.f32 %v1915, %v1954
        %v1956 = vpop.f32.mrf.mxu0
        %v1957 = vadd.f32 %v1915, %v1956
        %1958 = vdwg.mxu0
        %v1959 = vadd.f32 %v1759, %v1955
        %v1960 = vadd.f32 %v1760, %v1957
        %1961 = vst.msk [vmem:[%s588] sm:$0xff] %vm1741, %v1959
        %1962 = vst.msk [vmem:[%s588 + $0x8] sm:$0xff] %vm1741, %v1960
        %s1963 = smul.u32 2, %s28
        %p1964 = scmp.lt.s32.totalorder %s27, 1
        %s1965 = scalar_select %p1964, %s27, 1
        %p1966 = scmp.lt.s32.totalorder %s1963, 7
        %s1967 = scalar_select %p1966, %s1963, 7
        %s1968 = smul.addr %s1965, 8
        %s1969 = sadd.s32 %s1967, %s1968
        %s1970 = smul.addr %s1969, 8
        %s1971 = scalar_lea.vmem %s12, %s1970
        // Predicated region
        $region117: #{tpu_custom_call.1} parent=104 // pred_check
          %p1972 = pneg %p331
        $region118: #{tpu_custom_call.1} parent=104 // pred_check_branch
          %1974 = sbr.rel (%p1972) target = $region120
        $region119: #{tpu_custom_call.1} parent=104 // pred_region
          %s1975 = smul.u32 2, %s28
        $region120: #{tpu_custom_call.1} parent=104 // pred_fallthru
          _
      $region105: #{tpu_custom_call.1} parent=5 // pred_fallthru
        _
      %p1976 = scmp.le.s32.totalorder 2, %s18
      // Predicated region
      $region121: #{tpu_custom_call.1} parent=5 // pred_check
        %p1977 = pneg %p1976
      $region122: #{tpu_custom_call.1} parent=5 // pred_check_branch
        %1979 = sbr.rel (%p1977) target = $region124
      $region123: #{tpu_custom_call.1} parent=5 // pred_region
        %s1980 = ssub.s32 %s18, 2
        // Predicated region
        $region125: #{tpu_custom_call.1} parent=123 // pred_check
          %p1981 = pneg %p337
        $region126: #{tpu_custom_call.1} parent=123 // pred_check_branch
          %1983 = sbr.rel (%p1981) target = $region128
        $region127: #{tpu_custom_call.1} parent=123 // pred_region
          %s1984 = smul.u32 2, %s30
          %p1985 = scmp.lt.s32.totalorder %s29, 1
          %s1986 = scalar_select %p1985, %s29, 1
          %p1987 = scmp.lt.s32.totalorder %s1984, 7
          %s1988 = scalar_select %p1987, %s1984, 7
          %s1989 = smul.addr %s1986, 8
          %s1990 = sadd.s32 %s1988, %s1989
          %s1991 = smul.addr %s1990, 8
          %s1992 = scalar_lea.vmem %s12, %s1991
        $region128: #{tpu_custom_call.1} parent=123 // pred_fallthru
          _
      $region124: #{tpu_custom_call.1} parent=5 // pred_fallthru
        _
    $region6: #{tpu_custom_call.1} parent=1 // loop_footer
      %s22 = sadd.s32 1, %s18
    $region7: #{tpu_custom_call.1} parent=1 // loop_footer_branch
      %17 = sbr.rel target = $region3
    $region8: #{tpu_custom_call.1} parent=1 // loop_exit
      _

</llo_original>
